<compile_context>
chip_gen: v7x
topology: tpu7x:2x2x1
jax: 0.10.0
libtpu: 0.0.40
codegen_flags: <defaults>
</compile_context>

<pallas_src>
import functools

import jax
import jax.numpy as jnp
from jax import lax
from jax.experimental import pallas as pl
from jax.experimental.pallas import tpu as pltpu


def _round_up(x, m):
    return ((x + m - 1) // m) * m


# ----------------------------------------------------------------------------
# Pallas kernel: full forward pass (LSTM stack hot loop + fused dueling heads)
# ----------------------------------------------------------------------------
def dueling_dqn_kernel(
    x_ref,     # (T*Bp, Ip)  bf16  time-major, batch/feature zero-padded
    w0x_ref,   # (Ip, Gp)    bf16  layer-0 input weights (gates packed tightly)
    w0h_ref,   # (H,  Gp)    bf16  layer-0 recurrent weights
    b0_ref,    # (1,  Gp)    f32   layer-0 fused bias (b_ih + b_hh)
    w1x_ref,   # (H,  Gp)    bf16  layer-1 input weights
    w1h_ref,   # (H,  Gp)    bf16  layer-1 recurrent weights
    b1_ref,    # (1,  Gp)    f32
    w2x_ref,   # (H,  Gp)    bf16  layer-2 input weights
    w2h_ref,   # (H,  Gp)    bf16  layer-2 recurrent weights
    b2_ref,    # (1,  Gp)    f32
    wh1_ref,   # (H,  HHp)   bf16  fused head layer 1 (value-hidden | adv-hidden)
    bh1_ref,   # (1,  HHp)   f32
    wh2_ref,   # (HHp, Op)   bf16  fused head layer 2, dueling combine folded in
    bh2_ref,   # (1,  Op)    f32
    q_ref,     # out (Bp, Op) f32  lane-dense padded Q values
    proj_ref,  # scratch (T*Bp, Gp) f32: layer-0 input projections for all timesteps
):
    Bp = q_ref.shape[0]
    T = x_ref.shape[0] // Bp
    H = w0h_ref.shape[0]
    Gp = w0h_ref.shape[1]

    # ---- layer-0 input projection for ALL timesteps: one big MXU matmul ------
    proj_ref[...] = (
        jnp.dot(x_ref[...], w0x_ref[...], preferred_element_type=jnp.float32)
        + b0_ref[...]
    )

    # loop-invariant loads / broadcasts hoisted out of the recurrence
    w0h = w0h_ref[...]
    w1x = w1x_ref[...]
    w1h = w1h_ref[...]
    w2x = w2x_ref[...]
    w2h = w2h_ref[...]
    b1b = jnp.broadcast_to(b1_ref[...], (Bp, Gp))
    b2b = jnp.broadcast_to(b2_ref[...], (Bp, Gp))

    def gate_math(g, c):
        # gates packed tightly [i|f|g|o] each of width H (PyTorch gate order):
        # one sigmoid + one tanh over the whole packed vreg, then static lane slices.
        sig = jax.nn.sigmoid(g)
        th = jnp.tanh(g)
        i = sig[:, 0 * H:1 * H]
        f = sig[:, 1 * H:2 * H]
        gg = th[:, 2 * H:3 * H]
        o = sig[:, 3 * H:4 * H]
        c_new = f * c + i * gg
        h_new = o * jnp.tanh(c_new)
        return h_new, c_new

    zeros = jnp.zeros((Bp, H), jnp.float32)
    bf16 = lambda a: a.astype(jnp.bfloat16)

    def body(t, carry):
        h1, c1, h2, c2, h3, c3 = carry
        row = pl.multiple_of(t * Bp, Bp)
        # layer 0: input part precomputed, only the recurrent dot on the critical path
        g0 = proj_ref[pl.ds(row, Bp), :] + jnp.dot(
            bf16(h1), w0h, preferred_element_type=jnp.float32)
        h1, c1 = gate_math(g0, c1)
        # layers 1/2: SPLIT dots — the h_prev @ W_hh term only depends on last step's
        # state, so it overlaps the layer below's gate math (dropout is id in eval).
        g1 = (jnp.dot(bf16(h1), w1x, preferred_element_type=jnp.float32)
              + jnp.dot(bf16(h2), w1h, preferred_element_type=jnp.float32) + b1b)
        h2, c2 = gate_math(g1, c2)
        g2 = (jnp.dot(bf16(h2), w2x, preferred_element_type=jnp.float32)
              + jnp.dot(bf16(h3), w2h, preferred_element_type=jnp.float32) + b2b)
        h3, c3 = gate_math(g2, c3)
        return (h1, c1, h2, c2, h3, c3)

    # TODO(synk): on v5e, holding w0h/w1h/w2h resident via pltpu.matmul_push_rhs across
    #             the unrolled steps would remove the repeated weight pushes from the chain.
    carry = lax.fori_loop(0, T, body,
                          (zeros, zeros, zeros, zeros, zeros, zeros),
                          unroll=min(T, 8))
    h3 = carry[4]                              # lstm_out[:, -1, :]

    # ---- fused dueling heads (q = V + A - mean(A) folded into wh2/bh2) -------
    hh = jnp.maximum(
        jnp.dot(bf16(h3), wh1_ref[...], preferred_element_type=jnp.float32)
        + bh1_ref[...], 0.0)
    q = jnp.dot(bf16(hh), wh2_ref[...], preferred_element_type=jnp.float32) + bh2_ref[...]
    q_ref[...] = q                             # lane-dense (Bp, Op) store


# ----------------------------------------------------------------------------
# One-time parameter packing: tight gate layout, lane padding, bf16 cast, head fusion
# ----------------------------------------------------------------------------
def pack_params(params):
    I = params["wih0"].shape[0]
    H = params["whh0"].shape[0]
    H2 = H // 2
    O = params["wa2"].shape[1]

    Ip = _round_up(I, 128)
    Gp = _round_up(4 * H, 128)       # gates packed tightly; pad only at the end
    HHp = _round_up(2 * H2, 128)
    Op = _round_up(O, 128)

    def pad2(w, rows, cols):
        out = jnp.zeros((rows, cols), jnp.float32)
        return out.at[:w.shape[0], :w.shape[1]].set(w)

    bf16 = lambda a: a.astype(jnp.bfloat16)

    packed = dict(
        w0x=bf16(pad2(params["wih0"], Ip, Gp)),
        w0h=bf16(pad2(params["whh0"], H, Gp)),
        b0=pad2(params["b0"], 1, Gp),
        w1x=bf16(pad2(params["wih1"], H, Gp)),
        w1h=bf16(pad2(params["whh1"], H, Gp)),
        b1=pad2(params["b1"], 1, Gp),
        w2x=bf16(pad2(params["wih2"], H, Gp)),
        w2h=bf16(pad2(params["whh2"], H, Gp)),
        b2=pad2(params["b2"], 1, Gp),
    )

    # fused head layer 1: value-hidden in cols [0:H2], advantage-hidden in [H2:2*H2]
    wh1 = jnp.zeros((H, HHp), jnp.float32)
    wh1 = wh1.at[:, :H2].set(params["wv1"])
    wh1 = wh1.at[:, H2:2 * H2].set(params["wa1"])
    bh1 = jnp.zeros((1, HHp), jnp.float32)
    bh1 = bh1.at[:, :H2].set(params["bv1"])
    bh1 = bh1.at[:, H2:2 * H2].set(params["ba1"])

    # fused head layer 2: fold q_j = value + adv_j - mean_k(adv_k) into the weights
    # (exact linear identity).
    wa2c = params["wa2"] - jnp.mean(params["wa2"], axis=1, keepdims=True)
    ba2c = params["ba2"] - jnp.mean(params["ba2"], axis=1, keepdims=True)
    wh2 = jnp.zeros((HHp, Op), jnp.float32)
    wh2 = wh2.at[:H2, :O].set(jnp.broadcast_to(params["wv2"], (H2, O)))
    wh2 = wh2.at[H2:2 * H2, :O].set(wa2c)
    bh2 = jnp.zeros((1, Op), jnp.float32)
    bh2 = bh2.at[:, :O].set(params["bv2"] + ba2c)

    packed.update(wh1=bf16(wh1), bh1=bh1, wh2=bf16(wh2), bh2=bh2)
    return packed


# ----------------------------------------------------------------------------
# Wrapper (layout plumbing + pallas_call)
# ----------------------------------------------------------------------------
def dueling_dqn_forward(x, packed, output_size):
    """x: (B, T, I) batch_first f32 (PyTorch layout). Returns q_values (B, O) f32."""
    B, T, I = x.shape
    H, Gp = packed["w0h"].shape
    Ip = packed["w0x"].shape[0]
    Op = packed["wh2"].shape[1]
    Bp = _round_up(B, 8)

    # time-major, zero-pad batch & feature dims, flatten (T, Bp) rows, bf16 for the MXU
    x_pad = jnp.zeros((T, Bp, Ip), jnp.bfloat16)
    x_pad = x_pad.at[:, :B, :I].set(jnp.transpose(x, (1, 0, 2)).astype(jnp.bfloat16))
    x_pad = x_pad.reshape(T * Bp, Ip)

    inputs = [x_pad,
              packed["w0x"], packed["w0h"], packed["b0"],
              packed["w1x"], packed["w1h"], packed["b1"],
              packed["w2x"], packed["w2h"], packed["b2"],
              packed["wh1"], packed["bh1"], packed["wh2"], packed["bh2"]]

    # VMEM budget from the actual buffer footprint (not a blanket 32 MiB).
    buf_bytes = sum(int(a.size) * a.dtype.itemsize for a in inputs)
    buf_bytes += Bp * Op * 4                  # output
    buf_bytes += T * Bp * Gp * 4              # proj scratch
    vmem_limit = int(min(max(4 * buf_bytes, 4 * 1024 * 1024), 64 * 1024 * 1024))

    # TODO(synk): for large T*B, chunk the layer-0 projection (double-buffered over a
    #             timestep window) or store it bf16 so the proj scratch stays within
    #             v7x's 64 MiB VMEM; batch many sequences (Bp ~128-256 rows) to fill the
    #             MXU, and only then split the batch across the two v7x TensorCores.
    q_pad = pl.pallas_call(
        dueling_dqn_kernel,
        out_shape=jax.ShapeDtypeStruct((Bp, Op), jnp.float32),
        in_specs=[pl.BlockSpec(memory_space=pltpu.MemorySpace.VMEM)] * len(inputs),
        out_specs=pl.BlockSpec(memory_space=pltpu.MemorySpace.VMEM),
        scratch_shapes=[pltpu.VMEM((T * Bp, Gp), jnp.float32)],
        compiler_params=pltpu.CompilerParams(vmem_limit_bytes=vmem_limit),
    )(*inputs)
    return q_pad[:B, :output_size]


def make_dueling_dqn_forward(params):
    """Packs weights ONCE and returns a jitted forward(x); packing is not redone per call."""
    packed = pack_params(params)
    O = params["wa2"].shape[1]
    return jax.jit(functools.partial(dueling_dqn_forward, packed=packed, output_size=O))


# ----------------------------------------------------------------------------
# Deterministic parameter init (PyTorch default: U(-1/sqrt(H), 1/sqrt(H)))
# ----------------------------------------------------------------------------
def init_params(key, input_size, hidden_size, output_size):
    H, I, O = hidden_size, input_size, output_size
    H2 = H // 2
    bound = 1.0 / jnp.sqrt(jnp.float32(H))
    bound2 = 1.0 / jnp.sqrt(jnp.float32(H2))

    def u(key, shape, b):
        return jax.random.uniform(key, shape, jnp.float32, minval=-b, maxval=b)

    keys = jax.random.split(key, 32)
    ki = iter(range(32))
    p = {}
    # LSTM layers; weights stored pre-transposed for x @ W form. Bias = b_ih + b_hh fused.
    in_dims = [I, H, H]
    for l in range(3):
        p[f"wih{l}"] = u(keys[next(ki)], (in_dims[l], 4 * H), bound)
        p[f"whh{l}"] = u(keys[next(ki)], (H, 4 * H), bound)
        b_ih = u(keys[next(ki)], (1, 4 * H), bound)
        b_hh = u(keys[next(ki)], (1, 4 * H), bound)
        p[f"b{l}"] = b_ih + b_hh
    # value stream
    p["wv1"] = u(keys[next(ki)], (H, H2), bound)
    p["bv1"] = u(keys[next(ki)], (1, H2), bound)
    p["wv2"] = u(keys[next(ki)], (H2, 1), bound2)
    p["bv2"] = u(keys[next(ki)], (1, 1), bound2)
    # advantage stream
    p["wa1"] = u(keys[next(ki)], (H, H2), bound)
    p["ba1"] = u(keys[next(ki)], (1, H2), bound)
    p["wa2"] = u(keys[next(ki)], (H2, O), bound2)
    p["ba2"] = u(keys[next(ki)], (1, O), bound2)
    return p


# ----------------------------------------------------------------------------
# Pure-JAX f32 reference (for correctness check of the kernel)
# ----------------------------------------------------------------------------
def reference_forward(x, params):
    B, T, I = x.shape
    H = params["whh0"].shape[0]

    def cell(xt, h, c, wih, whh, b):
        g = xt @ wih + h @ whh + b
        i = jax.nn.sigmoid(g[:, :H]); f = jax.nn.sigmoid(g[:, H:2 * H])
        gg = jnp.tanh(g[:, 2 * H:3 * H]); o = jax.nn.sigmoid(g[:, 3 * H:])
        c = f * c + i * gg
        return o * jnp.tanh(c), c

    h = [jnp.zeros((B, H), jnp.float32) for _ in range(3)]
    c = [jnp.zeros((B, H), jnp.float32) for _ in range(3)]
    for t in range(T):
        inp = x[:, t, :]
        for l in range(3):
            h[l], c[l] = cell(inp, h[l], c[l],
                              params[f"wih{l}"], params[f"whh{l}"], params[f"b{l}"])
            inp = h[l]
    feat = h[2]
    v = jnp.maximum(feat @ params["wv1"] + params["bv1"], 0) @ params["wv2"] + params["bv2"]
    a = jnp.maximum(feat @ params["wa1"] + params["ba1"], 0) @ params["wa2"] + params["ba2"]
    return v + (a - a.mean(axis=1, keepdims=True))


if __name__ == "__main__":
    B, T, I, H, O = 2, 8, 16, 32, 4

    key = jax.random.PRNGKey(0)
    kx, kp = jax.random.split(key)
    x = jax.random.normal(kx, (B, T, I), jnp.float32)
    params = init_params(kp, I, H, O)

    forward = make_dueling_dqn_forward(params)   # weight packing happens once here
    q = jax.block_until_ready(forward(x))

    q_ref = reference_forward(x, params)
    assert q.shape == (B, O)
    # bf16 MXU operands (f32 accumulation) -> loosened tolerance vs the f32 reference.
    assert jnp.allclose(q, q_ref, atol=3e-2, rtol=3e-2), (q, q_ref)

    print("KERNEL_OK")
</pallas_src>

<mosaic_0001>
module attributes {stable_mosaic.version = 11 : i64} {
  func.func @dueling_dqn_kernel(%arg0: memref<64x128xbf16, #tpu.memory_space<vmem>>, %arg1: memref<128x128xbf16, #tpu.memory_space<vmem>>, %arg2: memref<32x128xbf16, #tpu.memory_space<vmem>>, %arg3: memref<1x128xf32, #tpu.memory_space<vmem>>, %arg4: memref<32x128xbf16, #tpu.memory_space<vmem>>, %arg5: memref<32x128xbf16, #tpu.memory_space<vmem>>, %arg6: memref<1x128xf32, #tpu.memory_space<vmem>>, %arg7: memref<32x128xbf16, #tpu.memory_space<vmem>>, %arg8: memref<32x128xbf16, #tpu.memory_space<vmem>>, %arg9: memref<1x128xf32, #tpu.memory_space<vmem>>, %arg10: memref<32x128xbf16, #tpu.memory_space<vmem>>, %arg11: memref<1x128xf32, #tpu.memory_space<vmem>>, %arg12: memref<128x128xbf16, #tpu.memory_space<vmem>>, %arg13: memref<1x128xf32, #tpu.memory_space<vmem>>, %arg14: memref<8x128xf32, #tpu.memory_space<vmem>>, %arg15: memref<64x128xf32, #tpu.memory_space<vmem>>) attributes {dimension_semantics = [], scalar_prefetch = 0 : i64, scratch_operands = 1 : i64, tpu.core_type = #tpu.core_type<tc>} {
    %c0 = arith.constant 0 : index
    %c0_0 = arith.constant 0 : index
    %0 = vector.load %arg0[%c0, %c0_0] : memref<64x128xbf16, #tpu.memory_space<vmem>>, vector<64x128xbf16>
    %c0_1 = arith.constant 0 : index
    %c0_2 = arith.constant 0 : index
    %1 = vector.load %arg1[%c0_1, %c0_2] : memref<128x128xbf16, #tpu.memory_space<vmem>>, vector<128x128xbf16>
    %cst = arith.constant dense<0.000000e+00> : vector<64x128xf32>
    %2 = tpu.matmul %0, %1, %cst {dimension_numbers = #tpu.dot_dimension_numbers<[1], [0], [0], [1], [0, 0, 1, 1], [], []>} : vector<64x128xbf16>, vector<128x128xbf16>, vector<64x128xf32> -> vector<64x128xf32>
    %c0_3 = arith.constant 0 : index
    %c0_4 = arith.constant 0 : index
    %3 = vector.load %arg3[%c0_3, %c0_4] : memref<1x128xf32, #tpu.memory_space<vmem>>, vector<1x128xf32>
    %4 = vector.broadcast %3 : vector<1x128xf32> to vector<64x128xf32>
    %5 = arith.addf %2, %4 : vector<64x128xf32>
    %c0_5 = arith.constant 0 : index
    %c0_6 = arith.constant 0 : index
    %6 = vector.load %arg15[%c0_5, %c0_6] : memref<64x128xf32, #tpu.memory_space<vmem>>, vector<64x128xf32>
    tpu.vector_store %arg15[%c0_5, %c0_6], %5 {strides = array<i32>} : memref<64x128xf32, #tpu.memory_space<vmem>>, vector<64x128xf32>,
    %c0_7 = arith.constant 0 : index
    %c0_8 = arith.constant 0 : index
    %7 = vector.load %arg2[%c0_7, %c0_8] : memref<32x128xbf16, #tpu.memory_space<vmem>>, vector<32x128xbf16>
    %c0_9 = arith.constant 0 : index
    %c0_10 = arith.constant 0 : index
    %8 = vector.load %arg4[%c0_9, %c0_10] : memref<32x128xbf16, #tpu.memory_space<vmem>>, vector<32x128xbf16>
    %c0_11 = arith.constant 0 : index
    %c0_12 = arith.constant 0 : index
    %9 = vector.load %arg5[%c0_11, %c0_12] : memref<32x128xbf16, #tpu.memory_space<vmem>>, vector<32x128xbf16>
    %c0_13 = arith.constant 0 : index
    %c0_14 = arith.constant 0 : index
    %10 = vector.load %arg7[%c0_13, %c0_14] : memref<32x128xbf16, #tpu.memory_space<vmem>>, vector<32x128xbf16>
    %c0_15 = arith.constant 0 : index
    %c0_16 = arith.constant 0 : index
    %11 = vector.load %arg8[%c0_15, %c0_16] : memref<32x128xbf16, #tpu.memory_space<vmem>>, vector<32x128xbf16>
    %c0_17 = arith.constant 0 : index
    %c0_18 = arith.constant 0 : index
    %12 = vector.load %arg6[%c0_17, %c0_18] : memref<1x128xf32, #tpu.memory_space<vmem>>, vector<1x128xf32>
    %13 = vector.shape_cast %12 : vector<1x128xf32> to vector<1x128xf32>
    %14 = vector.broadcast %13 : vector<1x128xf32> to vector<8x128xf32>
    %c0_19 = arith.constant 0 : index
    %c0_20 = arith.constant 0 : index
    %15 = vector.load %arg9[%c0_19, %c0_20] : memref<1x128xf32, #tpu.memory_space<vmem>>, vector<1x128xf32>
    %16 = vector.shape_cast %15 : vector<1x128xf32> to vector<1x128xf32>
    %17 = vector.broadcast %16 : vector<1x128xf32> to vector<8x128xf32>
    %cst_21 = arith.constant 0.000000e+00 : f32
    %18 = vector.broadcast %cst_21 : f32 to vector<8x32xf32>
    %c0_i32 = arith.constant 0 : i32
    %c8_i32 = arith.constant 8 : i32
    %19 = arith.muli %c0_i32, %c8_i32 : i32
    %20 = tpu.assume_multiple %19, 8 : i32
    %21 = arith.index_cast %20 : i32 to index
    %c0_22 = arith.constant 0 : index
    %22 = vector.load %arg15[%21, %c0_22] : memref<64x128xf32, #tpu.memory_space<vmem>>, vector<8x128xf32>
    %23 = arith.truncf %18 : vector<8x32xf32> to vector<8x32xbf16>
    %cst_23 = arith.constant dense<0.000000e+00> : vector<8x128xf32>
    %24 = tpu.matmul %23, %7, %cst_23 {dimension_numbers = #tpu.dot_dimension_numbers<[1], [0], [0], [1], [0, 0, 1, 1], [], []>} : vector<8x32xbf16>, vector<32x128xbf16>, vector<8x128xf32> -> vector<8x128xf32>
    %25 = arith.addf %22, %24 : vector<8x128xf32>
    %26 = arith.negf %25 : vector<8x128xf32>
    %27 = math.exp %26 : vector<8x128xf32>
    %cst_24 = arith.constant 1.000000e+00 : f32
    %28 = vector.broadcast %cst_24 : f32 to vector<8x128xf32>
    %29 = arith.addf %28, %27 : vector<8x128xf32>
    %30 = arith.divf %28, %29 : vector<8x128xf32>
    %31 = math.tanh %25 : vector<8x128xf32>
    %32 = vector.extract_strided_slice %30 {offsets = [0, 0], sizes = [8, 32], strides = [1, 1]} : vector<8x128xf32> to vector<8x32xf32>
    %33 = vector.extract_strided_slice %30 {offsets = [0, 32], sizes = [8, 32], strides = [1, 1]} : vector<8x128xf32> to vector<8x32xf32>
    %34 = vector.extract_strided_slice %31 {offsets = [0, 64], sizes = [8, 32], strides = [1, 1]} : vector<8x128xf32> to vector<8x32xf32>
    %35 = vector.extract_strided_slice %30 {offsets = [0, 96], sizes = [8, 32], strides = [1, 1]} : vector<8x128xf32> to vector<8x32xf32>
    %36 = arith.mulf %33, %18 : vector<8x32xf32>
    %37 = arith.mulf %32, %34 : vector<8x32xf32>
    %38 = arith.addf %36, %37 : vector<8x32xf32>
    %39 = math.tanh %38 : vector<8x32xf32>
    %40 = arith.mulf %35, %39 : vector<8x32xf32>
    %41 = arith.truncf %40 : vector<8x32xf32> to vector<8x32xbf16>
    %cst_25 = arith.constant dense<0.000000e+00> : vector<8x128xf32>
    %42 = tpu.matmul %41, %8, %cst_25 {dimension_numbers = #tpu.dot_dimension_numbers<[1], [0], [0], [1], [0, 0, 1, 1], [], []>} : vector<8x32xbf16>, vector<32x128xbf16>, vector<8x128xf32> -> vector<8x128xf32>
    %43 = arith.truncf %18 : vector<8x32xf32> to vector<8x32xbf16>
    %cst_26 = arith.constant dense<0.000000e+00> : vector<8x128xf32>
    %44 = tpu.matmul %43, %9, %cst_26 {dimension_numbers = #tpu.dot_dimension_numbers<[1], [0], [0], [1], [0, 0, 1, 1], [], []>} : vector<8x32xbf16>, vector<32x128xbf16>, vector<8x128xf32> -> vector<8x128xf32>
    %45 = arith.addf %42, %44 : vector<8x128xf32>
    %46 = arith.addf %45, %14 : vector<8x128xf32>
    %47 = arith.negf %46 : vector<8x128xf32>
    %48 = math.exp %47 : vector<8x128xf32>
    %cst_27 = arith.constant 1.000000e+00 : f32
    %49 = vector.broadcast %cst_27 : f32 to vector<8x128xf32>
    %50 = arith.addf %49, %48 : vector<8x128xf32>
    %51 = arith.divf %49, %50 : vector<8x128xf32>
    %52 = math.tanh %46 : vector<8x128xf32>
    %53 = vector.extract_strided_slice %51 {offsets = [0, 0], sizes = [8, 32], strides = [1, 1]} : vector<8x128xf32> to vector<8x32xf32>
    %54 = vector.extract_strided_slice %51 {offsets = [0, 32], sizes = [8, 32], strides = [1, 1]} : vector<8x128xf32> to vector<8x32xf32>
    %55 = vector.extract_strided_slice %52 {offsets = [0, 64], sizes = [8, 32], strides = [1, 1]} : vector<8x128xf32> to vector<8x32xf32>
    %56 = vector.extract_strided_slice %51 {offsets = [0, 96], sizes = [8, 32], strides = [1, 1]} : vector<8x128xf32> to vector<8x32xf32>
    %57 = arith.mulf %54, %18 : vector<8x32xf32>
    %58 = arith.mulf %53, %55 : vector<8x32xf32>
    %59 = arith.addf %57, %58 : vector<8x32xf32>
    %60 = math.tanh %59 : vector<8x32xf32>
    %61 = arith.mulf %56, %60 : vector<8x32xf32>
    %62 = arith.truncf %61 : vector<8x32xf32> to vector<8x32xbf16>
    %cst_28 = arith.constant dense<0.000000e+00> : vector<8x128xf32>
    %63 = tpu.matmul %62, %10, %cst_28 {dimension_numbers = #tpu.dot_dimension_numbers<[1], [0], [0], [1], [0, 0, 1, 1], [], []>} : vector<8x32xbf16>, vector<32x128xbf16>, vector<8x128xf32> -> vector<8x128xf32>
    %64 = arith.truncf %18 : vector<8x32xf32> to vector<8x32xbf16>
    %cst_29 = arith.constant dense<0.000000e+00> : vector<8x128xf32>
    %65 = tpu.matmul %64, %11, %cst_29 {dimension_numbers = #tpu.dot_dimension_numbers<[1], [0], [0], [1], [0, 0, 1, 1], [], []>} : vector<8x32xbf16>, vector<32x128xbf16>, vector<8x128xf32> -> vector<8x128xf32>
    %66 = arith.addf %63, %65 : vector<8x128xf32>
    %67 = arith.addf %66, %17 : vector<8x128xf32>
    %68 = arith.negf %67 : vector<8x128xf32>
    %69 = math.exp %68 : vector<8x128xf32>
    %cst_30 = arith.constant 1.000000e+00 : f32
    %70 = vector.broadcast %cst_30 : f32 to vector<8x128xf32>
    %71 = arith.addf %70, %69 : vector<8x128xf32>
    %72 = arith.divf %70, %71 : vector<8x128xf32>
    %73 = math.tanh %67 : vector<8x128xf32>
    %74 = vector.extract_strided_slice %72 {offsets = [0, 0], sizes = [8, 32], strides = [1, 1]} : vector<8x128xf32> to vector<8x32xf32>
    %75 = vector.extract_strided_slice %72 {offsets = [0, 32], sizes = [8, 32], strides = [1, 1]} : vector<8x128xf32> to vector<8x32xf32>
    %76 = vector.extract_strided_slice %73 {offsets = [0, 64], sizes = [8, 32], strides = [1, 1]} : vector<8x128xf32> to vector<8x32xf32>
    %77 = vector.extract_strided_slice %72 {offsets = [0, 96], sizes = [8, 32], strides = [1, 1]} : vector<8x128xf32> to vector<8x32xf32>
    %78 = arith.mulf %75, %18 : vector<8x32xf32>
    %79 = arith.mulf %74, %76 : vector<8x32xf32>
    %80 = arith.addf %78, %79 : vector<8x32xf32>
    %81 = math.tanh %80 : vector<8x32xf32>
    %82 = arith.mulf %77, %81 : vector<8x32xf32>
    %c1_i32 = arith.constant 1 : i32
    %c8_i32_31 = arith.constant 8 : i32
    %83 = arith.muli %c1_i32, %c8_i32_31 : i32
    %84 = tpu.assume_multiple %83, 8 : i32
    %85 = arith.index_cast %84 : i32 to index
    %c0_32 = arith.constant 0 : index
    %86 = vector.load %arg15[%85, %c0_32] : memref<64x128xf32, #tpu.memory_space<vmem>>, vector<8x128xf32>
    %87 = arith.truncf %40 : vector<8x32xf32> to vector<8x32xbf16>
    %cst_33 = arith.constant dense<0.000000e+00> : vector<8x128xf32>
    %88 = tpu.matmul %87, %7, %cst_33 {dimension_numbers = #tpu.dot_dimension_numbers<[1], [0], [0], [1], [0, 0, 1, 1], [], []>} : vector<8x32xbf16>, vector<32x128xbf16>, vector<8x128xf32> -> vector<8x128xf32>
    %89 = arith.addf %86, %88 : vector<8x128xf32>
    %90 = arith.negf %89 : vector<8x128xf32>
    %91 = math.exp %90 : vector<8x128xf32>
    %cst_34 = arith.constant 1.000000e+00 : f32
    %92 = vector.broadcast %cst_34 : f32 to vector<8x128xf32>
    %93 = arith.addf %92, %91 : vector<8x128xf32>
    %94 = arith.divf %92, %93 : vector<8x128xf32>
    %95 = math.tanh %89 : vector<8x128xf32>
    %96 = vector.extract_strided_slice %94 {offsets = [0, 0], sizes = [8, 32], strides = [1, 1]} : vector<8x128xf32> to vector<8x32xf32>
    %97 = vector.extract_strided_slice %94 {offsets = [0, 32], sizes = [8, 32], strides = [1, 1]} : vector<8x128xf32> to vector<8x32xf32>
    %98 = vector.extract_strided_slice %95 {offsets = [0, 64], sizes = [8, 32], strides = [1, 1]} : vector<8x128xf32> to vector<8x32xf32>
    %99 = vector.extract_strided_slice %94 {offsets = [0, 96], sizes = [8, 32], strides = [1, 1]} : vector<8x128xf32> to vector<8x32xf32>
    %100 = arith.mulf %97, %38 : vector<8x32xf32>
    %101 = arith.mulf %96, %98 : vector<8x32xf32>
    %102 = arith.addf %100, %101 : vector<8x32xf32>
    %103 = math.tanh %102 : vector<8x32xf32>
    %104 = arith.mulf %99, %103 : vector<8x32xf32>
    %105 = arith.truncf %104 : vector<8x32xf32> to vector<8x32xbf16>
    %cst_35 = arith.constant dense<0.000000e+00> : vector<8x128xf32>
    %106 = tpu.matmul %105, %8, %cst_35 {dimension_numbers = #tpu.dot_dimension_numbers<[1], [0], [0], [1], [0, 0, 1, 1], [], []>} : vector<8x32xbf16>, vector<32x128xbf16>, vector<8x128xf32> -> vector<8x128xf32>
    %107 = arith.truncf %61 : vector<8x32xf32> to vector<8x32xbf16>
    %cst_36 = arith.constant dense<0.000000e+00> : vector<8x128xf32>
    %108 = tpu.matmul %107, %9, %cst_36 {dimension_numbers = #tpu.dot_dimension_numbers<[1], [0], [0], [1], [0, 0, 1, 1], [], []>} : vector<8x32xbf16>, vector<32x128xbf16>, vector<8x128xf32> -> vector<8x128xf32>
    %109 = arith.addf %106, %108 : vector<8x128xf32>
    %110 = arith.addf %109, %14 : vector<8x128xf32>
    %111 = arith.negf %110 : vector<8x128xf32>
    %112 = math.exp %111 : vector<8x128xf32>
    %cst_37 = arith.constant 1.000000e+00 : f32
    %113 = vector.broadcast %cst_37 : f32 to vector<8x128xf32>
    %114 = arith.addf %113, %112 : vector<8x128xf32>
    %115 = arith.divf %113, %114 : vector<8x128xf32>
    %116 = math.tanh %110 : vector<8x128xf32>
    %117 = vector.extract_strided_slice %115 {offsets = [0, 0], sizes = [8, 32], strides = [1, 1]} : vector<8x128xf32> to vector<8x32xf32>
    %118 = vector.extract_strided_slice %115 {offsets = [0, 32], sizes = [8, 32], strides = [1, 1]} : vector<8x128xf32> to vector<8x32xf32>
    %119 = vector.extract_strided_slice %116 {offsets = [0, 64], sizes = [8, 32], strides = [1, 1]} : vector<8x128xf32> to vector<8x32xf32>
    %120 = vector.extract_strided_slice %115 {offsets = [0, 96], sizes = [8, 32], strides = [1, 1]} : vector<8x128xf32> to vector<8x32xf32>
    %121 = arith.mulf %118, %59 : vector<8x32xf32>
    %122 = arith.mulf %117, %119 : vector<8x32xf32>
    %123 = arith.addf %121, %122 : vector<8x32xf32>
    %124 = math.tanh %123 : vector<8x32xf32>
    %125 = arith.mulf %120, %124 : vector<8x32xf32>
    %126 = arith.truncf %125 : vector<8x32xf32> to vector<8x32xbf16>
    %cst_38 = arith.constant dense<0.000000e+00> : vector<8x128xf32>
    %127 = tpu.matmul %126, %10, %cst_38 {dimension_numbers = #tpu.dot_dimension_numbers<[1], [0], [0], [1], [0, 0, 1, 1], [], []>} : vector<8x32xbf16>, vector<32x128xbf16>, vector<8x128xf32> -> vector<8x128xf32>
    %128 = arith.truncf %82 : vector<8x32xf32> to vector<8x32xbf16>
    %cst_39 = arith.constant dense<0.000000e+00> : vector<8x128xf32>
    %129 = tpu.matmul %128, %11, %cst_39 {dimension_numbers = #tpu.dot_dimension_numbers<[1], [0], [0], [1], [0, 0, 1, 1], [], []>} : vector<8x32xbf16>, vector<32x128xbf16>, vector<8x128xf32> -> vector<8x128xf32>
    %130 = arith.addf %127, %129 : vector<8x128xf32>
    %131 = arith.addf %130, %17 : vector<8x128xf32>
    %132 = arith.negf %131 : vector<8x128xf32>
    %133 = math.exp %132 : vector<8x128xf32>
    %cst_40 = arith.constant 1.000000e+00 : f32
    %134 = vector.broadcast %cst_40 : f32 to vector<8x128xf32>
    %135 = arith.addf %134, %133 : vector<8x128xf32>
    %136 = arith.divf %134, %135 : vector<8x128xf32>
    %137 = math.tanh %131 : vector<8x128xf32>
    %138 = vector.extract_strided_slice %136 {offsets = [0, 0], sizes = [8, 32], strides = [1, 1]} : vector<8x128xf32> to vector<8x32xf32>
    %139 = vector.extract_strided_slice %136 {offsets = [0, 32], sizes = [8, 32], strides = [1, 1]} : vector<8x128xf32> to vector<8x32xf32>
    %140 = vector.extract_strided_slice %137 {offsets = [0, 64], sizes = [8, 32], strides = [1, 1]} : vector<8x128xf32> to vector<8x32xf32>
    %141 = vector.extract_strided_slice %136 {offsets = [0, 96], sizes = [8, 32], strides = [1, 1]} : vector<8x128xf32> to vector<8x32xf32>
    %142 = arith.mulf %139, %80 : vector<8x32xf32>
    %143 = arith.mulf %138, %140 : vector<8x32xf32>
    %144 = arith.addf %142, %143 : vector<8x32xf32>
    %145 = math.tanh %144 : vector<8x32xf32>
    %146 = arith.mulf %141, %145 : vector<8x32xf32>
    %c2_i32 = arith.constant 2 : i32
    %c8_i32_41 = arith.constant 8 : i32
    %147 = arith.muli %c2_i32, %c8_i32_41 : i32
    %148 = tpu.assume_multiple %147, 8 : i32
    %149 = arith.index_cast %148 : i32 to index
    %c0_42 = arith.constant 0 : index
    %150 = vector.load %arg15[%149, %c0_42] : memref<64x128xf32, #tpu.memory_space<vmem>>, vector<8x128xf32>
    %151 = arith.truncf %104 : vector<8x32xf32> to vector<8x32xbf16>
    %cst_43 = arith.constant dense<0.000000e+00> : vector<8x128xf32>
    %152 = tpu.matmul %151, %7, %cst_43 {dimension_numbers = #tpu.dot_dimension_numbers<[1], [0], [0], [1], [0, 0, 1, 1], [], []>} : vector<8x32xbf16>, vector<32x128xbf16>, vector<8x128xf32> -> vector<8x128xf32>
    %153 = arith.addf %150, %152 : vector<8x128xf32>
    %154 = arith.negf %153 : vector<8x128xf32>
    %155 = math.exp %154 : vector<8x128xf32>
    %cst_44 = arith.constant 1.000000e+00 : f32
    %156 = vector.broadcast %cst_44 : f32 to vector<8x128xf32>
    %157 = arith.addf %156, %155 : vector<8x128xf32>
    %158 = arith.divf %156, %157 : vector<8x128xf32>
    %159 = math.tanh %153 : vector<8x128xf32>
    %160 = vector.extract_strided_slice %158 {offsets = [0, 0], sizes = [8, 32], strides = [1, 1]} : vector<8x128xf32> to vector<8x32xf32>
    %161 = vector.extract_strided_slice %158 {offsets = [0, 32], sizes = [8, 32], strides = [1, 1]} : vector<8x128xf32> to vector<8x32xf32>
    %162 = vector.extract_strided_slice %159 {offsets = [0, 64], sizes = [8, 32], strides = [1, 1]} : vector<8x128xf32> to vector<8x32xf32>
    %163 = vector.extract_strided_slice %158 {offsets = [0, 96], sizes = [8, 32], strides = [1, 1]} : vector<8x128xf32> to vector<8x32xf32>
    %164 = arith.mulf %161, %102 : vector<8x32xf32>
    %165 = arith.mulf %160, %162 : vector<8x32xf32>
    %166 = arith.addf %164, %165 : vector<8x32xf32>
    %167 = math.tanh %166 : vector<8x32xf32>
    %168 = arith.mulf %163, %167 : vector<8x32xf32>
    %169 = arith.truncf %168 : vector<8x32xf32> to vector<8x32xbf16>
    %cst_45 = arith.constant dense<0.000000e+00> : vector<8x128xf32>
    %170 = tpu.matmul %169, %8, %cst_45 {dimension_numbers = #tpu.dot_dimension_numbers<[1], [0], [0], [1], [0, 0, 1, 1], [], []>} : vector<8x32xbf16>, vector<32x128xbf16>, vector<8x128xf32> -> vector<8x128xf32>
    %171 = arith.truncf %125 : vector<8x32xf32> to vector<8x32xbf16>
    %cst_46 = arith.constant dense<0.000000e+00> : vector<8x128xf32>
    %172 = tpu.matmul %171, %9, %cst_46 {dimension_numbers = #tpu.dot_dimension_numbers<[1], [0], [0], [1], [0, 0, 1, 1], [], []>} : vector<8x32xbf16>, vector<32x128xbf16>, vector<8x128xf32> -> vector<8x128xf32>
    %173 = arith.addf %170, %172 : vector<8x128xf32>
    %174 = arith.addf %173, %14 : vector<8x128xf32>
    %175 = arith.negf %174 : vector<8x128xf32>
    %176 = math.exp %175 : vector<8x128xf32>
    %cst_47 = arith.constant 1.000000e+00 : f32
    %177 = vector.broadcast %cst_47 : f32 to vector<8x128xf32>
    %178 = arith.addf %177, %176 : vector<8x128xf32>
    %179 = arith.divf %177, %178 : vector<8x128xf32>
    %180 = math.tanh %174 : vector<8x128xf32>
    %181 = vector.extract_strided_slice %179 {offsets = [0, 0], sizes = [8, 32], strides = [1, 1]} : vector<8x128xf32> to vector<8x32xf32>
    %182 = vector.extract_strided_slice %179 {offsets = [0, 32], sizes = [8, 32], strides = [1, 1]} : vector<8x128xf32> to vector<8x32xf32>
    %183 = vector.extract_strided_slice %180 {offsets = [0, 64], sizes = [8, 32], strides = [1, 1]} : vector<8x128xf32> to vector<8x32xf32>
    %184 = vector.extract_strided_slice %179 {offsets = [0, 96], sizes = [8, 32], strides = [1, 1]} : vector<8x128xf32> to vector<8x32xf32>
    %185 = arith.mulf %182, %123 : vector<8x32xf32>
    %186 = arith.mulf %181, %183 : vector<8x32xf32>
    %187 = arith.addf %185, %186 : vector<8x32xf32>
    %188 = math.tanh %187 : vector<8x32xf32>
    %189 = arith.mulf %184, %188 : vector<8x32xf32>
    %190 = arith.truncf %189 : vector<8x32xf32> to vector<8x32xbf16>
    %cst_48 = arith.constant dense<0.000000e+00> : vector<8x128xf32>
    %191 = tpu.matmul %190, %10, %cst_48 {dimension_numbers = #tpu.dot_dimension_numbers<[1], [0], [0], [1], [0, 0, 1, 1], [], []>} : vector<8x32xbf16>, vector<32x128xbf16>, vector<8x128xf32> -> vector<8x128xf32>
    %192 = arith.truncf %146 : vector<8x32xf32> to vector<8x32xbf16>
    %cst_49 = arith.constant dense<0.000000e+00> : vector<8x128xf32>
    %193 = tpu.matmul %192, %11, %cst_49 {dimension_numbers = #tpu.dot_dimension_numbers<[1], [0], [0], [1], [0, 0, 1, 1], [], []>} : vector<8x32xbf16>, vector<32x128xbf16>, vector<8x128xf32> -> vector<8x128xf32>
    %194 = arith.addf %191, %193 : vector<8x128xf32>
    %195 = arith.addf %194, %17 : vector<8x128xf32>
    %196 = arith.negf %195 : vector<8x128xf32>
    %197 = math.exp %196 : vector<8x128xf32>
    %cst_50 = arith.constant 1.000000e+00 : f32
    %198 = vector.broadcast %cst_50 : f32 to vector<8x128xf32>
    %199 = arith.addf %198, %197 : vector<8x128xf32>
    %200 = arith.divf %198, %199 : vector<8x128xf32>
    %201 = math.tanh %195 : vector<8x128xf32>
    %202 = vector.extract_strided_slice %200 {offsets = [0, 0], sizes = [8, 32], strides = [1, 1]} : vector<8x128xf32> to vector<8x32xf32>
    %203 = vector.extract_strided_slice %200 {offsets = [0, 32], sizes = [8, 32], strides = [1, 1]} : vector<8x128xf32> to vector<8x32xf32>
    %204 = vector.extract_strided_slice %201 {offsets = [0, 64], sizes = [8, 32], strides = [1, 1]} : vector<8x128xf32> to vector<8x32xf32>
    %205 = vector.extract_strided_slice %200 {offsets = [0, 96], sizes = [8, 32], strides = [1, 1]} : vector<8x128xf32> to vector<8x32xf32>
    %206 = arith.mulf %203, %144 : vector<8x32xf32>
    %207 = arith.mulf %202, %204 : vector<8x32xf32>
    %208 = arith.addf %206, %207 : vector<8x32xf32>
    %209 = math.tanh %208 : vector<8x32xf32>
    %210 = arith.mulf %205, %209 : vector<8x32xf32>
    %c3_i32 = arith.constant 3 : i32
    %c8_i32_51 = arith.constant 8 : i32
    %211 = arith.muli %c3_i32, %c8_i32_51 : i32
    %212 = tpu.assume_multiple %211, 8 : i32
    %213 = arith.index_cast %212 : i32 to index
    %c0_52 = arith.constant 0 : index
    %214 = vector.load %arg15[%213, %c0_52] : memref<64x128xf32, #tpu.memory_space<vmem>>, vector<8x128xf32>
    %215 = arith.truncf %168 : vector<8x32xf32> to vector<8x32xbf16>
    %cst_53 = arith.constant dense<0.000000e+00> : vector<8x128xf32>
    %216 = tpu.matmul %215, %7, %cst_53 {dimension_numbers = #tpu.dot_dimension_numbers<[1], [0], [0], [1], [0, 0, 1, 1], [], []>} : vector<8x32xbf16>, vector<32x128xbf16>, vector<8x128xf32> -> vector<8x128xf32>
    %217 = arith.addf %214, %216 : vector<8x128xf32>
    %218 = arith.negf %217 : vector<8x128xf32>
    %219 = math.exp %218 : vector<8x128xf32>
    %cst_54 = arith.constant 1.000000e+00 : f32
    %220 = vector.broadcast %cst_54 : f32 to vector<8x128xf32>
    %221 = arith.addf %220, %219 : vector<8x128xf32>
    %222 = arith.divf %220, %221 : vector<8x128xf32>
    %223 = math.tanh %217 : vector<8x128xf32>
    %224 = vector.extract_strided_slice %222 {offsets = [0, 0], sizes = [8, 32], strides = [1, 1]} : vector<8x128xf32> to vector<8x32xf32>
    %225 = vector.extract_strided_slice %222 {offsets = [0, 32], sizes = [8, 32], strides = [1, 1]} : vector<8x128xf32> to vector<8x32xf32>
    %226 = vector.extract_strided_slice %223 {offsets = [0, 64], sizes = [8, 32], strides = [1, 1]} : vector<8x128xf32> to vector<8x32xf32>
    %227 = vector.extract_strided_slice %222 {offsets = [0, 96], sizes = [8, 32], strides = [1, 1]} : vector<8x128xf32> to vector<8x32xf32>
    %228 = arith.mulf %225, %166 : vector<8x32xf32>
    %229 = arith.mulf %224, %226 : vector<8x32xf32>
    %230 = arith.addf %228, %229 : vector<8x32xf32>
    %231 = math.tanh %230 : vector<8x32xf32>
    %232 = arith.mulf %227, %231 : vector<8x32xf32>
    %233 = arith.truncf %232 : vector<8x32xf32> to vector<8x32xbf16>
    %cst_55 = arith.constant dense<0.000000e+00> : vector<8x128xf32>
    %234 = tpu.matmul %233, %8, %cst_55 {dimension_numbers = #tpu.dot_dimension_numbers<[1], [0], [0], [1], [0, 0, 1, 1], [], []>} : vector<8x32xbf16>, vector<32x128xbf16>, vector<8x128xf32> -> vector<8x128xf32>
    %235 = arith.truncf %189 : vector<8x32xf32> to vector<8x32xbf16>
    %cst_56 = arith.constant dense<0.000000e+00> : vector<8x128xf32>
    %236 = tpu.matmul %235, %9, %cst_56 {dimension_numbers = #tpu.dot_dimension_numbers<[1], [0], [0], [1], [0, 0, 1, 1], [], []>} : vector<8x32xbf16>, vector<32x128xbf16>, vector<8x128xf32> -> vector<8x128xf32>
    %237 = arith.addf %234, %236 : vector<8x128xf32>
    %238 = arith.addf %237, %14 : vector<8x128xf32>
    %239 = arith.negf %238 : vector<8x128xf32>
    %240 = math.exp %239 : vector<8x128xf32>
    %cst_57 = arith.constant 1.000000e+00 : f32
    %241 = vector.broadcast %cst_57 : f32 to vector<8x128xf32>
    %242 = arith.addf %241, %240 : vector<8x128xf32>
    %243 = arith.divf %241, %242 : vector<8x128xf32>
    %244 = math.tanh %238 : vector<8x128xf32>
    %245 = vector.extract_strided_slice %243 {offsets = [0, 0], sizes = [8, 32], strides = [1, 1]} : vector<8x128xf32> to vector<8x32xf32>
    %246 = vector.extract_strided_slice %243 {offsets = [0, 32], sizes = [8, 32], strides = [1, 1]} : vector<8x128xf32> to vector<8x32xf32>
    %247 = vector.extract_strided_slice %244 {offsets = [0, 64], sizes = [8, 32], strides = [1, 1]} : vector<8x128xf32> to vector<8x32xf32>
    %248 = vector.extract_strided_slice %243 {offsets = [0, 96], sizes = [8, 32], strides = [1, 1]} : vector<8x128xf32> to vector<8x32xf32>
    %249 = arith.mulf %246, %187 : vector<8x32xf32>
    %250 = arith.mulf %245, %247 : vector<8x32xf32>
    %251 = arith.addf %249, %250 : vector<8x32xf32>
    %252 = math.tanh %251 : vector<8x32xf32>
    %253 = arith.mulf %248, %252 : vector<8x32xf32>
    %254 = arith.truncf %253 : vector<8x32xf32> to vector<8x32xbf16>
    %cst_58 = arith.constant dense<0.000000e+00> : vector<8x128xf32>
    %255 = tpu.matmul %254, %10, %cst_58 {dimension_numbers = #tpu.dot_dimension_numbers<[1], [0], [0], [1], [0, 0, 1, 1], [], []>} : vector<8x32xbf16>, vector<32x128xbf16>, vector<8x128xf32> -> vector<8x128xf32>
    %256 = arith.truncf %210 : vector<8x32xf32> to vector<8x32xbf16>
    %cst_59 = arith.constant dense<0.000000e+00> : vector<8x128xf32>
    %257 = tpu.matmul %256, %11, %cst_59 {dimension_numbers = #tpu.dot_dimension_numbers<[1], [0], [0], [1], [0, 0, 1, 1], [], []>} : vector<8x32xbf16>, vector<32x128xbf16>, vector<8x128xf32> -> vector<8x128xf32>
    %258 = arith.addf %255, %257 : vector<8x128xf32>
    %259 = arith.addf %258, %17 : vector<8x128xf32>
    %260 = arith.negf %259 : vector<8x128xf32>
    %261 = math.exp %260 : vector<8x128xf32>
    %cst_60 = arith.constant 1.000000e+00 : f32
    %262 = vector.broadcast %cst_60 : f32 to vector<8x128xf32>
    %263 = arith.addf %262, %261 : vector<8x128xf32>
    %264 = arith.divf %262, %263 : vector<8x128xf32>
    %265 = math.tanh %259 : vector<8x128xf32>
    %266 = vector.extract_strided_slice %264 {offsets = [0, 0], sizes = [8, 32], strides = [1, 1]} : vector<8x128xf32> to vector<8x32xf32>
    %267 = vector.extract_strided_slice %264 {offsets = [0, 32], sizes = [8, 32], strides = [1, 1]} : vector<8x128xf32> to vector<8x32xf32>
    %268 = vector.extract_strided_slice %265 {offsets = [0, 64], sizes = [8, 32], strides = [1, 1]} : vector<8x128xf32> to vector<8x32xf32>
    %269 = vector.extract_strided_slice %264 {offsets = [0, 96], sizes = [8, 32], strides = [1, 1]} : vector<8x128xf32> to vector<8x32xf32>
    %270 = arith.mulf %267, %208 : vector<8x32xf32>
    %271 = arith.mulf %266, %268 : vector<8x32xf32>
    %272 = arith.addf %270, %271 : vector<8x32xf32>
    %273 = math.tanh %272 : vector<8x32xf32>
    %274 = arith.mulf %269, %273 : vector<8x32xf32>
    %c4_i32 = arith.constant 4 : i32
    %c8_i32_61 = arith.constant 8 : i32
    %275 = arith.muli %c4_i32, %c8_i32_61 : i32
    %276 = tpu.assume_multiple %275, 8 : i32
    %277 = arith.index_cast %276 : i32 to index
    %c0_62 = arith.constant 0 : index
    %278 = vector.load %arg15[%277, %c0_62] : memref<64x128xf32, #tpu.memory_space<vmem>>, vector<8x128xf32>
    %279 = arith.truncf %232 : vector<8x32xf32> to vector<8x32xbf16>
    %cst_63 = arith.constant dense<0.000000e+00> : vector<8x128xf32>
    %280 = tpu.matmul %279, %7, %cst_63 {dimension_numbers = #tpu.dot_dimension_numbers<[1], [0], [0], [1], [0, 0, 1, 1], [], []>} : vector<8x32xbf16>, vector<32x128xbf16>, vector<8x128xf32> -> vector<8x128xf32>
    %281 = arith.addf %278, %280 : vector<8x128xf32>
    %282 = arith.negf %281 : vector<8x128xf32>
    %283 = math.exp %282 : vector<8x128xf32>
    %cst_64 = arith.constant 1.000000e+00 : f32
    %284 = vector.broadcast %cst_64 : f32 to vector<8x128xf32>
    %285 = arith.addf %284, %283 : vector<8x128xf32>
    %286 = arith.divf %284, %285 : vector<8x128xf32>
    %287 = math.tanh %281 : vector<8x128xf32>
    %288 = vector.extract_strided_slice %286 {offsets = [0, 0], sizes = [8, 32], strides = [1, 1]} : vector<8x128xf32> to vector<8x32xf32>
    %289 = vector.extract_strided_slice %286 {offsets = [0, 32], sizes = [8, 32], strides = [1, 1]} : vector<8x128xf32> to vector<8x32xf32>
    %290 = vector.extract_strided_slice %287 {offsets = [0, 64], sizes = [8, 32], strides = [1, 1]} : vector<8x128xf32> to vector<8x32xf32>
    %291 = vector.extract_strided_slice %286 {offsets = [0, 96], sizes = [8, 32], strides = [1, 1]} : vector<8x128xf32> to vector<8x32xf32>
    %292 = arith.mulf %289, %230 : vector<8x32xf32>
    %293 = arith.mulf %288, %290 : vector<8x32xf32>
    %294 = arith.addf %292, %293 : vector<8x32xf32>
    %295 = math.tanh %294 : vector<8x32xf32>
    %296 = arith.mulf %291, %295 : vector<8x32xf32>
    %297 = arith.truncf %296 : vector<8x32xf32> to vector<8x32xbf16>
    %cst_65 = arith.constant dense<0.000000e+00> : vector<8x128xf32>
    %298 = tpu.matmul %297, %8, %cst_65 {dimension_numbers = #tpu.dot_dimension_numbers<[1], [0], [0], [1], [0, 0, 1, 1], [], []>} : vector<8x32xbf16>, vector<32x128xbf16>, vector<8x128xf32> -> vector<8x128xf32>
    %299 = arith.truncf %253 : vector<8x32xf32> to vector<8x32xbf16>
    %cst_66 = arith.constant dense<0.000000e+00> : vector<8x128xf32>
    %300 = tpu.matmul %299, %9, %cst_66 {dimension_numbers = #tpu.dot_dimension_numbers<[1], [0], [0], [1], [0, 0, 1, 1], [], []>} : vector<8x32xbf16>, vector<32x128xbf16>, vector<8x128xf32> -> vector<8x128xf32>
    %301 = arith.addf %298, %300 : vector<8x128xf32>
    %302 = arith.addf %301, %14 : vector<8x128xf32>
    %303 = arith.negf %302 : vector<8x128xf32>
    %304 = math.exp %303 : vector<8x128xf32>
    %cst_67 = arith.constant 1.000000e+00 : f32
    %305 = vector.broadcast %cst_67 : f32 to vector<8x128xf32>
    %306 = arith.addf %305, %304 : vector<8x128xf32>
    %307 = arith.divf %305, %306 : vector<8x128xf32>
    %308 = math.tanh %302 : vector<8x128xf32>
    %309 = vector.extract_strided_slice %307 {offsets = [0, 0], sizes = [8, 32], strides = [1, 1]} : vector<8x128xf32> to vector<8x32xf32>
    %310 = vector.extract_strided_slice %307 {offsets = [0, 32], sizes = [8, 32], strides = [1, 1]} : vector<8x128xf32> to vector<8x32xf32>
    %311 = vector.extract_strided_slice %308 {offsets = [0, 64], sizes = [8, 32], strides = [1, 1]} : vector<8x128xf32> to vector<8x32xf32>
    %312 = vector.extract_strided_slice %307 {offsets = [0, 96], sizes = [8, 32], strides = [1, 1]} : vector<8x128xf32> to vector<8x32xf32>
    %313 = arith.mulf %310, %251 : vector<8x32xf32>
    %314 = arith.mulf %309, %311 : vector<8x32xf32>
    %315 = arith.addf %313, %314 : vector<8x32xf32>
    %316 = math.tanh %315 : vector<8x32xf32>
    %317 = arith.mulf %312, %316 : vector<8x32xf32>
    %318 = arith.truncf %317 : vector<8x32xf32> to vector<8x32xbf16>
    %cst_68 = arith.constant dense<0.000000e+00> : vector<8x128xf32>
    %319 = tpu.matmul %318, %10, %cst_68 {dimension_numbers = #tpu.dot_dimension_numbers<[1], [0], [0], [1], [0, 0, 1, 1], [], []>} : vector<8x32xbf16>, vector<32x128xbf16>, vector<8x128xf32> -> vector<8x128xf32>
    %320 = arith.truncf %274 : vector<8x32xf32> to vector<8x32xbf16>
    %cst_69 = arith.constant dense<0.000000e+00> : vector<8x128xf32>
    %321 = tpu.matmul %320, %11, %cst_69 {dimension_numbers = #tpu.dot_dimension_numbers<[1], [0], [0], [1], [0, 0, 1, 1], [], []>} : vector<8x32xbf16>, vector<32x128xbf16>, vector<8x128xf32> -> vector<8x128xf32>
    %322 = arith.addf %319, %321 : vector<8x128xf32>
    %323 = arith.addf %322, %17 : vector<8x128xf32>
    %324 = arith.negf %323 : vector<8x128xf32>
    %325 = math.exp %324 : vector<8x128xf32>
    %cst_70 = arith.constant 1.000000e+00 : f32
    %326 = vector.broadcast %cst_70 : f32 to vector<8x128xf32>
    %327 = arith.addf %326, %325 : vector<8x128xf32>
    %328 = arith.divf %326, %327 : vector<8x128xf32>
    %329 = math.tanh %323 : vector<8x128xf32>
    %330 = vector.extract_strided_slice %328 {offsets = [0, 0], sizes = [8, 32], strides = [1, 1]} : vector<8x128xf32> to vector<8x32xf32>
    %331 = vector.extract_strided_slice %328 {offsets = [0, 32], sizes = [8, 32], strides = [1, 1]} : vector<8x128xf32> to vector<8x32xf32>
    %332 = vector.extract_strided_slice %329 {offsets = [0, 64], sizes = [8, 32], strides = [1, 1]} : vector<8x128xf32> to vector<8x32xf32>
    %333 = vector.extract_strided_slice %328 {offsets = [0, 96], sizes = [8, 32], strides = [1, 1]} : vector<8x128xf32> to vector<8x32xf32>
    %334 = arith.mulf %331, %272 : vector<8x32xf32>
    %335 = arith.mulf %330, %332 : vector<8x32xf32>
    %336 = arith.addf %334, %335 : vector<8x32xf32>
    %337 = math.tanh %336 : vector<8x32xf32>
    %338 = arith.mulf %333, %337 : vector<8x32xf32>
    %c5_i32 = arith.constant 5 : i32
    %c8_i32_71 = arith.constant 8 : i32
    %339 = arith.muli %c5_i32, %c8_i32_71 : i32
    %340 = tpu.assume_multiple %339, 8 : i32
    %341 = arith.index_cast %340 : i32 to index
    %c0_72 = arith.constant 0 : index
    %342 = vector.load %arg15[%341, %c0_72] : memref<64x128xf32, #tpu.memory_space<vmem>>, vector<8x128xf32>
    %343 = arith.truncf %296 : vector<8x32xf32> to vector<8x32xbf16>
    %cst_73 = arith.constant dense<0.000000e+00> : vector<8x128xf32>
    %344 = tpu.matmul %343, %7, %cst_73 {dimension_numbers = #tpu.dot_dimension_numbers<[1], [0], [0], [1], [0, 0, 1, 1], [], []>} : vector<8x32xbf16>, vector<32x128xbf16>, vector<8x128xf32> -> vector<8x128xf32>
    %345 = arith.addf %342, %344 : vector<8x128xf32>
    %346 = arith.negf %345 : vector<8x128xf32>
    %347 = math.exp %346 : vector<8x128xf32>
    %cst_74 = arith.constant 1.000000e+00 : f32
    %348 = vector.broadcast %cst_74 : f32 to vector<8x128xf32>
    %349 = arith.addf %348, %347 : vector<8x128xf32>
    %350 = arith.divf %348, %349 : vector<8x128xf32>
    %351 = math.tanh %345 : vector<8x128xf32>
    %352 = vector.extract_strided_slice %350 {offsets = [0, 0], sizes = [8, 32], strides = [1, 1]} : vector<8x128xf32> to vector<8x32xf32>
    %353 = vector.extract_strided_slice %350 {offsets = [0, 32], sizes = [8, 32], strides = [1, 1]} : vector<8x128xf32> to vector<8x32xf32>
    %354 = vector.extract_strided_slice %351 {offsets = [0, 64], sizes = [8, 32], strides = [1, 1]} : vector<8x128xf32> to vector<8x32xf32>
    %355 = vector.extract_strided_slice %350 {offsets = [0, 96], sizes = [8, 32], strides = [1, 1]} : vector<8x128xf32> to vector<8x32xf32>
    %356 = arith.mulf %353, %294 : vector<8x32xf32>
    %357 = arith.mulf %352, %354 : vector<8x32xf32>
    %358 = arith.addf %356, %357 : vector<8x32xf32>
    %359 = math.tanh %358 : vector<8x32xf32>
    %360 = arith.mulf %355, %359 : vector<8x32xf32>
    %361 = arith.truncf %360 : vector<8x32xf32> to vector<8x32xbf16>
    %cst_75 = arith.constant dense<0.000000e+00> : vector<8x128xf32>
    %362 = tpu.matmul %361, %8, %cst_75 {dimension_numbers = #tpu.dot_dimension_numbers<[1], [0], [0], [1], [0, 0, 1, 1], [], []>} : vector<8x32xbf16>, vector<32x128xbf16>, vector<8x128xf32> -> vector<8x128xf32>
    %363 = arith.truncf %317 : vector<8x32xf32> to vector<8x32xbf16>
    %cst_76 = arith.constant dense<0.000000e+00> : vector<8x128xf32>
    %364 = tpu.matmul %363, %9, %cst_76 {dimension_numbers = #tpu.dot_dimension_numbers<[1], [0], [0], [1], [0, 0, 1, 1], [], []>} : vector<8x32xbf16>, vector<32x128xbf16>, vector<8x128xf32> -> vector<8x128xf32>
    %365 = arith.addf %362, %364 : vector<8x128xf32>
    %366 = arith.addf %365, %14 : vector<8x128xf32>
    %367 = arith.negf %366 : vector<8x128xf32>
    %368 = math.exp %367 : vector<8x128xf32>
    %cst_77 = arith.constant 1.000000e+00 : f32
    %369 = vector.broadcast %cst_77 : f32 to vector<8x128xf32>
    %370 = arith.addf %369, %368 : vector<8x128xf32>
    %371 = arith.divf %369, %370 : vector<8x128xf32>
    %372 = math.tanh %366 : vector<8x128xf32>
    %373 = vector.extract_strided_slice %371 {offsets = [0, 0], sizes = [8, 32], strides = [1, 1]} : vector<8x128xf32> to vector<8x32xf32>
    %374 = vector.extract_strided_slice %371 {offsets = [0, 32], sizes = [8, 32], strides = [1, 1]} : vector<8x128xf32> to vector<8x32xf32>
    %375 = vector.extract_strided_slice %372 {offsets = [0, 64], sizes = [8, 32], strides = [1, 1]} : vector<8x128xf32> to vector<8x32xf32>
    %376 = vector.extract_strided_slice %371 {offsets = [0, 96], sizes = [8, 32], strides = [1, 1]} : vector<8x128xf32> to vector<8x32xf32>
    %377 = arith.mulf %374, %315 : vector<8x32xf32>
    %378 = arith.mulf %373, %375 : vector<8x32xf32>
    %379 = arith.addf %377, %378 : vector<8x32xf32>
    %380 = math.tanh %379 : vector<8x32xf32>
    %381 = arith.mulf %376, %380 : vector<8x32xf32>
    %382 = arith.truncf %381 : vector<8x32xf32> to vector<8x32xbf16>
    %cst_78 = arith.constant dense<0.000000e+00> : vector<8x128xf32>
    %383 = tpu.matmul %382, %10, %cst_78 {dimension_numbers = #tpu.dot_dimension_numbers<[1], [0], [0], [1], [0, 0, 1, 1], [], []>} : vector<8x32xbf16>, vector<32x128xbf16>, vector<8x128xf32> -> vector<8x128xf32>
    %384 = arith.truncf %338 : vector<8x32xf32> to vector<8x32xbf16>
    %cst_79 = arith.constant dense<0.000000e+00> : vector<8x128xf32>
    %385 = tpu.matmul %384, %11, %cst_79 {dimension_numbers = #tpu.dot_dimension_numbers<[1], [0], [0], [1], [0, 0, 1, 1], [], []>} : vector<8x32xbf16>, vector<32x128xbf16>, vector<8x128xf32> -> vector<8x128xf32>
    %386 = arith.addf %383, %385 : vector<8x128xf32>
    %387 = arith.addf %386, %17 : vector<8x128xf32>
    %388 = arith.negf %387 : vector<8x128xf32>
    %389 = math.exp %388 : vector<8x128xf32>
    %cst_80 = arith.constant 1.000000e+00 : f32
    %390 = vector.broadcast %cst_80 : f32 to vector<8x128xf32>
    %391 = arith.addf %390, %389 : vector<8x128xf32>
    %392 = arith.divf %390, %391 : vector<8x128xf32>
    %393 = math.tanh %387 : vector<8x128xf32>
    %394 = vector.extract_strided_slice %392 {offsets = [0, 0], sizes = [8, 32], strides = [1, 1]} : vector<8x128xf32> to vector<8x32xf32>
    %395 = vector.extract_strided_slice %392 {offsets = [0, 32], sizes = [8, 32], strides = [1, 1]} : vector<8x128xf32> to vector<8x32xf32>
    %396 = vector.extract_strided_slice %393 {offsets = [0, 64], sizes = [8, 32], strides = [1, 1]} : vector<8x128xf32> to vector<8x32xf32>
    %397 = vector.extract_strided_slice %392 {offsets = [0, 96], sizes = [8, 32], strides = [1, 1]} : vector<8x128xf32> to vector<8x32xf32>
    %398 = arith.mulf %395, %336 : vector<8x32xf32>
    %399 = arith.mulf %394, %396 : vector<8x32xf32>
    %400 = arith.addf %398, %399 : vector<8x32xf32>
    %401 = math.tanh %400 : vector<8x32xf32>
    %402 = arith.mulf %397, %401 : vector<8x32xf32>
    %c6_i32 = arith.constant 6 : i32
    %c8_i32_81 = arith.constant 8 : i32
    %403 = arith.muli %c6_i32, %c8_i32_81 : i32
    %404 = tpu.assume_multiple %403, 8 : i32
    %405 = arith.index_cast %404 : i32 to index
    %c0_82 = arith.constant 0 : index
    %406 = vector.load %arg15[%405, %c0_82] : memref<64x128xf32, #tpu.memory_space<vmem>>, vector<8x128xf32>
    %407 = arith.truncf %360 : vector<8x32xf32> to vector<8x32xbf16>
    %cst_83 = arith.constant dense<0.000000e+00> : vector<8x128xf32>
    %408 = tpu.matmul %407, %7, %cst_83 {dimension_numbers = #tpu.dot_dimension_numbers<[1], [0], [0], [1], [0, 0, 1, 1], [], []>} : vector<8x32xbf16>, vector<32x128xbf16>, vector<8x128xf32> -> vector<8x128xf32>
    %409 = arith.addf %406, %408 : vector<8x128xf32>
    %410 = arith.negf %409 : vector<8x128xf32>
    %411 = math.exp %410 : vector<8x128xf32>
    %cst_84 = arith.constant 1.000000e+00 : f32
    %412 = vector.broadcast %cst_84 : f32 to vector<8x128xf32>
    %413 = arith.addf %412, %411 : vector<8x128xf32>
    %414 = arith.divf %412, %413 : vector<8x128xf32>
    %415 = math.tanh %409 : vector<8x128xf32>
    %416 = vector.extract_strided_slice %414 {offsets = [0, 0], sizes = [8, 32], strides = [1, 1]} : vector<8x128xf32> to vector<8x32xf32>
    %417 = vector.extract_strided_slice %414 {offsets = [0, 32], sizes = [8, 32], strides = [1, 1]} : vector<8x128xf32> to vector<8x32xf32>
    %418 = vector.extract_strided_slice %415 {offsets = [0, 64], sizes = [8, 32], strides = [1, 1]} : vector<8x128xf32> to vector<8x32xf32>
    %419 = vector.extract_strided_slice %414 {offsets = [0, 96], sizes = [8, 32], strides = [1, 1]} : vector<8x128xf32> to vector<8x32xf32>
    %420 = arith.mulf %417, %358 : vector<8x32xf32>
    %421 = arith.mulf %416, %418 : vector<8x32xf32>
    %422 = arith.addf %420, %421 : vector<8x32xf32>
    %423 = math.tanh %422 : vector<8x32xf32>
    %424 = arith.mulf %419, %423 : vector<8x32xf32>
    %425 = arith.truncf %424 : vector<8x32xf32> to vector<8x32xbf16>
    %cst_85 = arith.constant dense<0.000000e+00> : vector<8x128xf32>
    %426 = tpu.matmul %425, %8, %cst_85 {dimension_numbers = #tpu.dot_dimension_numbers<[1], [0], [0], [1], [0, 0, 1, 1], [], []>} : vector<8x32xbf16>, vector<32x128xbf16>, vector<8x128xf32> -> vector<8x128xf32>
    %427 = arith.truncf %381 : vector<8x32xf32> to vector<8x32xbf16>
    %cst_86 = arith.constant dense<0.000000e+00> : vector<8x128xf32>
    %428 = tpu.matmul %427, %9, %cst_86 {dimension_numbers = #tpu.dot_dimension_numbers<[1], [0], [0], [1], [0, 0, 1, 1], [], []>} : vector<8x32xbf16>, vector<32x128xbf16>, vector<8x128xf32> -> vector<8x128xf32>
    %429 = arith.addf %426, %428 : vector<8x128xf32>
    %430 = arith.addf %429, %14 : vector<8x128xf32>
    %431 = arith.negf %430 : vector<8x128xf32>
    %432 = math.exp %431 : vector<8x128xf32>
    %cst_87 = arith.constant 1.000000e+00 : f32
    %433 = vector.broadcast %cst_87 : f32 to vector<8x128xf32>
    %434 = arith.addf %433, %432 : vector<8x128xf32>
    %435 = arith.divf %433, %434 : vector<8x128xf32>
    %436 = math.tanh %430 : vector<8x128xf32>
    %437 = vector.extract_strided_slice %435 {offsets = [0, 0], sizes = [8, 32], strides = [1, 1]} : vector<8x128xf32> to vector<8x32xf32>
    %438 = vector.extract_strided_slice %435 {offsets = [0, 32], sizes = [8, 32], strides = [1, 1]} : vector<8x128xf32> to vector<8x32xf32>
    %439 = vector.extract_strided_slice %436 {offsets = [0, 64], sizes = [8, 32], strides = [1, 1]} : vector<8x128xf32> to vector<8x32xf32>
    %440 = vector.extract_strided_slice %435 {offsets = [0, 96], sizes = [8, 32], strides = [1, 1]} : vector<8x128xf32> to vector<8x32xf32>
    %441 = arith.mulf %438, %379 : vector<8x32xf32>
    %442 = arith.mulf %437, %439 : vector<8x32xf32>
    %443 = arith.addf %441, %442 : vector<8x32xf32>
    %444 = math.tanh %443 : vector<8x32xf32>
    %445 = arith.mulf %440, %444 : vector<8x32xf32>
    %446 = arith.truncf %445 : vector<8x32xf32> to vector<8x32xbf16>
    %cst_88 = arith.constant dense<0.000000e+00> : vector<8x128xf32>
    %447 = tpu.matmul %446, %10, %cst_88 {dimension_numbers = #tpu.dot_dimension_numbers<[1], [0], [0], [1], [0, 0, 1, 1], [], []>} : vector<8x32xbf16>, vector<32x128xbf16>, vector<8x128xf32> -> vector<8x128xf32>
    %448 = arith.truncf %402 : vector<8x32xf32> to vector<8x32xbf16>
    %cst_89 = arith.constant dense<0.000000e+00> : vector<8x128xf32>
    %449 = tpu.matmul %448, %11, %cst_89 {dimension_numbers = #tpu.dot_dimension_numbers<[1], [0], [0], [1], [0, 0, 1, 1], [], []>} : vector<8x32xbf16>, vector<32x128xbf16>, vector<8x128xf32> -> vector<8x128xf32>
    %450 = arith.addf %447, %449 : vector<8x128xf32>
    %451 = arith.addf %450, %17 : vector<8x128xf32>
    %452 = arith.negf %451 : vector<8x128xf32>
    %453 = math.exp %452 : vector<8x128xf32>
    %cst_90 = arith.constant 1.000000e+00 : f32
    %454 = vector.broadcast %cst_90 : f32 to vector<8x128xf32>
    %455 = arith.addf %454, %453 : vector<8x128xf32>
    %456 = arith.divf %454, %455 : vector<8x128xf32>
    %457 = math.tanh %451 : vector<8x128xf32>
    %458 = vector.extract_strided_slice %456 {offsets = [0, 0], sizes = [8, 32], strides = [1, 1]} : vector<8x128xf32> to vector<8x32xf32>
    %459 = vector.extract_strided_slice %456 {offsets = [0, 32], sizes = [8, 32], strides = [1, 1]} : vector<8x128xf32> to vector<8x32xf32>
    %460 = vector.extract_strided_slice %457 {offsets = [0, 64], sizes = [8, 32], strides = [1, 1]} : vector<8x128xf32> to vector<8x32xf32>
    %461 = vector.extract_strided_slice %456 {offsets = [0, 96], sizes = [8, 32], strides = [1, 1]} : vector<8x128xf32> to vector<8x32xf32>
    %462 = arith.mulf %459, %400 : vector<8x32xf32>
    %463 = arith.mulf %458, %460 : vector<8x32xf32>
    %464 = arith.addf %462, %463 : vector<8x32xf32>
    %465 = math.tanh %464 : vector<8x32xf32>
    %466 = arith.mulf %461, %465 : vector<8x32xf32>
    %c7_i32 = arith.constant 7 : i32
    %c8_i32_91 = arith.constant 8 : i32
    %467 = arith.muli %c7_i32, %c8_i32_91 : i32
    %468 = tpu.assume_multiple %467, 8 : i32
    %469 = arith.index_cast %468 : i32 to index
    %c0_92 = arith.constant 0 : index
    %470 = vector.load %arg15[%469, %c0_92] : memref<64x128xf32, #tpu.memory_space<vmem>>, vector<8x128xf32>
    %471 = arith.truncf %424 : vector<8x32xf32> to vector<8x32xbf16>
    %cst_93 = arith.constant dense<0.000000e+00> : vector<8x128xf32>
    %472 = tpu.matmul %471, %7, %cst_93 {dimension_numbers = #tpu.dot_dimension_numbers<[1], [0], [0], [1], [0, 0, 1, 1], [], []>} : vector<8x32xbf16>, vector<32x128xbf16>, vector<8x128xf32> -> vector<8x128xf32>
    %473 = arith.addf %470, %472 : vector<8x128xf32>
    %474 = arith.negf %473 : vector<8x128xf32>
    %475 = math.exp %474 : vector<8x128xf32>
    %cst_94 = arith.constant 1.000000e+00 : f32
    %476 = vector.broadcast %cst_94 : f32 to vector<8x128xf32>
    %477 = arith.addf %476, %475 : vector<8x128xf32>
    %478 = arith.divf %476, %477 : vector<8x128xf32>
    %479 = math.tanh %473 : vector<8x128xf32>
    %480 = vector.extract_strided_slice %478 {offsets = [0, 0], sizes = [8, 32], strides = [1, 1]} : vector<8x128xf32> to vector<8x32xf32>
    %481 = vector.extract_strided_slice %478 {offsets = [0, 32], sizes = [8, 32], strides = [1, 1]} : vector<8x128xf32> to vector<8x32xf32>
    %482 = vector.extract_strided_slice %479 {offsets = [0, 64], sizes = [8, 32], strides = [1, 1]} : vector<8x128xf32> to vector<8x32xf32>
    %483 = vector.extract_strided_slice %478 {offsets = [0, 96], sizes = [8, 32], strides = [1, 1]} : vector<8x128xf32> to vector<8x32xf32>
    %484 = arith.mulf %481, %422 : vector<8x32xf32>
    %485 = arith.mulf %480, %482 : vector<8x32xf32>
    %486 = arith.addf %484, %485 : vector<8x32xf32>
    %487 = math.tanh %486 : vector<8x32xf32>
    %488 = arith.mulf %483, %487 : vector<8x32xf32>
    %489 = arith.truncf %488 : vector<8x32xf32> to vector<8x32xbf16>
    %cst_95 = arith.constant dense<0.000000e+00> : vector<8x128xf32>
    %490 = tpu.matmul %489, %8, %cst_95 {dimension_numbers = #tpu.dot_dimension_numbers<[1], [0], [0], [1], [0, 0, 1, 1], [], []>} : vector<8x32xbf16>, vector<32x128xbf16>, vector<8x128xf32> -> vector<8x128xf32>
    %491 = arith.truncf %445 : vector<8x32xf32> to vector<8x32xbf16>
    %cst_96 = arith.constant dense<0.000000e+00> : vector<8x128xf32>
    %492 = tpu.matmul %491, %9, %cst_96 {dimension_numbers = #tpu.dot_dimension_numbers<[1], [0], [0], [1], [0, 0, 1, 1], [], []>} : vector<8x32xbf16>, vector<32x128xbf16>, vector<8x128xf32> -> vector<8x128xf32>
    %493 = arith.addf %490, %492 : vector<8x128xf32>
    %494 = arith.addf %493, %14 : vector<8x128xf32>
    %495 = arith.negf %494 : vector<8x128xf32>
    %496 = math.exp %495 : vector<8x128xf32>
    %cst_97 = arith.constant 1.000000e+00 : f32
    %497 = vector.broadcast %cst_97 : f32 to vector<8x128xf32>
    %498 = arith.addf %497, %496 : vector<8x128xf32>
    %499 = arith.divf %497, %498 : vector<8x128xf32>
    %500 = math.tanh %494 : vector<8x128xf32>
    %501 = vector.extract_strided_slice %499 {offsets = [0, 0], sizes = [8, 32], strides = [1, 1]} : vector<8x128xf32> to vector<8x32xf32>
    %502 = vector.extract_strided_slice %499 {offsets = [0, 32], sizes = [8, 32], strides = [1, 1]} : vector<8x128xf32> to vector<8x32xf32>
    %503 = vector.extract_strided_slice %500 {offsets = [0, 64], sizes = [8, 32], strides = [1, 1]} : vector<8x128xf32> to vector<8x32xf32>
    %504 = vector.extract_strided_slice %499 {offsets = [0, 96], sizes = [8, 32], strides = [1, 1]} : vector<8x128xf32> to vector<8x32xf32>
    %505 = arith.mulf %502, %443 : vector<8x32xf32>
    %506 = arith.mulf %501, %503 : vector<8x32xf32>
    %507 = arith.addf %505, %506 : vector<8x32xf32>
    %508 = math.tanh %507 : vector<8x32xf32>
    %509 = arith.mulf %504, %508 : vector<8x32xf32>
    %510 = arith.truncf %509 : vector<8x32xf32> to vector<8x32xbf16>
    %cst_98 = arith.constant dense<0.000000e+00> : vector<8x128xf32>
    %511 = tpu.matmul %510, %10, %cst_98 {dimension_numbers = #tpu.dot_dimension_numbers<[1], [0], [0], [1], [0, 0, 1, 1], [], []>} : vector<8x32xbf16>, vector<32x128xbf16>, vector<8x128xf32> -> vector<8x128xf32>
    %512 = arith.truncf %466 : vector<8x32xf32> to vector<8x32xbf16>
    %cst_99 = arith.constant dense<0.000000e+00> : vector<8x128xf32>
    %513 = tpu.matmul %512, %11, %cst_99 {dimension_numbers = #tpu.dot_dimension_numbers<[1], [0], [0], [1], [0, 0, 1, 1], [], []>} : vector<8x32xbf16>, vector<32x128xbf16>, vector<8x128xf32> -> vector<8x128xf32>
    %514 = arith.addf %511, %513 : vector<8x128xf32>
    %515 = arith.addf %514, %17 : vector<8x128xf32>
    %516 = arith.negf %515 : vector<8x128xf32>
    %517 = math.exp %516 : vector<8x128xf32>
    %cst_100 = arith.constant 1.000000e+00 : f32
    %518 = vector.broadcast %cst_100 : f32 to vector<8x128xf32>
    %519 = arith.addf %518, %517 : vector<8x128xf32>
    %520 = arith.divf %518, %519 : vector<8x128xf32>
    %521 = math.tanh %515 : vector<8x128xf32>
    %522 = vector.extract_strided_slice %520 {offsets = [0, 0], sizes = [8, 32], strides = [1, 1]} : vector<8x128xf32> to vector<8x32xf32>
    %523 = vector.extract_strided_slice %520 {offsets = [0, 32], sizes = [8, 32], strides = [1, 1]} : vector<8x128xf32> to vector<8x32xf32>
    %524 = vector.extract_strided_slice %521 {offsets = [0, 64], sizes = [8, 32], strides = [1, 1]} : vector<8x128xf32> to vector<8x32xf32>
    %525 = vector.extract_strided_slice %520 {offsets = [0, 96], sizes = [8, 32], strides = [1, 1]} : vector<8x128xf32> to vector<8x32xf32>
    %526 = arith.mulf %523, %464 : vector<8x32xf32>
    %527 = arith.mulf %522, %524 : vector<8x32xf32>
    %528 = arith.addf %526, %527 : vector<8x32xf32>
    %529 = math.tanh %528 : vector<8x32xf32>
    %530 = arith.mulf %525, %529 : vector<8x32xf32>
    %c8_i32_101 = arith.constant 8 : i32
    %531 = arith.truncf %530 : vector<8x32xf32> to vector<8x32xbf16>
    %c0_102 = arith.constant 0 : index
    %c0_103 = arith.constant 0 : index
    %532 = vector.load %arg10[%c0_102, %c0_103] : memref<32x128xbf16, #tpu.memory_space<vmem>>, vector<32x128xbf16>
    %cst_104 = arith.constant dense<0.000000e+00> : vector<8x128xf32>
    %533 = tpu.matmul %531, %532, %cst_104 {dimension_numbers = #tpu.dot_dimension_numbers<[1], [0], [0], [1], [0, 0, 1, 1], [], []>} : vector<8x32xbf16>, vector<32x128xbf16>, vector<8x128xf32> -> vector<8x128xf32>
    %c0_105 = arith.constant 0 : index
    %c0_106 = arith.constant 0 : index
    %534 = vector.load %arg11[%c0_105, %c0_106] : memref<1x128xf32, #tpu.memory_space<vmem>>, vector<1x128xf32>
    %535 = vector.broadcast %534 : vector<1x128xf32> to vector<8x128xf32>
    %536 = arith.addf %533, %535 : vector<8x128xf32>
    %cst_107 = arith.constant 0.000000e+00 : f32
    %537 = vector.broadcast %cst_107 : f32 to vector<8x128xf32>
    %538 = arith.maximumf %536, %537 : vector<8x128xf32>
    %539 = arith.truncf %538 : vector<8x128xf32> to vector<8x128xbf16>
    %c0_108 = arith.constant 0 : index
    %c0_109 = arith.constant 0 : index
    %540 = vector.load %arg12[%c0_108, %c0_109] : memref<128x128xbf16, #tpu.memory_space<vmem>>, vector<128x128xbf16>
    %cst_110 = arith.constant dense<0.000000e+00> : vector<8x128xf32>
    %541 = tpu.matmul %539, %540, %cst_110 {dimension_numbers = #tpu.dot_dimension_numbers<[1], [0], [0], [1], [0, 0, 1, 1], [], []>} : vector<8x128xbf16>, vector<128x128xbf16>, vector<8x128xf32> -> vector<8x128xf32>
    %c0_111 = arith.constant 0 : index
    %c0_112 = arith.constant 0 : index
    %542 = vector.load %arg13[%c0_111, %c0_112] : memref<1x128xf32, #tpu.memory_space<vmem>>, vector<1x128xf32>
    %543 = vector.broadcast %542 : vector<1x128xf32> to vector<8x128xf32>
    %544 = arith.addf %541, %543 : vector<8x128xf32>
    %c0_113 = arith.constant 0 : index
    %c0_114 = arith.constant 0 : index
    %545 = vector.load %arg14[%c0_113, %c0_114] : memref<8x128xf32, #tpu.memory_space<vmem>>, vector<8x128xf32>
    tpu.vector_store %arg14[%c0_113, %c0_114], %544 {strides = array<i32>} : memref<8x128xf32, #tpu.memory_space<vmem>>, vector<8x128xf32>,
    return
  }
}

</mosaic_0001>

<llo_original>
// kernel: dueling_dqn_forward.1
$region0: #{dueling_dqn_forward.1}
  #allocation0 [shape = 'u32[]', space=smem, size = 0x4, offset = 0x4, fixed_abs, tag = 'smem constant byte address 0x4 - core index']
  #allocation1 [shape = 'u32[144,128]{1,0:T(1,128)}', space=vmem, size = 0x12000, scoped, tag = 'internal scratch']
  #allocation2 [shape = 'f32[64,128]{1,0:T(8,128)}', space=vmem, size = 0x8000, scoped, tag = 'scratch operand']
  %s0 = inlined_call_operand.vmem [shape: bf16[64,128], index: 0, kind: input, shape index: {}]
  %s1 = inlined_call_operand.vmem [shape: bf16[128,128], index: 1, kind: input, shape index: {}]
  %s2 = inlined_call_operand.hbm [shape: bf16[32,128], index: 2, kind: input, shape index: {}]
  %s3 = inlined_call_operand.hbm [shape: f32[1,128], index: 3, kind: input, shape index: {}]
  %s4 = inlined_call_operand.hbm [shape: bf16[32,128], index: 4, kind: input, shape index: {}]
  %s5 = inlined_call_operand.hbm [shape: bf16[32,128], index: 5, kind: input, shape index: {}]
  %s6 = inlined_call_operand.hbm [shape: f32[1,128], index: 6, kind: input, shape index: {}]
  %s7 = inlined_call_operand.hbm [shape: bf16[32,128], index: 7, kind: input, shape index: {}]
  %s8 = inlined_call_operand.hbm [shape: bf16[32,128], index: 8, kind: input, shape index: {}]
  %s9 = inlined_call_operand.hbm [shape: f32[1,128], index: 9, kind: input, shape index: {}]
  %s10 = inlined_call_operand.vmem [shape: bf16[32,128], index: 10, kind: input, shape index: {}]
  %s11 = inlined_call_operand.hbm [shape: f32[1,128], index: 11, kind: input, shape index: {}]
  %s12 = inlined_call_operand.vmem [shape: bf16[128,128], index: 12, kind: input, shape index: {}]
  %s13 = inlined_call_operand.hbm [shape: f32[1,128], index: 13, kind: input, shape index: {}]
  %s14 = inlined_call_operand.vmem [shape: f32[8,128], index: 14, kind: output, shape index: {}]
  %s15 = sld [smem:[#allocation0]]
  $region106: #{dueling_dqn_forward.1} parent=0
    _
  %s17 = ssub.s32 1, %s15
  %s18 = scalar_select 0, %s17, %s15
  $region1: #{dueling_dqn_forward.1} parent=0
    #allocation3 [shape = 'u8[8192]{0}', space=vmem, size = 0x2000, scoped, tag = 'input window, operand 2, single buffered']
    #allocation4 [shape = 's32[1]{0}', space=sflag, size = 0x4, scoped, tag = 'scoped memory for dueling_dqn_forward.1']
    #allocation5 [shape = 'u8[512]{0}', space=vmem, size = 0x400, scoped, tag = 'input window, operand 3, single buffered']
    #allocation6 [shape = 's32[1]{0}', space=sflag, size = 0x4, scoped, tag = 'scoped memory for dueling_dqn_forward.1']
    #allocation7 [shape = 'u8[8192]{0}', space=vmem, size = 0x2000, scoped, tag = 'input window, operand 4, single buffered']
    #allocation8 [shape = 'u8[8192]{0}', space=vmem, size = 0x2000, scoped, tag = 'input window, operand 5, single buffered']
    #allocation9 [shape = 's32[1]{0}', space=sflag, size = 0x4, scoped, tag = 'scoped memory for dueling_dqn_forward.1']
    #allocation10 [shape = 'u8[512]{0}', space=vmem, size = 0x400, scoped, tag = 'input window, operand 6, single buffered']
    #allocation11 [shape = 'u8[8192]{0}', space=vmem, size = 0x2000, scoped, tag = 'input window, operand 7, single buffered']
    #allocation12 [shape = 's32[1]{0}', space=sflag, size = 0x4, scoped, tag = 'scoped memory for dueling_dqn_forward.1']
    #allocation13 [shape = 'u8[8192]{0}', space=vmem, size = 0x2000, scoped, tag = 'input window, operand 8, single buffered']
    #allocation14 [shape = 'u8[512]{0}', space=vmem, size = 0x400, scoped, tag = 'input window, operand 9, single buffered']
    #allocation15 [shape = 's32[1]{0}', space=sflag, size = 0x4, scoped, tag = 'scoped memory for dueling_dqn_forward.1']
    #allocation16 [shape = 'u8[512]{0}', space=vmem, size = 0x400, scoped, tag = 'input window, operand 11, single buffered']
    #allocation17 [shape = 'u8[512]{0}', space=vmem, size = 0x400, scoped, tag = 'input window, operand 13, single buffered']
    #allocation18 [shape = 's32[1]{0}', space=sflag, size = 0x4, scoped, tag = 'scoped memory for dueling_dqn_forward.1']
    %19 = vsyncpa [#allocation4], 0
    %20 = vsyncpa [#allocation6], 0
    %21 = vsyncpa [#allocation9], 0
    %22 = vsyncpa [#allocation12], 0
    %23 = vsyncpa [#allocation15], 0
    %24 = vsyncpa [#allocation18], 0
    // Predicated region
    $region2: #{dueling_dqn_forward.1} parent=1 // pred_check
      _
    $region3: #{dueling_dqn_forward.1} parent=1 // pred_check_branch
      %26 = sbr.rel (0) target = $region5
    $region4: #{dueling_dqn_forward.1} parent=1 // pred_region
      _
    $region5: #{dueling_dqn_forward.1} parent=1 // pred_fallthru
      _
    // Predicated region
    $region6: #{dueling_dqn_forward.1} parent=1 // pred_check
      _
    $region7: #{dueling_dqn_forward.1} parent=1 // pred_check_branch
      %28 = sbr.rel (0) target = $region9
    $region8: #{dueling_dqn_forward.1} parent=1 // pred_region
      _
    $region9: #{dueling_dqn_forward.1} parent=1 // pred_fallthru
      _
    // Predicated region
    $region10: #{dueling_dqn_forward.1} parent=1 // pred_check
      _
    $region11: #{dueling_dqn_forward.1} parent=1 // pred_check_branch
      %30 = sbr.rel (0) target = $region13
    $region12: #{dueling_dqn_forward.1} parent=1 // pred_region
      %s32 = ssub.s32 256, 256
      %33 = vsyncadd [#allocation4], %s32
      %s34 = sshll.u32 [#allocation3], 4
      %s35 = int_to_ptr.vmem [resolvable:$true] %s34
      %40 = dma.hbm_to_vmem [thread:$0]  %s2, 256, %s35, [#allocation4], 64, 64, 4
    $region13: #{dueling_dqn_forward.1} parent=1 // pred_fallthru
      _
    // Predicated region
    $region14: #{dueling_dqn_forward.1} parent=1 // pred_check
      _
    $region15: #{dueling_dqn_forward.1} parent=1 // pred_check_branch
      %42 = sbr.rel (0) target = $region17
    $region16: #{dueling_dqn_forward.1} parent=1 // pred_region
      %s44 = ssub.s32 16, 16
      %45 = vsyncadd [#allocation6], %s44
      %s47 = sshll.u32 [#allocation5], 4
      %s48 = int_to_ptr.vmem [resolvable:$true] %s47
      %50 = dma.hbm_to_vmem [thread:$0]  %s3, 16, %s48, [#allocation6]
    $region17: #{dueling_dqn_forward.1} parent=1 // pred_fallthru
      _
    // Predicated region
    $region18: #{dueling_dqn_forward.1} parent=1 // pred_check
      _
    $region19: #{dueling_dqn_forward.1} parent=1 // pred_check_branch
      %52 = sbr.rel (0) target = $region21
    $region20: #{dueling_dqn_forward.1} parent=1 // pred_region
      %s54 = ssub.s32 256, 256
      %55 = vsyncadd [#allocation6], %s54
      %s56 = sshll.u32 [#allocation7], 4
      %s57 = int_to_ptr.vmem [resolvable:$true] %s56
      %62 = dma.hbm_to_vmem [thread:$0]  %s4, 256, %s57, [#allocation6], 64, 64, 4
    $region21: #{dueling_dqn_forward.1} parent=1 // pred_fallthru
      _
    // Predicated region
    $region22: #{dueling_dqn_forward.1} parent=1 // pred_check
      _
    $region23: #{dueling_dqn_forward.1} parent=1 // pred_check_branch
      %64 = sbr.rel (0) target = $region25
    $region24: #{dueling_dqn_forward.1} parent=1 // pred_region
      %s66 = ssub.s32 256, 256
      %67 = vsyncadd [#allocation9], %s66
      %s68 = sshll.u32 [#allocation8], 4
      %s69 = int_to_ptr.vmem [resolvable:$true] %s68
      %74 = dma.hbm_to_vmem [thread:$0]  %s5, 256, %s69, [#allocation9], 64, 64, 4
    $region25: #{dueling_dqn_forward.1} parent=1 // pred_fallthru
      _
    // Predicated region
    $region26: #{dueling_dqn_forward.1} parent=1 // pred_check
      _
    $region27: #{dueling_dqn_forward.1} parent=1 // pred_check_branch
      %76 = sbr.rel (0) target = $region29
    $region28: #{dueling_dqn_forward.1} parent=1 // pred_region
      %s78 = ssub.s32 16, 16
      %79 = vsyncadd [#allocation9], %s78
      %s81 = sshll.u32 [#allocation10], 4
      %s82 = int_to_ptr.vmem [resolvable:$true] %s81
      %84 = dma.hbm_to_vmem [thread:$0]  %s6, 16, %s82, [#allocation9]
    $region29: #{dueling_dqn_forward.1} parent=1 // pred_fallthru
      _
    // Predicated region
    $region30: #{dueling_dqn_forward.1} parent=1 // pred_check
      _
    $region31: #{dueling_dqn_forward.1} parent=1 // pred_check_branch
      %86 = sbr.rel (0) target = $region33
    $region32: #{dueling_dqn_forward.1} parent=1 // pred_region
      %s88 = ssub.s32 256, 256
      %89 = vsyncadd [#allocation12], %s88
      %s90 = sshll.u32 [#allocation11], 4
      %s91 = int_to_ptr.vmem [resolvable:$true] %s90
      %96 = dma.hbm_to_vmem [thread:$0]  %s7, 256, %s91, [#allocation12], 64, 64, 4
    $region33: #{dueling_dqn_forward.1} parent=1 // pred_fallthru
      _
    // Predicated region
    $region34: #{dueling_dqn_forward.1} parent=1 // pred_check
      _
    $region35: #{dueling_dqn_forward.1} parent=1 // pred_check_branch
      %98 = sbr.rel (0) target = $region37
    $region36: #{dueling_dqn_forward.1} parent=1 // pred_region
      %s100 = ssub.s32 256, 256
      %101 = vsyncadd [#allocation12], %s100
      %s102 = sshll.u32 [#allocation13], 4
      %s103 = int_to_ptr.vmem [resolvable:$true] %s102
      %108 = dma.hbm_to_vmem [thread:$0]  %s8, 256, %s103, [#allocation12], 64, 64, 4
    $region37: #{dueling_dqn_forward.1} parent=1 // pred_fallthru
      _
    // Predicated region
    $region38: #{dueling_dqn_forward.1} parent=1 // pred_check
      _
    $region39: #{dueling_dqn_forward.1} parent=1 // pred_check_branch
      %110 = sbr.rel (0) target = $region41
    $region40: #{dueling_dqn_forward.1} parent=1 // pred_region
      %s112 = ssub.s32 16, 16
      %113 = vsyncadd [#allocation15], %s112
      %s115 = sshll.u32 [#allocation14], 4
      %s116 = int_to_ptr.vmem [resolvable:$true] %s115
      %118 = dma.hbm_to_vmem [thread:$0]  %s9, 16, %s116, [#allocation15]
    $region41: #{dueling_dqn_forward.1} parent=1 // pred_fallthru
      _
    // Predicated region
    $region42: #{dueling_dqn_forward.1} parent=1 // pred_check
      _
    $region43: #{dueling_dqn_forward.1} parent=1 // pred_check_branch
      %120 = sbr.rel (0) target = $region45
    $region44: #{dueling_dqn_forward.1} parent=1 // pred_region
      _
    $region45: #{dueling_dqn_forward.1} parent=1 // pred_fallthru
      _
    // Predicated region
    $region46: #{dueling_dqn_forward.1} parent=1 // pred_check
      _
    $region47: #{dueling_dqn_forward.1} parent=1 // pred_check_branch
      %122 = sbr.rel (0) target = $region49
    $region48: #{dueling_dqn_forward.1} parent=1 // pred_region
      %s124 = ssub.s32 16, 16
      %125 = vsyncadd [#allocation15], %s124
      %s127 = sshll.u32 [#allocation16], 4
      %s128 = int_to_ptr.vmem [resolvable:$true] %s127
      %130 = dma.hbm_to_vmem [thread:$0]  %s11, 16, %s128, [#allocation15]
    $region49: #{dueling_dqn_forward.1} parent=1 // pred_fallthru
      _
    // Predicated region
    $region50: #{dueling_dqn_forward.1} parent=1 // pred_check
      _
    $region51: #{dueling_dqn_forward.1} parent=1 // pred_check_branch
      %132 = sbr.rel (0) target = $region53
    $region52: #{dueling_dqn_forward.1} parent=1 // pred_region
      _
    $region53: #{dueling_dqn_forward.1} parent=1 // pred_fallthru
      _
    // Predicated region
    $region54: #{dueling_dqn_forward.1} parent=1 // pred_check
      _
    $region55: #{dueling_dqn_forward.1} parent=1 // pred_check_branch
      %134 = sbr.rel (0) target = $region57
    $region56: #{dueling_dqn_forward.1} parent=1 // pred_region
      %s136 = ssub.s32 16, 16
      %137 = vsyncadd [#allocation18], %s136
      %s139 = sshll.u32 [#allocation17], 4
      %s140 = int_to_ptr.vmem [resolvable:$true] %s139
      %142 = dma.hbm_to_vmem [thread:$0]  %s13, 16, %s140, [#allocation18]
    $region57: #{dueling_dqn_forward.1} parent=1 // pred_fallthru
      _
    // Predicated region
    $region58: #{dueling_dqn_forward.1} parent=1 // pred_check
      _
    $region59: #{dueling_dqn_forward.1} parent=1 // pred_check_branch
      %144 = sbr.rel (0) target = $region61
    $region60: #{dueling_dqn_forward.1} parent=1 // pred_region
      %145 = dma.done [#allocation4], 256
    $region61: #{dueling_dqn_forward.1} parent=1 // pred_fallthru
      _
    // Predicated region
    $region62: #{dueling_dqn_forward.1} parent=1 // pred_check
      _
    $region63: #{dueling_dqn_forward.1} parent=1 // pred_check_branch
      %147 = sbr.rel (0) target = $region65
    $region64: #{dueling_dqn_forward.1} parent=1 // pred_region
      %148 = dma.done [#allocation6], 16
    $region65: #{dueling_dqn_forward.1} parent=1 // pred_fallthru
      _
    // Predicated region
    $region66: #{dueling_dqn_forward.1} parent=1 // pred_check
      _
    $region67: #{dueling_dqn_forward.1} parent=1 // pred_check_branch
      %150 = sbr.rel (0) target = $region69
    $region68: #{dueling_dqn_forward.1} parent=1 // pred_region
      %151 = dma.done [#allocation6], 256
    $region69: #{dueling_dqn_forward.1} parent=1 // pred_fallthru
      _
    // Predicated region
    $region70: #{dueling_dqn_forward.1} parent=1 // pred_check
      _
    $region71: #{dueling_dqn_forward.1} parent=1 // pred_check_branch
      %153 = sbr.rel (0) target = $region73
    $region72: #{dueling_dqn_forward.1} parent=1 // pred_region
      %154 = dma.done [#allocation9], 256
    $region73: #{dueling_dqn_forward.1} parent=1 // pred_fallthru
      _
    // Predicated region
    $region74: #{dueling_dqn_forward.1} parent=1 // pred_check
      _
    $region75: #{dueling_dqn_forward.1} parent=1 // pred_check_branch
      %156 = sbr.rel (0) target = $region77
    $region76: #{dueling_dqn_forward.1} parent=1 // pred_region
      %157 = dma.done [#allocation9], 16
    $region77: #{dueling_dqn_forward.1} parent=1 // pred_fallthru
      _
    // Predicated region
    $region78: #{dueling_dqn_forward.1} parent=1 // pred_check
      _
    $region79: #{dueling_dqn_forward.1} parent=1 // pred_check_branch
      %159 = sbr.rel (0) target = $region81
    $region80: #{dueling_dqn_forward.1} parent=1 // pred_region
      %160 = dma.done [#allocation12], 256
    $region81: #{dueling_dqn_forward.1} parent=1 // pred_fallthru
      _
    // Predicated region
    $region82: #{dueling_dqn_forward.1} parent=1 // pred_check
      _
    $region83: #{dueling_dqn_forward.1} parent=1 // pred_check_branch
      %162 = sbr.rel (0) target = $region85
    $region84: #{dueling_dqn_forward.1} parent=1 // pred_region
      %163 = dma.done [#allocation12], 256
    $region85: #{dueling_dqn_forward.1} parent=1 // pred_fallthru
      _
    // Predicated region
    $region86: #{dueling_dqn_forward.1} parent=1 // pred_check
      _
    $region87: #{dueling_dqn_forward.1} parent=1 // pred_check_branch
      %165 = sbr.rel (0) target = $region89
    $region88: #{dueling_dqn_forward.1} parent=1 // pred_region
      %166 = dma.done [#allocation15], 16
    $region89: #{dueling_dqn_forward.1} parent=1 // pred_fallthru
      _
    // Predicated region
    $region90: #{dueling_dqn_forward.1} parent=1 // pred_check
      _
    $region91: #{dueling_dqn_forward.1} parent=1 // pred_check_branch
      %168 = sbr.rel (0) target = $region93
    $region92: #{dueling_dqn_forward.1} parent=1 // pred_region
      %169 = dma.done [#allocation15], 16
    $region93: #{dueling_dqn_forward.1} parent=1 // pred_fallthru
      _
    // Predicated region
    $region94: #{dueling_dqn_forward.1} parent=1 // pred_check
      _
    $region95: #{dueling_dqn_forward.1} parent=1 // pred_check_branch
      %171 = sbr.rel (0) target = $region97
    $region96: #{dueling_dqn_forward.1} parent=1 // pred_region
      %172 = dma.done [#allocation18], 16
    $region97: #{dueling_dqn_forward.1} parent=1 // pred_fallthru
      _
    %v174 = vld [vmem:[%s0] sm:$0xf]
    %v175 = vld [vmem:[%s0 + $0x4] sm:$0xf]
    %v176 = vld [vmem:[%s0 + $0x8] sm:$0xf]
    %v177 = vld [vmem:[%s0 + $0xc] sm:$0xf]
    %v178 = vld [vmem:[%s0 + $0x10] sm:$0xf]
    %v179 = vld [vmem:[%s0 + $0x14] sm:$0xf]
    %v180 = vld [vmem:[%s0 + $0x18] sm:$0xf]
    %v181 = vld [vmem:[%s0 + $0x1c] sm:$0xf]
    %v182 = vld [vmem:[%s1] sm:$0xf]
    %v183 = vld [vmem:[%s1 + $0x4] sm:$0xf]
    %v184 = vld [vmem:[%s1 + $0x8] sm:$0xf]
    %v185 = vld [vmem:[%s1 + $0xc] sm:$0xf]
    %v186 = vld [vmem:[%s1 + $0x10] sm:$0xf]
    %v187 = vld [vmem:[%s1 + $0x14] sm:$0xf]
    %v188 = vld [vmem:[%s1 + $0x18] sm:$0xf]
    %v189 = vld [vmem:[%s1 + $0x1c] sm:$0xf]
    %v190 = vld [vmem:[%s1 + $0x20] sm:$0xf]
    %v191 = vld [vmem:[%s1 + $0x24] sm:$0xf]
    %v192 = vld [vmem:[%s1 + $0x28] sm:$0xf]
    %v193 = vld [vmem:[%s1 + $0x2c] sm:$0xf]
    %v194 = vld [vmem:[%s1 + $0x30] sm:$0xf]
    %v195 = vld [vmem:[%s1 + $0x34] sm:$0xf]
    %v196 = vld [vmem:[%s1 + $0x38] sm:$0xf]
    %v197 = vld [vmem:[%s1 + $0x3c] sm:$0xf]
    %v198 = vld [vmem:[#allocation5] sm:$0x1]
    %v200 = vlaneseq
    %v201 = vshrl.u32 %v200, 7
    %v202 = vsub.s32 0, %v201
    %v203 = vrot.slane %v198, %v202
    %v213 = vunpack.c.l.b16 %v174
    %v214 = vunpack.c.l.b16 %v175
    %v215 = vunpack.c.l.b16 %v176
    %v216 = vunpack.c.l.b16 %v177
    %v217 = vunpack.c.l.b16 %v178
    %v218 = vunpack.c.l.b16 %v179
    %v219 = vunpack.c.l.b16 %v180
    %v220 = vunpack.c.l.b16 %v181
    %v221 = vpack.c.b16 %v214, %v213
    %v222 = vpack.c.b16 %v216, %v215
    %v223 = vpack.c.b16 %v218, %v217
    %v224 = vpack.c.b16 %v220, %v219
    %v245 = vunpack.c.l.b16 %v182
    %v246 = vunpack.c.l.b16 %v183
    %v247 = vunpack.c.l.b16 %v184
    %v248 = vunpack.c.l.b16 %v185
    %v249 = vunpack.c.l.b16 %v186
    %v250 = vunpack.c.l.b16 %v187
    %v251 = vunpack.c.l.b16 %v188
    %v252 = vunpack.c.l.b16 %v189
    %v253 = vunpack.c.l.b16 %v190
    %v254 = vunpack.c.l.b16 %v191
    %v255 = vunpack.c.l.b16 %v192
    %v256 = vunpack.c.l.b16 %v193
    %v257 = vunpack.c.l.b16 %v194
    %v258 = vunpack.c.l.b16 %v195
    %v259 = vunpack.c.l.b16 %v196
    %v260 = vunpack.c.l.b16 %v197
    %v261 = vpack.c.b16 %v246, %v245
    %v262 = vpack.c.b16 %v248, %v247
    %v263 = vpack.c.b16 %v250, %v249
    %v264 = vpack.c.b16 %v252, %v251
    %v265 = vpack.c.b16 %v254, %v253
    %v266 = vpack.c.b16 %v256, %v255
    %v267 = vpack.c.b16 %v258, %v257
    %v268 = vpack.c.b16 %v260, %v259
    %277 = vmatprep.subr.bf16.mxu0 0
    %278 = vmatpush1.bf16.msra.mxu0 %v261
    %279 = vmatprep.subr.bf16.mxu0 0
    %280 = vmatpush1.bf16.msra.mxu0 %v262
    %281 = vmatprep.subr.bf16.mxu0 0
    %282 = vmatpush1.bf16.msra.mxu0 %v263
    %283 = vmatprep.subr.bf16.mxu0 0
    %284 = vmatpush1.bf16.msra.mxu0 %v264
    %285 = vmatprep.subr.bf16.mxu0 0
    %286 = vmatpush1.bf16.msra.mxu0 %v265
    %287 = vmatprep.subr.bf16.mxu0 0
    %288 = vmatpush1.bf16.msra.mxu0 %v266
    %289 = vmatprep.subr.bf16.mxu0 0
    %290 = vmatpush1.bf16.msra.mxu0 %v267
    %291 = vmatprep.subr.bf16.mxu0 0
    %292 = vmatpush1.bf16.msra.mxu0 %v268
    %293 = vmatprep.subr.bf16.mxu0 0
    %294 = vmatpush1.bf16.msra.mxu0 0
    %295 = vmatprep.subr.bf16.mxu0 0
    %296 = vmatpush1.bf16.msra.mxu0 0
    %297 = vmatprep.subr.bf16.mxu0 0
    %298 = vmatpush1.bf16.msra.mxu0 0
    %299 = vmatprep.subr.bf16.mxu0 0
    %300 = vmatpush1.bf16.msra.mxu0 0
    %301 = vmatprep.subr.bf16.mxu0 0
    %302 = vmatpush1.bf16.msra.mxu0 0
    %303 = vmatprep.subr.bf16.mxu0 0
    %304 = vmatpush1.bf16.msra.mxu0 0
    %305 = vmatprep.subr.bf16.mxu0 0
    %306 = vmatpush1.bf16.msra.mxu0 0
    %307 = vmatprep.subr.bf16.mxu0 0
    %308 = vmatpush1.bf16.msra.mxu0 0
    %309 = vmatprep.mubr.bf16.mxu0 0
    %310 = vmatmul.mubr.bf16.gmra.mrb[0].mxu0 %v221
    %v311 = vpop.f32.mrb[0].mxu0
    %v312 = vadd.f32 %v203, %v311
    %v313 = vpop.f32.mrb[0].mxu0
    %v314 = vpop.f32.mrb[0].mxu0
    %v315 = vadd.f32 %v203, %v314
    %v316 = vpop.f32.mrb[0].mxu0
    %317 = vmatprep.mubr.bf16.mxu0 0
    %318 = vmatmul.mubr.bf16.gmra.mrb[0].mxu0 %v222
    %v319 = vpop.f32.mrb[0].mxu0
    %v320 = vadd.f32 %v203, %v319
    %v321 = vpop.f32.mrb[0].mxu0
    %v322 = vpop.f32.mrb[0].mxu0
    %v323 = vadd.f32 %v203, %v322
    %v324 = vpop.f32.mrb[0].mxu0
    %325 = vmatprep.mubr.bf16.mxu0 0
    %326 = vmatmul.mubr.bf16.gmra.mrb[0].mxu0 %v223
    %v327 = vpop.f32.mrb[0].mxu0
    %v328 = vadd.f32 %v203, %v327
    %v329 = vpop.f32.mrb[0].mxu0
    %v330 = vpop.f32.mrb[0].mxu0
    %v331 = vadd.f32 %v203, %v330
    %v332 = vpop.f32.mrb[0].mxu0
    %333 = vmatprep.mubr.bf16.mxu0 0
    %334 = vmatmul.mubr.bf16.gmra.mrb[0].mxu0 %v224
    %v335 = vpop.f32.mrb[0].mxu0
    %v336 = vadd.f32 %v203, %v335
    %v337 = vpop.f32.mrb[0].mxu0
    %v338 = vpop.f32.mrb[0].mxu0
    %v339 = vadd.f32 %v203, %v338
    %v340 = vpop.f32.mrb[0].mxu0
    %341 = vdwg.mxu0
    %342 = vst [vmem:[#allocation2] sm:$0xff] %v312
    %343 = vst [vmem:[#allocation2 + $0x8] sm:$0xff] %v315
    %344 = vst [vmem:[#allocation2 + $0x10] sm:$0xff] %v320
    %345 = vst [vmem:[#allocation2 + $0x18] sm:$0xff] %v323
    %346 = vst [vmem:[#allocation2 + $0x20] sm:$0xff] %v328
    %347 = vst [vmem:[#allocation2 + $0x28] sm:$0xff] %v331
    %348 = vst [vmem:[#allocation2 + $0x30] sm:$0xff] %v336
    %349 = vst [vmem:[#allocation2 + $0x38] sm:$0xff] %v339
    %v350 = vld [vmem:[#allocation3] sm:$0xf]
    %v351 = vld [vmem:[#allocation3 + $0x4] sm:$0xf]
    %v352 = vld [vmem:[#allocation3 + $0x8] sm:$0xf]
    %v353 = vld [vmem:[#allocation3 + $0xc] sm:$0xf]
    %v354 = vld [vmem:[#allocation7] sm:$0xf]
    %v355 = vld [vmem:[#allocation7 + $0x4] sm:$0xf]
    %v356 = vld [vmem:[#allocation7 + $0x8] sm:$0xf]
    %v357 = vld [vmem:[#allocation7 + $0xc] sm:$0xf]
    %v358 = vld [vmem:[#allocation8] sm:$0xf]
    %v359 = vld [vmem:[#allocation8 + $0x4] sm:$0xf]
    %v360 = vld [vmem:[#allocation8 + $0x8] sm:$0xf]
    %v361 = vld [vmem:[#allocation8 + $0xc] sm:$0xf]
    %v362 = vld [vmem:[#allocation11] sm:$0xf]
    %v363 = vld [vmem:[#allocation11 + $0x4] sm:$0xf]
    %v364 = vld [vmem:[#allocation11 + $0x8] sm:$0xf]
    %v365 = vld [vmem:[#allocation11 + $0xc] sm:$0xf]
    %v366 = vld [vmem:[#allocation13] sm:$0xf]
    %v367 = vld [vmem:[#allocation13 + $0x4] sm:$0xf]
    %v368 = vld [vmem:[#allocation13 + $0x8] sm:$0xf]
    %v369 = vld [vmem:[#allocation13 + $0xc] sm:$0xf]
    %v370 = vld [vmem:[#allocation10] sm:$0x1]
    %v372 = vlaneseq
    %v373 = vshrl.u32 %v372, 7
    %v374 = vsub.s32 0, %v373
    %v375 = vrot.slane %v370, %v374
    %v377 = vld [vmem:[#allocation14] sm:$0x1]
    %v379 = vlaneseq
    %v380 = vshrl.u32 %v379, 7
    %v381 = vsub.s32 0, %v380
    %v382 = vrot.slane %v377, %v381
    %v384 = vld [vmem:[#allocation2] sm:$0xff]
    %v389 = vunpack.c.l.b16 %v350
    %v390 = vunpack.c.l.b16 %v351
    %v391 = vunpack.c.l.b16 %v352
    %v392 = vunpack.c.l.b16 %v353
    %v393 = vpack.c.b16 %v390, %v389
    %v394 = vpack.c.b16 %v392, %v391
    %vm397 = vcmask 261120
    %v399 = vsel %vm397, 0, 0
    %401 = vmatprep.subr.bf16.mxu0 0
    %402 = vmatpush1.bf16.msra.mxu0 %v393
    %403 = vmatprep.subr.bf16.mxu0 0
    %404 = vmatpush1.bf16.msra.mxu0 %v394
    %405 = vmatprep.subr.bf16.mxu0 0
    %406 = vmatpush1.bf16.msra.mxu0 0
    %407 = vmatprep.subr.bf16.mxu0 0
    %408 = vmatpush1.bf16.msra.mxu0 0
    %409 = vmatprep.subr.bf16.mxu0 0
    %410 = vmatpush1.bf16.msra.mxu0 0
    %411 = vmatprep.subr.bf16.mxu0 0
    %412 = vmatpush1.bf16.msra.mxu0 0
    %413 = vmatprep.subr.bf16.mxu0 0
    %414 = vmatpush1.bf16.msra.mxu0 0
    %415 = vmatprep.subr.bf16.mxu0 0
    %416 = vmatpush1.bf16.msra.mxu0 0
    %417 = vmatprep.subr.bf16.mxu0 0
    %418 = vmatpush1.bf16.msra.mxu0 0
    %419 = vmatprep.subr.bf16.mxu0 0
    %420 = vmatpush1.bf16.msra.mxu0 0
    %421 = vmatprep.subr.bf16.mxu0 0
    %422 = vmatpush1.bf16.msra.mxu0 0
    %423 = vmatprep.subr.bf16.mxu0 0
    %424 = vmatpush1.bf16.msra.mxu0 0
    %425 = vmatprep.subr.bf16.mxu0 0
    %426 = vmatpush1.bf16.msra.mxu0 0
    %427 = vmatprep.subr.bf16.mxu0 0
    %428 = vmatpush1.bf16.msra.mxu0 0
    %429 = vmatprep.subr.bf16.mxu0 0
    %430 = vmatpush1.bf16.msra.mxu0 0
    %431 = vmatprep.subr.bf16.mxu0 0
    %432 = vmatpush1.bf16.msra.mxu0 0
    %433 = vmatprep.mubr.bf16.mxu0 0
    %434 = vmatmul.mubr.bf16.gmra.mrb[0].mxu0 %v399
    %v435 = vpop.f32.mrb[0].mxu0
    %v436 = vadd.f32 0.0, %v435
    %v437 = vpop.f32.mrb[0].mxu0
    %v438 = vpop.f32.mrb[0].mxu0
    %v439 = vpop.f32.mrb[0].mxu0
    %440 = vdwg.mxu0
    %v441 = vadd.f32 %v384, %v436
    %v442 = vxor.u32 %v441, 2147483648
    %v443 = vmul.f32 %v442, 1.442695
    %v444 = vpow.pop %v443
    %v445 = vadd.f32 %v444, 1.0
    %v446 = vrcp.pop %v445
    %v447 = vmul.f32 1.0, %v446
    %v448 = vtanh.pop %v441
    %v449 = vmul.f32 %v447, 0.0
    %451 = vrot.lane.b32.xlu0 %v448, 64
    %v452 = vpop.permute.xlu0 %451
    %v454 = vmul.f32 %v447, %v452
    %456 = vrot.lane.b32.xlu0 %v454, 32
    %v457 = vpop.permute.xlu0 %456
    %v459 = vadd.f32 %v449, %v457
    %v460 = vtanh.pop %v459
    %462 = vrot.lane.b32.xlu0 %v460, 64
    %v463 = vpop.permute.xlu0 %462
    %v465 = vmul.f32 %v447, %v463
    %v466 = vpack.c.bf16 %v465, %v465
    %v471 = vunpack.c.l.b16 %v358
    %v472 = vunpack.c.l.b16 %v359
    %v473 = vunpack.c.l.b16 %v360
    %v474 = vunpack.c.l.b16 %v361
    %v475 = vpack.c.b16 %v472, %v471
    %v476 = vpack.c.b16 %v474, %v473
    %479 = vmatprep.subr.bf16.mxu0 0
    %480 = vmatpush1.bf16.msra.mxu0 %v475
    %481 = vmatprep.subr.bf16.mxu0 0
    %482 = vmatpush1.bf16.msra.mxu0 %v476
    %483 = vmatprep.subr.bf16.mxu0 0
    %484 = vmatpush1.bf16.msra.mxu0 0
    %485 = vmatprep.subr.bf16.mxu0 0
    %486 = vmatpush1.bf16.msra.mxu0 0
    %487 = vmatprep.subr.bf16.mxu0 0
    %488 = vmatpush1.bf16.msra.mxu0 0
    %489 = vmatprep.subr.bf16.mxu0 0
    %490 = vmatpush1.bf16.msra.mxu0 0
    %491 = vmatprep.subr.bf16.mxu0 0
    %492 = vmatpush1.bf16.msra.mxu0 0
    %493 = vmatprep.subr.bf16.mxu0 0
    %494 = vmatpush1.bf16.msra.mxu0 0
    %495 = vmatprep.subr.bf16.mxu0 0
    %496 = vmatpush1.bf16.msra.mxu0 0
    %497 = vmatprep.subr.bf16.mxu0 0
    %498 = vmatpush1.bf16.msra.mxu0 0
    %499 = vmatprep.subr.bf16.mxu0 0
    %500 = vmatpush1.bf16.msra.mxu0 0
    %501 = vmatprep.subr.bf16.mxu0 0
    %502 = vmatpush1.bf16.msra.mxu0 0
    %503 = vmatprep.subr.bf16.mxu0 0
    %504 = vmatpush1.bf16.msra.mxu0 0
    %505 = vmatprep.subr.bf16.mxu0 0
    %506 = vmatpush1.bf16.msra.mxu0 0
    %507 = vmatprep.subr.bf16.mxu0 0
    %508 = vmatpush1.bf16.msra.mxu0 0
    %509 = vmatprep.subr.bf16.mxu0 0
    %510 = vmatpush1.bf16.msra.mxu0 0
    %511 = vmatprep.mubr.bf16.mxu0 0
    %512 = vmatmul.mubr.bf16.gmra.mrb[0].mxu0 %v399
    %v513 = vpop.f32.mrb[0].mxu0
    %v514 = vadd.f32 0.0, %v513
    %v515 = vpop.f32.mrb[0].mxu0
    %v516 = vpop.f32.mrb[0].mxu0
    %v517 = vpop.f32.mrb[0].mxu0
    %518 = vdwg.mxu0
    %520 = vrot.lane.b32.xlu0 %v466, 32
    %v521 = vpop.permute.xlu0 %520
    %v526 = vunpack.c.l.b16 %v354
    %v527 = vunpack.c.l.b16 %v355
    %v528 = vunpack.c.l.b16 %v356
    %v529 = vunpack.c.l.b16 %v357
    %v530 = vpack.c.b16 %v527, %v526
    %v531 = vpack.c.b16 %v529, %v528
    %v535 = vsel %vm397, %v521, 0
    %537 = vmatprep.subr.bf16.mxu0 0
    %538 = vmatpush1.bf16.msra.mxu0 %v530
    %539 = vmatprep.subr.bf16.mxu0 0
    %540 = vmatpush1.bf16.msra.mxu0 %v531
    %541 = vmatprep.subr.bf16.mxu0 0
    %542 = vmatpush1.bf16.msra.mxu0 0
    %543 = vmatprep.subr.bf16.mxu0 0
    %544 = vmatpush1.bf16.msra.mxu0 0
    %545 = vmatprep.subr.bf16.mxu0 0
    %546 = vmatpush1.bf16.msra.mxu0 0
    %547 = vmatprep.subr.bf16.mxu0 0
    %548 = vmatpush1.bf16.msra.mxu0 0
    %549 = vmatprep.subr.bf16.mxu0 0
    %550 = vmatpush1.bf16.msra.mxu0 0
    %551 = vmatprep.subr.bf16.mxu0 0
    %552 = vmatpush1.bf16.msra.mxu0 0
    %553 = vmatprep.subr.bf16.mxu0 0
    %554 = vmatpush1.bf16.msra.mxu0 0
    %555 = vmatprep.subr.bf16.mxu0 0
    %556 = vmatpush1.bf16.msra.mxu0 0
    %557 = vmatprep.subr.bf16.mxu0 0
    %558 = vmatpush1.bf16.msra.mxu0 0
    %559 = vmatprep.subr.bf16.mxu0 0
    %560 = vmatpush1.bf16.msra.mxu0 0
    %561 = vmatprep.subr.bf16.mxu0 0
    %562 = vmatpush1.bf16.msra.mxu0 0
    %563 = vmatprep.subr.bf16.mxu0 0
    %564 = vmatpush1.bf16.msra.mxu0 0
    %565 = vmatprep.subr.bf16.mxu0 0
    %566 = vmatpush1.bf16.msra.mxu0 0
    %567 = vmatprep.subr.bf16.mxu0 0
    %568 = vmatpush1.bf16.msra.mxu0 0
    %569 = vmatprep.mubr.bf16.mxu0 0
    %570 = vmatmul.mubr.bf16.gmra.mrb[0].mxu0 %v535
    %v571 = vpop.f32.mrb[0].mxu0
    %v572 = vadd.f32 %v514, %v571
    %v573 = vpop.f32.mrb[0].mxu0
    %v574 = vpop.f32.mrb[0].mxu0
    %v575 = vpop.f32.mrb[0].mxu0
    %576 = vdwg.mxu0
    %v577 = vadd.f32 %v572, %v375
    %v578 = vxor.u32 %v577, 2147483648
    %v579 = vmul.f32 %v578, 1.442695
    %v580 = vpow.pop %v579
    %v581 = vadd.f32 %v580, 1.0
    %v582 = vrcp.pop %v581
    %v583 = vmul.f32 1.0, %v582
    %v584 = vtanh.pop %v577
    %v585 = vmul.f32 %v583, 0.0
    %587 = vrot.lane.b32.xlu0 %v584, 64
    %v588 = vpop.permute.xlu0 %587
    %v590 = vmul.f32 %v583, %v588
    %592 = vrot.lane.b32.xlu0 %v590, 32
    %v593 = vpop.permute.xlu0 %592
    %v595 = vadd.f32 %v585, %v593
    %v596 = vtanh.pop %v595
    %598 = vrot.lane.b32.xlu0 %v596, 64
    %v599 = vpop.permute.xlu0 %598
    %v601 = vmul.f32 %v583, %v599
    %v602 = vpack.c.bf16 %v601, %v601
    %v607 = vunpack.c.l.b16 %v366
    %v608 = vunpack.c.l.b16 %v367
    %v609 = vunpack.c.l.b16 %v368
    %v610 = vunpack.c.l.b16 %v369
    %v611 = vpack.c.b16 %v608, %v607
    %v612 = vpack.c.b16 %v610, %v609
    %615 = vmatprep.subr.bf16.mxu0 0
    %616 = vmatpush1.bf16.msra.mxu0 %v611
    %617 = vmatprep.subr.bf16.mxu0 0
    %618 = vmatpush1.bf16.msra.mxu0 %v612
    %619 = vmatprep.subr.bf16.mxu0 0
    %620 = vmatpush1.bf16.msra.mxu0 0
    %621 = vmatprep.subr.bf16.mxu0 0
    %622 = vmatpush1.bf16.msra.mxu0 0
    %623 = vmatprep.subr.bf16.mxu0 0
    %624 = vmatpush1.bf16.msra.mxu0 0
    %625 = vmatprep.subr.bf16.mxu0 0
    %626 = vmatpush1.bf16.msra.mxu0 0
    %627 = vmatprep.subr.bf16.mxu0 0
    %628 = vmatpush1.bf16.msra.mxu0 0
    %629 = vmatprep.subr.bf16.mxu0 0
    %630 = vmatpush1.bf16.msra.mxu0 0
    %631 = vmatprep.subr.bf16.mxu0 0
    %632 = vmatpush1.bf16.msra.mxu0 0
    %633 = vmatprep.subr.bf16.mxu0 0
    %634 = vmatpush1.bf16.msra.mxu0 0
    %635 = vmatprep.subr.bf16.mxu0 0
    %636 = vmatpush1.bf16.msra.mxu0 0
    %637 = vmatprep.subr.bf16.mxu0 0
    %638 = vmatpush1.bf16.msra.mxu0 0
    %639 = vmatprep.subr.bf16.mxu0 0
    %640 = vmatpush1.bf16.msra.mxu0 0
    %641 = vmatprep.subr.bf16.mxu0 0
    %642 = vmatpush1.bf16.msra.mxu0 0
    %643 = vmatprep.subr.bf16.mxu0 0
    %644 = vmatpush1.bf16.msra.mxu0 0
    %645 = vmatprep.subr.bf16.mxu0 0
    %646 = vmatpush1.bf16.msra.mxu0 0
    %647 = vmatprep.mubr.bf16.mxu0 0
    %648 = vmatmul.mubr.bf16.gmra.mrb[0].mxu0 %v399
    %v649 = vpop.f32.mrb[0].mxu0
    %v650 = vadd.f32 0.0, %v649
    %v651 = vpop.f32.mrb[0].mxu0
    %v652 = vpop.f32.mrb[0].mxu0
    %v653 = vpop.f32.mrb[0].mxu0
    %654 = vdwg.mxu0
    %656 = vrot.lane.b32.xlu0 %v602, 32
    %v657 = vpop.permute.xlu0 %656
    %v662 = vunpack.c.l.b16 %v362
    %v663 = vunpack.c.l.b16 %v363
    %v664 = vunpack.c.l.b16 %v364
    %v665 = vunpack.c.l.b16 %v365
    %v666 = vpack.c.b16 %v663, %v662
    %v667 = vpack.c.b16 %v665, %v664
    %v671 = vsel %vm397, %v657, 0
    %673 = vmatprep.subr.bf16.mxu0 0
    %674 = vmatpush1.bf16.msra.mxu0 %v666
    %675 = vmatprep.subr.bf16.mxu0 0
    %676 = vmatpush1.bf16.msra.mxu0 %v667
    %677 = vmatprep.subr.bf16.mxu0 0
    %678 = vmatpush1.bf16.msra.mxu0 0
    %679 = vmatprep.subr.bf16.mxu0 0
    %680 = vmatpush1.bf16.msra.mxu0 0
    %681 = vmatprep.subr.bf16.mxu0 0
    %682 = vmatpush1.bf16.msra.mxu0 0
    %683 = vmatprep.subr.bf16.mxu0 0
    %684 = vmatpush1.bf16.msra.mxu0 0
    %685 = vmatprep.subr.bf16.mxu0 0
    %686 = vmatpush1.bf16.msra.mxu0 0
    %687 = vmatprep.subr.bf16.mxu0 0
    %688 = vmatpush1.bf16.msra.mxu0 0
    %689 = vmatprep.subr.bf16.mxu0 0
    %690 = vmatpush1.bf16.msra.mxu0 0
    %691 = vmatprep.subr.bf16.mxu0 0
    %692 = vmatpush1.bf16.msra.mxu0 0
    %693 = vmatprep.subr.bf16.mxu0 0
    %694 = vmatpush1.bf16.msra.mxu0 0
    %695 = vmatprep.subr.bf16.mxu0 0
    %696 = vmatpush1.bf16.msra.mxu0 0
    %697 = vmatprep.subr.bf16.mxu0 0
    %698 = vmatpush1.bf16.msra.mxu0 0
    %699 = vmatprep.subr.bf16.mxu0 0
    %700 = vmatpush1.bf16.msra.mxu0 0
    %701 = vmatprep.subr.bf16.mxu0 0
    %702 = vmatpush1.bf16.msra.mxu0 0
    %703 = vmatprep.subr.bf16.mxu0 0
    %704 = vmatpush1.bf16.msra.mxu0 0
    %705 = vmatprep.mubr.bf16.mxu0 0
    %706 = vmatmul.mubr.bf16.gmra.mrb[0].mxu0 %v671
    %v707 = vpop.f32.mrb[0].mxu0
    %v708 = vadd.f32 %v650, %v707
    %v709 = vpop.f32.mrb[0].mxu0
    %v710 = vpop.f32.mrb[0].mxu0
    %v711 = vpop.f32.mrb[0].mxu0
    %712 = vdwg.mxu0
    %v713 = vadd.f32 %v708, %v382
    %v714 = vxor.u32 %v713, 2147483648
    %v715 = vmul.f32 %v714, 1.442695
    %v716 = vpow.pop %v715
    %v717 = vadd.f32 %v716, 1.0
    %v718 = vrcp.pop %v717
    %v719 = vmul.f32 1.0, %v718
    %v720 = vtanh.pop %v713
    %v721 = vmul.f32 %v719, 0.0
    %723 = vrot.lane.b32.xlu0 %v720, 64
    %v724 = vpop.permute.xlu0 %723
    %v726 = vmul.f32 %v719, %v724
    %728 = vrot.lane.b32.xlu0 %v726, 32
    %v729 = vpop.permute.xlu0 %728
    %v731 = vadd.f32 %v721, %v729
    %v732 = vtanh.pop %v731
    %734 = vrot.lane.b32.xlu0 %v732, 64
    %v735 = vpop.permute.xlu0 %734
    %v737 = vmul.f32 %v719, %v735
    %s738 = scalar_lea.vmem [#allocation2], 8
    %v739 = vld [vmem:[%s738] sm:$0xff]
    %740 = vmatprep.subr.bf16.mxu0 0
    %741 = vmatpush1.bf16.msra.mxu0 %v393
    %742 = vmatprep.subr.bf16.mxu0 0
    %743 = vmatpush1.bf16.msra.mxu0 %v394
    %744 = vmatprep.subr.bf16.mxu0 0
    %745 = vmatpush1.bf16.msra.mxu0 0
    %746 = vmatprep.subr.bf16.mxu0 0
    %747 = vmatpush1.bf16.msra.mxu0 0
    %748 = vmatprep.subr.bf16.mxu0 0
    %749 = vmatpush1.bf16.msra.mxu0 0
    %750 = vmatprep.subr.bf16.mxu0 0
    %751 = vmatpush1.bf16.msra.mxu0 0
    %752 = vmatprep.subr.bf16.mxu0 0
    %753 = vmatpush1.bf16.msra.mxu0 0
    %754 = vmatprep.subr.bf16.mxu0 0
    %755 = vmatpush1.bf16.msra.mxu0 0
    %756 = vmatprep.subr.bf16.mxu0 0
    %757 = vmatpush1.bf16.msra.mxu0 0
    %758 = vmatprep.subr.bf16.mxu0 0
    %759 = vmatpush1.bf16.msra.mxu0 0
    %760 = vmatprep.subr.bf16.mxu0 0
    %761 = vmatpush1.bf16.msra.mxu0 0
    %762 = vmatprep.subr.bf16.mxu0 0
    %763 = vmatpush1.bf16.msra.mxu0 0
    %764 = vmatprep.subr.bf16.mxu0 0
    %765 = vmatpush1.bf16.msra.mxu0 0
    %766 = vmatprep.subr.bf16.mxu0 0
    %767 = vmatpush1.bf16.msra.mxu0 0
    %768 = vmatprep.subr.bf16.mxu0 0
    %769 = vmatpush1.bf16.msra.mxu0 0
    %770 = vmatprep.subr.bf16.mxu0 0
    %771 = vmatpush1.bf16.msra.mxu0 0
    %772 = vmatprep.mubr.bf16.mxu0 0
    %773 = vmatmul.mubr.bf16.gmra.mrb[0].mxu0 %v535
    %v774 = vpop.f32.mrb[0].mxu0
    %v775 = vadd.f32 0.0, %v774
    %v776 = vpop.f32.mrb[0].mxu0
    %v777 = vpop.f32.mrb[0].mxu0
    %v778 = vpop.f32.mrb[0].mxu0
    %779 = vdwg.mxu0
    %v780 = vadd.f32 %v739, %v775
    %v781 = vxor.u32 %v780, 2147483648
    %v782 = vmul.f32 %v781, 1.442695
    %v783 = vpow.pop %v782
    %v784 = vadd.f32 %v783, 1.0
    %v785 = vrcp.pop %v784
    %v786 = vmul.f32 1.0, %v785
    %v787 = vtanh.pop %v780
    %v788 = vmul.f32 %v786, %v459
    %790 = vrot.lane.b32.xlu0 %v787, 64
    %v791 = vpop.permute.xlu0 %790
    %v793 = vmul.f32 %v786, %v791
    %795 = vrot.lane.b32.xlu0 %v793, 32
    %v796 = vpop.permute.xlu0 %795
    %v798 = vadd.f32 %v788, %v796
    %v799 = vtanh.pop %v798
    %801 = vrot.lane.b32.xlu0 %v799, 64
    %v802 = vpop.permute.xlu0 %801
    %v804 = vmul.f32 %v786, %v802
    %v805 = vpack.c.bf16 %v804, %v804
    %806 = vmatprep.subr.bf16.mxu0 0
    %807 = vmatpush1.bf16.msra.mxu0 %v475
    %808 = vmatprep.subr.bf16.mxu0 0
    %809 = vmatpush1.bf16.msra.mxu0 %v476
    %810 = vmatprep.subr.bf16.mxu0 0
    %811 = vmatpush1.bf16.msra.mxu0 0
    %812 = vmatprep.subr.bf16.mxu0 0
    %813 = vmatpush1.bf16.msra.mxu0 0
    %814 = vmatprep.subr.bf16.mxu0 0
    %815 = vmatpush1.bf16.msra.mxu0 0
    %816 = vmatprep.subr.bf16.mxu0 0
    %817 = vmatpush1.bf16.msra.mxu0 0
    %818 = vmatprep.subr.bf16.mxu0 0
    %819 = vmatpush1.bf16.msra.mxu0 0
    %820 = vmatprep.subr.bf16.mxu0 0
    %821 = vmatpush1.bf16.msra.mxu0 0
    %822 = vmatprep.subr.bf16.mxu0 0
    %823 = vmatpush1.bf16.msra.mxu0 0
    %824 = vmatprep.subr.bf16.mxu0 0
    %825 = vmatpush1.bf16.msra.mxu0 0
    %826 = vmatprep.subr.bf16.mxu0 0
    %827 = vmatpush1.bf16.msra.mxu0 0
    %828 = vmatprep.subr.bf16.mxu0 0
    %829 = vmatpush1.bf16.msra.mxu0 0
    %830 = vmatprep.subr.bf16.mxu0 0
    %831 = vmatpush1.bf16.msra.mxu0 0
    %832 = vmatprep.subr.bf16.mxu0 0
    %833 = vmatpush1.bf16.msra.mxu0 0
    %834 = vmatprep.subr.bf16.mxu0 0
    %835 = vmatpush1.bf16.msra.mxu0 0
    %836 = vmatprep.subr.bf16.mxu0 0
    %837 = vmatpush1.bf16.msra.mxu0 0
    %838 = vmatprep.mubr.bf16.mxu0 0
    %839 = vmatmul.mubr.bf16.gmra.mrb[0].mxu0 %v671
    %v840 = vpop.f32.mrb[0].mxu0
    %v841 = vadd.f32 0.0, %v840
    %v842 = vpop.f32.mrb[0].mxu0
    %v843 = vpop.f32.mrb[0].mxu0
    %v844 = vpop.f32.mrb[0].mxu0
    %845 = vdwg.mxu0
    %847 = vrot.lane.b32.xlu0 %v805, 32
    %v848 = vpop.permute.xlu0 %847
    %v850 = vsel %vm397, %v848, 0
    %852 = vmatprep.subr.bf16.mxu0 0
    %853 = vmatpush1.bf16.msra.mxu0 %v530
    %854 = vmatprep.subr.bf16.mxu0 0
    %855 = vmatpush1.bf16.msra.mxu0 %v531
    %856 = vmatprep.subr.bf16.mxu0 0
    %857 = vmatpush1.bf16.msra.mxu0 0
    %858 = vmatprep.subr.bf16.mxu0 0
    %859 = vmatpush1.bf16.msra.mxu0 0
    %860 = vmatprep.subr.bf16.mxu0 0
    %861 = vmatpush1.bf16.msra.mxu0 0
    %862 = vmatprep.subr.bf16.mxu0 0
    %863 = vmatpush1.bf16.msra.mxu0 0
    %864 = vmatprep.subr.bf16.mxu0 0
    %865 = vmatpush1.bf16.msra.mxu0 0
    %866 = vmatprep.subr.bf16.mxu0 0
    %867 = vmatpush1.bf16.msra.mxu0 0
    %868 = vmatprep.subr.bf16.mxu0 0
    %869 = vmatpush1.bf16.msra.mxu0 0
    %870 = vmatprep.subr.bf16.mxu0 0
    %871 = vmatpush1.bf16.msra.mxu0 0
    %872 = vmatprep.subr.bf16.mxu0 0
    %873 = vmatpush1.bf16.msra.mxu0 0
    %874 = vmatprep.subr.bf16.mxu0 0
    %875 = vmatpush1.bf16.msra.mxu0 0
    %876 = vmatprep.subr.bf16.mxu0 0
    %877 = vmatpush1.bf16.msra.mxu0 0
    %878 = vmatprep.subr.bf16.mxu0 0
    %879 = vmatpush1.bf16.msra.mxu0 0
    %880 = vmatprep.subr.bf16.mxu0 0
    %881 = vmatpush1.bf16.msra.mxu0 0
    %882 = vmatprep.subr.bf16.mxu0 0
    %883 = vmatpush1.bf16.msra.mxu0 0
    %884 = vmatprep.mubr.bf16.mxu0 0
    %885 = vmatmul.mubr.bf16.gmra.mrb[0].mxu0 %v850
    %v886 = vpop.f32.mrb[0].mxu0
    %v887 = vadd.f32 %v841, %v886
    %v888 = vpop.f32.mrb[0].mxu0
    %v889 = vpop.f32.mrb[0].mxu0
    %v890 = vpop.f32.mrb[0].mxu0
    %891 = vdwg.mxu0
    %v892 = vadd.f32 %v887, %v375
    %v893 = vxor.u32 %v892, 2147483648
    %v894 = vmul.f32 %v893, 1.442695
    %v895 = vpow.pop %v894
    %v896 = vadd.f32 %v895, 1.0
    %v897 = vrcp.pop %v896
    %v898 = vmul.f32 1.0, %v897
    %v899 = vtanh.pop %v892
    %v900 = vmul.f32 %v898, %v595
    %902 = vrot.lane.b32.xlu0 %v899, 64
    %v903 = vpop.permute.xlu0 %902
    %v905 = vmul.f32 %v898, %v903
    %907 = vrot.lane.b32.xlu0 %v905, 32
    %v908 = vpop.permute.xlu0 %907
    %v910 = vadd.f32 %v900, %v908
    %v911 = vtanh.pop %v910
    %913 = vrot.lane.b32.xlu0 %v911, 64
    %v914 = vpop.permute.xlu0 %913
    %v916 = vmul.f32 %v898, %v914
    %v917 = vpack.c.bf16 %v916, %v916
    %v918 = vpack.c.bf16 %v737, %v737
    %920 = vrot.lane.b32.xlu0 %v918, 32
    %v921 = vpop.permute.xlu0 %920
    %v923 = vsel %vm397, %v921, 0
    %925 = vmatprep.subr.bf16.mxu0 0
    %926 = vmatpush1.bf16.msra.mxu0 %v611
    %927 = vmatprep.subr.bf16.mxu0 0
    %928 = vmatpush1.bf16.msra.mxu0 %v612
    %929 = vmatprep.subr.bf16.mxu0 0
    %930 = vmatpush1.bf16.msra.mxu0 0
    %931 = vmatprep.subr.bf16.mxu0 0
    %932 = vmatpush1.bf16.msra.mxu0 0
    %933 = vmatprep.subr.bf16.mxu0 0
    %934 = vmatpush1.bf16.msra.mxu0 0
    %935 = vmatprep.subr.bf16.mxu0 0
    %936 = vmatpush1.bf16.msra.mxu0 0
    %937 = vmatprep.subr.bf16.mxu0 0
    %938 = vmatpush1.bf16.msra.mxu0 0
    %939 = vmatprep.subr.bf16.mxu0 0
    %940 = vmatpush1.bf16.msra.mxu0 0
    %941 = vmatprep.subr.bf16.mxu0 0
    %942 = vmatpush1.bf16.msra.mxu0 0
    %943 = vmatprep.subr.bf16.mxu0 0
    %944 = vmatpush1.bf16.msra.mxu0 0
    %945 = vmatprep.subr.bf16.mxu0 0
    %946 = vmatpush1.bf16.msra.mxu0 0
    %947 = vmatprep.subr.bf16.mxu0 0
    %948 = vmatpush1.bf16.msra.mxu0 0
    %949 = vmatprep.subr.bf16.mxu0 0
    %950 = vmatpush1.bf16.msra.mxu0 0
    %951 = vmatprep.subr.bf16.mxu0 0
    %952 = vmatpush1.bf16.msra.mxu0 0
    %953 = vmatprep.subr.bf16.mxu0 0
    %954 = vmatpush1.bf16.msra.mxu0 0
    %955 = vmatprep.subr.bf16.mxu0 0
    %956 = vmatpush1.bf16.msra.mxu0 0
    %957 = vmatprep.mubr.bf16.mxu0 0
    %958 = vmatmul.mubr.bf16.gmra.mrb[0].mxu0 %v923
    %v959 = vpop.f32.mrb[0].mxu0
    %v960 = vadd.f32 0.0, %v959
    %v961 = vpop.f32.mrb[0].mxu0
    %v962 = vpop.f32.mrb[0].mxu0
    %v963 = vpop.f32.mrb[0].mxu0
    %964 = vdwg.mxu0
    %966 = vrot.lane.b32.xlu0 %v917, 32
    %v967 = vpop.permute.xlu0 %966
    %v969 = vsel %vm397, %v967, 0
    %971 = vmatprep.subr.bf16.mxu0 0
    %972 = vmatpush1.bf16.msra.mxu0 %v666
    %973 = vmatprep.subr.bf16.mxu0 0
    %974 = vmatpush1.bf16.msra.mxu0 %v667
    %975 = vmatprep.subr.bf16.mxu0 0
    %976 = vmatpush1.bf16.msra.mxu0 0
    %977 = vmatprep.subr.bf16.mxu0 0
    %978 = vmatpush1.bf16.msra.mxu0 0
    %979 = vmatprep.subr.bf16.mxu0 0
    %980 = vmatpush1.bf16.msra.mxu0 0
    %981 = vmatprep.subr.bf16.mxu0 0
    %982 = vmatpush1.bf16.msra.mxu0 0
    %983 = vmatprep.subr.bf16.mxu0 0
    %984 = vmatpush1.bf16.msra.mxu0 0
    %985 = vmatprep.subr.bf16.mxu0 0
    %986 = vmatpush1.bf16.msra.mxu0 0
    %987 = vmatprep.subr.bf16.mxu0 0
    %988 = vmatpush1.bf16.msra.mxu0 0
    %989 = vmatprep.subr.bf16.mxu0 0
    %990 = vmatpush1.bf16.msra.mxu0 0
    %991 = vmatprep.subr.bf16.mxu0 0
    %992 = vmatpush1.bf16.msra.mxu0 0
    %993 = vmatprep.subr.bf16.mxu0 0
    %994 = vmatpush1.bf16.msra.mxu0 0
    %995 = vmatprep.subr.bf16.mxu0 0
    %996 = vmatpush1.bf16.msra.mxu0 0
    %997 = vmatprep.subr.bf16.mxu0 0
    %998 = vmatpush1.bf16.msra.mxu0 0
    %999 = vmatprep.subr.bf16.mxu0 0
    %1000 = vmatpush1.bf16.msra.mxu0 0
    %1001 = vmatprep.subr.bf16.mxu0 0
    %1002 = vmatpush1.bf16.msra.mxu0 0
    %1003 = vmatprep.mubr.bf16.mxu0 0
    %1004 = vmatmul.mubr.bf16.gmra.mrb[0].mxu0 %v969
    %v1005 = vpop.f32.mrb[0].mxu0
    %v1006 = vadd.f32 %v960, %v1005
    %v1007 = vpop.f32.mrb[0].mxu0
    %v1008 = vpop.f32.mrb[0].mxu0
    %v1009 = vpop.f32.mrb[0].mxu0
    %1010 = vdwg.mxu0
    %v1011 = vadd.f32 %v1006, %v382
    %v1012 = vxor.u32 %v1011, 2147483648
    %v1013 = vmul.f32 %v1012, 1.442695
    %v1014 = vpow.pop %v1013
    %v1015 = vadd.f32 %v1014, 1.0
    %v1016 = vrcp.pop %v1015
    %v1017 = vmul.f32 1.0, %v1016
    %v1018 = vtanh.pop %v1011
    %v1019 = vmul.f32 %v1017, %v731
    %1021 = vrot.lane.b32.xlu0 %v1018, 64
    %v1022 = vpop.permute.xlu0 %1021
    %v1024 = vmul.f32 %v1017, %v1022
    %1026 = vrot.lane.b32.xlu0 %v1024, 32
    %v1027 = vpop.permute.xlu0 %1026
    %v1029 = vadd.f32 %v1019, %v1027
    %v1030 = vtanh.pop %v1029
    %1032 = vrot.lane.b32.xlu0 %v1030, 64
    %v1033 = vpop.permute.xlu0 %1032
    %v1035 = vmul.f32 %v1017, %v1033
    %s1036 = scalar_lea.vmem [#allocation2], 16
    %v1037 = vld [vmem:[%s1036] sm:$0xff]
    %1038 = vmatprep.subr.bf16.mxu0 0
    %1039 = vmatpush1.bf16.msra.mxu0 %v393
    %1040 = vmatprep.subr.bf16.mxu0 0
    %1041 = vmatpush1.bf16.msra.mxu0 %v394
    %1042 = vmatprep.subr.bf16.mxu0 0
    %1043 = vmatpush1.bf16.msra.mxu0 0
    %1044 = vmatprep.subr.bf16.mxu0 0
    %1045 = vmatpush1.bf16.msra.mxu0 0
    %1046 = vmatprep.subr.bf16.mxu0 0
    %1047 = vmatpush1.bf16.msra.mxu0 0
    %1048 = vmatprep.subr.bf16.mxu0 0
    %1049 = vmatpush1.bf16.msra.mxu0 0
    %1050 = vmatprep.subr.bf16.mxu0 0
    %1051 = vmatpush1.bf16.msra.mxu0 0
    %1052 = vmatprep.subr.bf16.mxu0 0
    %1053 = vmatpush1.bf16.msra.mxu0 0
    %1054 = vmatprep.subr.bf16.mxu0 0
    %1055 = vmatpush1.bf16.msra.mxu0 0
    %1056 = vmatprep.subr.bf16.mxu0 0
    %1057 = vmatpush1.bf16.msra.mxu0 0
    %1058 = vmatprep.subr.bf16.mxu0 0
    %1059 = vmatpush1.bf16.msra.mxu0 0
    %1060 = vmatprep.subr.bf16.mxu0 0
    %1061 = vmatpush1.bf16.msra.mxu0 0
    %1062 = vmatprep.subr.bf16.mxu0 0
    %1063 = vmatpush1.bf16.msra.mxu0 0
    %1064 = vmatprep.subr.bf16.mxu0 0
    %1065 = vmatpush1.bf16.msra.mxu0 0
    %1066 = vmatprep.subr.bf16.mxu0 0
    %1067 = vmatpush1.bf16.msra.mxu0 0
    %1068 = vmatprep.subr.bf16.mxu0 0
    %1069 = vmatpush1.bf16.msra.mxu0 0
    %1070 = vmatprep.mubr.bf16.mxu0 0
    %1071 = vmatmul.mubr.bf16.gmra.mrb[0].mxu0 %v850
    %v1072 = vpop.f32.mrb[0].mxu0
    %v1073 = vadd.f32 0.0, %v1072
    %v1074 = vpop.f32.mrb[0].mxu0
    %v1075 = vpop.f32.mrb[0].mxu0
    %v1076 = vpop.f32.mrb[0].mxu0
    %1077 = vdwg.mxu0
    %v1078 = vadd.f32 %v1037, %v1073
    %v1079 = vxor.u32 %v1078, 2147483648
    %v1080 = vmul.f32 %v1079, 1.442695
    %v1081 = vpow.pop %v1080
    %v1082 = vadd.f32 %v1081, 1.0
    %v1083 = vrcp.pop %v1082
    %v1084 = vmul.f32 1.0, %v1083
    %v1085 = vtanh.pop %v1078
    %v1086 = vmul.f32 %v1084, %v798
    %1088 = vrot.lane.b32.xlu0 %v1085, 64
    %v1089 = vpop.permute.xlu0 %1088
    %v1091 = vmul.f32 %v1084, %v1089
    %1093 = vrot.lane.b32.xlu0 %v1091, 32
    %v1094 = vpop.permute.xlu0 %1093
    %v1096 = vadd.f32 %v1086, %v1094
    %v1097 = vtanh.pop %v1096
    %1099 = vrot.lane.b32.xlu0 %v1097, 64
    %v1100 = vpop.permute.xlu0 %1099
    %v1102 = vmul.f32 %v1084, %v1100
    %v1103 = vpack.c.bf16 %v1102, %v1102
    %1104 = vmatprep.subr.bf16.mxu0 0
    %1105 = vmatpush1.bf16.msra.mxu0 %v475
    %1106 = vmatprep.subr.bf16.mxu0 0
    %1107 = vmatpush1.bf16.msra.mxu0 %v476
    %1108 = vmatprep.subr.bf16.mxu0 0
    %1109 = vmatpush1.bf16.msra.mxu0 0
    %1110 = vmatprep.subr.bf16.mxu0 0
    %1111 = vmatpush1.bf16.msra.mxu0 0
    %1112 = vmatprep.subr.bf16.mxu0 0
    %1113 = vmatpush1.bf16.msra.mxu0 0
    %1114 = vmatprep.subr.bf16.mxu0 0
    %1115 = vmatpush1.bf16.msra.mxu0 0
    %1116 = vmatprep.subr.bf16.mxu0 0
    %1117 = vmatpush1.bf16.msra.mxu0 0
    %1118 = vmatprep.subr.bf16.mxu0 0
    %1119 = vmatpush1.bf16.msra.mxu0 0
    %1120 = vmatprep.subr.bf16.mxu0 0
    %1121 = vmatpush1.bf16.msra.mxu0 0
    %1122 = vmatprep.subr.bf16.mxu0 0
    %1123 = vmatpush1.bf16.msra.mxu0 0
    %1124 = vmatprep.subr.bf16.mxu0 0
    %1125 = vmatpush1.bf16.msra.mxu0 0
    %1126 = vmatprep.subr.bf16.mxu0 0
    %1127 = vmatpush1.bf16.msra.mxu0 0
    %1128 = vmatprep.subr.bf16.mxu0 0
    %1129 = vmatpush1.bf16.msra.mxu0 0
    %1130 = vmatprep.subr.bf16.mxu0 0
    %1131 = vmatpush1.bf16.msra.mxu0 0
    %1132 = vmatprep.subr.bf16.mxu0 0
    %1133 = vmatpush1.bf16.msra.mxu0 0
    %1134 = vmatprep.subr.bf16.mxu0 0
    %1135 = vmatpush1.bf16.msra.mxu0 0
    %1136 = vmatprep.mubr.bf16.mxu0 0
    %1137 = vmatmul.mubr.bf16.gmra.mrb[0].mxu0 %v969
    %v1138 = vpop.f32.mrb[0].mxu0
    %v1139 = vadd.f32 0.0, %v1138
    %v1140 = vpop.f32.mrb[0].mxu0
    %v1141 = vpop.f32.mrb[0].mxu0
    %v1142 = vpop.f32.mrb[0].mxu0
    %1143 = vdwg.mxu0
    %1145 = vrot.lane.b32.xlu0 %v1103, 32
    %v1146 = vpop.permute.xlu0 %1145
    %v1148 = vsel %vm397, %v1146, 0
    %1150 = vmatprep.subr.bf16.mxu0 0
    %1151 = vmatpush1.bf16.msra.mxu0 %v530
    %1152 = vmatprep.subr.bf16.mxu0 0
    %1153 = vmatpush1.bf16.msra.mxu0 %v531
    %1154 = vmatprep.subr.bf16.mxu0 0
    %1155 = vmatpush1.bf16.msra.mxu0 0
    %1156 = vmatprep.subr.bf16.mxu0 0
    %1157 = vmatpush1.bf16.msra.mxu0 0
    %1158 = vmatprep.subr.bf16.mxu0 0
    %1159 = vmatpush1.bf16.msra.mxu0 0
    %1160 = vmatprep.subr.bf16.mxu0 0
    %1161 = vmatpush1.bf16.msra.mxu0 0
    %1162 = vmatprep.subr.bf16.mxu0 0
    %1163 = vmatpush1.bf16.msra.mxu0 0
    %1164 = vmatprep.subr.bf16.mxu0 0
    %1165 = vmatpush1.bf16.msra.mxu0 0
    %1166 = vmatprep.subr.bf16.mxu0 0
    %1167 = vmatpush1.bf16.msra.mxu0 0
    %1168 = vmatprep.subr.bf16.mxu0 0
    %1169 = vmatpush1.bf16.msra.mxu0 0
    %1170 = vmatprep.subr.bf16.mxu0 0
    %1171 = vmatpush1.bf16.msra.mxu0 0
    %1172 = vmatprep.subr.bf16.mxu0 0
    %1173 = vmatpush1.bf16.msra.mxu0 0
    %1174 = vmatprep.subr.bf16.mxu0 0
    %1175 = vmatpush1.bf16.msra.mxu0 0
    %1176 = vmatprep.subr.bf16.mxu0 0
    %1177 = vmatpush1.bf16.msra.mxu0 0
    %1178 = vmatprep.subr.bf16.mxu0 0
    %1179 = vmatpush1.bf16.msra.mxu0 0
    %1180 = vmatprep.subr.bf16.mxu0 0
    %1181 = vmatpush1.bf16.msra.mxu0 0
    %1182 = vmatprep.mubr.bf16.mxu0 0
    %1183 = vmatmul.mubr.bf16.gmra.mrb[0].mxu0 %v1148
    %v1184 = vpop.f32.mrb[0].mxu0
    %v1185 = vadd.f32 %v1139, %v1184
    %v1186 = vpop.f32.mrb[0].mxu0
    %v1187 = vpop.f32.mrb[0].mxu0
    %v1188 = vpop.f32.mrb[0].mxu0
    %1189 = vdwg.mxu0
    %v1190 = vadd.f32 %v1185, %v375
    %v1191 = vxor.u32 %v1190, 2147483648
    %v1192 = vmul.f32 %v1191, 1.442695
    %v1193 = vpow.pop %v1192
    %v1194 = vadd.f32 %v1193, 1.0
    %v1195 = vrcp.pop %v1194
    %v1196 = vmul.f32 1.0, %v1195
    %v1197 = vtanh.pop %v1190
    %v1198 = vmul.f32 %v1196, %v910
    %1200 = vrot.lane.b32.xlu0 %v1197, 64
    %v1201 = vpop.permute.xlu0 %1200
    %v1203 = vmul.f32 %v1196, %v1201
    %1205 = vrot.lane.b32.xlu0 %v1203, 32
    %v1206 = vpop.permute.xlu0 %1205
    %v1208 = vadd.f32 %v1198, %v1206
    %v1209 = vtanh.pop %v1208
    %1211 = vrot.lane.b32.xlu0 %v1209, 64
    %v1212 = vpop.permute.xlu0 %1211
    %v1214 = vmul.f32 %v1196, %v1212
    %v1215 = vpack.c.bf16 %v1214, %v1214
    %v1216 = vpack.c.bf16 %v1035, %v1035
    %1218 = vrot.lane.b32.xlu0 %v1216, 32
    %v1219 = vpop.permute.xlu0 %1218
    %v1221 = vsel %vm397, %v1219, 0
    %1223 = vmatprep.subr.bf16.mxu0 0
    %1224 = vmatpush1.bf16.msra.mxu0 %v611
    %1225 = vmatprep.subr.bf16.mxu0 0
    %1226 = vmatpush1.bf16.msra.mxu0 %v612
    %1227 = vmatprep.subr.bf16.mxu0 0
    %1228 = vmatpush1.bf16.msra.mxu0 0
    %1229 = vmatprep.subr.bf16.mxu0 0
    %1230 = vmatpush1.bf16.msra.mxu0 0
    %1231 = vmatprep.subr.bf16.mxu0 0
    %1232 = vmatpush1.bf16.msra.mxu0 0
    %1233 = vmatprep.subr.bf16.mxu0 0
    %1234 = vmatpush1.bf16.msra.mxu0 0
    %1235 = vmatprep.subr.bf16.mxu0 0
    %1236 = vmatpush1.bf16.msra.mxu0 0
    %1237 = vmatprep.subr.bf16.mxu0 0
    %1238 = vmatpush1.bf16.msra.mxu0 0
    %1239 = vmatprep.subr.bf16.mxu0 0
    %1240 = vmatpush1.bf16.msra.mxu0 0
    %1241 = vmatprep.subr.bf16.mxu0 0
    %1242 = vmatpush1.bf16.msra.mxu0 0
    %1243 = vmatprep.subr.bf16.mxu0 0
    %1244 = vmatpush1.bf16.msra.mxu0 0
    %1245 = vmatprep.subr.bf16.mxu0 0
    %1246 = vmatpush1.bf16.msra.mxu0 0
    %1247 = vmatprep.subr.bf16.mxu0 0
    %1248 = vmatpush1.bf16.msra.mxu0 0
    %1249 = vmatprep.subr.bf16.mxu0 0
    %1250 = vmatpush1.bf16.msra.mxu0 0
    %1251 = vmatprep.subr.bf16.mxu0 0
    %1252 = vmatpush1.bf16.msra.mxu0 0
    %1253 = vmatprep.subr.bf16.mxu0 0
    %1254 = vmatpush1.bf16.msra.mxu0 0
    %1255 = vmatprep.mubr.bf16.mxu0 0
    %1256 = vmatmul.mubr.bf16.gmra.mrb[0].mxu0 %v1221
    %v1257 = vpop.f32.mrb[0].mxu0
    %v1258 = vadd.f32 0.0, %v1257
    %v1259 = vpop.f32.mrb[0].mxu0
    %v1260 = vpop.f32.mrb[0].mxu0
    %v1261 = vpop.f32.mrb[0].mxu0
    %1262 = vdwg.mxu0
    %1264 = vrot.lane.b32.xlu0 %v1215, 32
    %v1265 = vpop.permute.xlu0 %1264
    %v1267 = vsel %vm397, %v1265, 0
    %1269 = vmatprep.subr.bf16.mxu0 0
    %1270 = vmatpush1.bf16.msra.mxu0 %v666
    %1271 = vmatprep.subr.bf16.mxu0 0
    %1272 = vmatpush1.bf16.msra.mxu0 %v667
    %1273 = vmatprep.subr.bf16.mxu0 0
    %1274 = vmatpush1.bf16.msra.mxu0 0
    %1275 = vmatprep.subr.bf16.mxu0 0
    %1276 = vmatpush1.bf16.msra.mxu0 0
    %1277 = vmatprep.subr.bf16.mxu0 0
    %1278 = vmatpush1.bf16.msra.mxu0 0
    %1279 = vmatprep.subr.bf16.mxu0 0
    %1280 = vmatpush1.bf16.msra.mxu0 0
    %1281 = vmatprep.subr.bf16.mxu0 0
    %1282 = vmatpush1.bf16.msra.mxu0 0
    %1283 = vmatprep.subr.bf16.mxu0 0
    %1284 = vmatpush1.bf16.msra.mxu0 0
    %1285 = vmatprep.subr.bf16.mxu0 0
    %1286 = vmatpush1.bf16.msra.mxu0 0
    %1287 = vmatprep.subr.bf16.mxu0 0
    %1288 = vmatpush1.bf16.msra.mxu0 0
    %1289 = vmatprep.subr.bf16.mxu0 0
    %1290 = vmatpush1.bf16.msra.mxu0 0
    %1291 = vmatprep.subr.bf16.mxu0 0
    %1292 = vmatpush1.bf16.msra.mxu0 0
    %1293 = vmatprep.subr.bf16.mxu0 0
    %1294 = vmatpush1.bf16.msra.mxu0 0
    %1295 = vmatprep.subr.bf16.mxu0 0
    %1296 = vmatpush1.bf16.msra.mxu0 0
    %1297 = vmatprep.subr.bf16.mxu0 0
    %1298 = vmatpush1.bf16.msra.mxu0 0
    %1299 = vmatprep.subr.bf16.mxu0 0
    %1300 = vmatpush1.bf16.msra.mxu0 0
    %1301 = vmatprep.mubr.bf16.mxu0 0
    %1302 = vmatmul.mubr.bf16.gmra.mrb[0].mxu0 %v1267
    %v1303 = vpop.f32.mrb[0].mxu0
    %v1304 = vadd.f32 %v1258, %v1303
    %v1305 = vpop.f32.mrb[0].mxu0
    %v1306 = vpop.f32.mrb[0].mxu0
    %v1307 = vpop.f32.mrb[0].mxu0
    %1308 = vdwg.mxu0
    %v1309 = vadd.f32 %v1304, %v382
    %v1310 = vxor.u32 %v1309, 2147483648
    %v1311 = vmul.f32 %v1310, 1.442695
    %v1312 = vpow.pop %v1311
    %v1313 = vadd.f32 %v1312, 1.0
    %v1314 = vrcp.pop %v1313
    %v1315 = vmul.f32 1.0, %v1314
    %v1316 = vtanh.pop %v1309
    %v1317 = vmul.f32 %v1315, %v1029
    %1319 = vrot.lane.b32.xlu0 %v1316, 64
    %v1320 = vpop.permute.xlu0 %1319
    %v1322 = vmul.f32 %v1315, %v1320
    %1324 = vrot.lane.b32.xlu0 %v1322, 32
    %v1325 = vpop.permute.xlu0 %1324
    %v1327 = vadd.f32 %v1317, %v1325
    %v1328 = vtanh.pop %v1327
    %1330 = vrot.lane.b32.xlu0 %v1328, 64
    %v1331 = vpop.permute.xlu0 %1330
    %v1333 = vmul.f32 %v1315, %v1331
    %s1334 = scalar_lea.vmem [#allocation2], 24
    %v1335 = vld [vmem:[%s1334] sm:$0xff]
    %1336 = vmatprep.subr.bf16.mxu0 0
    %1337 = vmatpush1.bf16.msra.mxu0 %v393
    %1338 = vmatprep.subr.bf16.mxu0 0
    %1339 = vmatpush1.bf16.msra.mxu0 %v394
    %1340 = vmatprep.subr.bf16.mxu0 0
    %1341 = vmatpush1.bf16.msra.mxu0 0
    %1342 = vmatprep.subr.bf16.mxu0 0
    %1343 = vmatpush1.bf16.msra.mxu0 0
    %1344 = vmatprep.subr.bf16.mxu0 0
    %1345 = vmatpush1.bf16.msra.mxu0 0
    %1346 = vmatprep.subr.bf16.mxu0 0
    %1347 = vmatpush1.bf16.msra.mxu0 0
    %1348 = vmatprep.subr.bf16.mxu0 0
    %1349 = vmatpush1.bf16.msra.mxu0 0
    %1350 = vmatprep.subr.bf16.mxu0 0
    %1351 = vmatpush1.bf16.msra.mxu0 0
    %1352 = vmatprep.subr.bf16.mxu0 0
    %1353 = vmatpush1.bf16.msra.mxu0 0
    %1354 = vmatprep.subr.bf16.mxu0 0
    %1355 = vmatpush1.bf16.msra.mxu0 0
    %1356 = vmatprep.subr.bf16.mxu0 0
    %1357 = vmatpush1.bf16.msra.mxu0 0
    %1358 = vmatprep.subr.bf16.mxu0 0
    %1359 = vmatpush1.bf16.msra.mxu0 0
    %1360 = vmatprep.subr.bf16.mxu0 0
    %1361 = vmatpush1.bf16.msra.mxu0 0
    %1362 = vmatprep.subr.bf16.mxu0 0
    %1363 = vmatpush1.bf16.msra.mxu0 0
    %1364 = vmatprep.subr.bf16.mxu0 0
    %1365 = vmatpush1.bf16.msra.mxu0 0
    %1366 = vmatprep.subr.bf16.mxu0 0
    %1367 = vmatpush1.bf16.msra.mxu0 0
    %1368 = vmatprep.mubr.bf16.mxu0 0
    %1369 = vmatmul.mubr.bf16.gmra.mrb[0].mxu0 %v1148
    %v1370 = vpop.f32.mrb[0].mxu0
    %v1371 = vadd.f32 0.0, %v1370
    %v1372 = vpop.f32.mrb[0].mxu0
    %v1373 = vpop.f32.mrb[0].mxu0
    %v1374 = vpop.f32.mrb[0].mxu0
    %1375 = vdwg.mxu0
    %v1376 = vadd.f32 %v1335, %v1371
    %v1377 = vxor.u32 %v1376, 2147483648
    %v1378 = vmul.f32 %v1377, 1.442695
    %v1379 = vpow.pop %v1378
    %v1380 = vadd.f32 %v1379, 1.0
    %v1381 = vrcp.pop %v1380
    %v1382 = vmul.f32 1.0, %v1381
    %v1383 = vtanh.pop %v1376
    %v1384 = vmul.f32 %v1382, %v1096
    %1386 = vrot.lane.b32.xlu0 %v1383, 64
    %v1387 = vpop.permute.xlu0 %1386
    %v1389 = vmul.f32 %v1382, %v1387
    %1391 = vrot.lane.b32.xlu0 %v1389, 32
    %v1392 = vpop.permute.xlu0 %1391
    %v1394 = vadd.f32 %v1384, %v1392
    %v1395 = vtanh.pop %v1394
    %1397 = vrot.lane.b32.xlu0 %v1395, 64
    %v1398 = vpop.permute.xlu0 %1397
    %v1400 = vmul.f32 %v1382, %v1398
    %v1401 = vpack.c.bf16 %v1400, %v1400
    %1402 = vmatprep.subr.bf16.mxu0 0
    %1403 = vmatpush1.bf16.msra.mxu0 %v475
    %1404 = vmatprep.subr.bf16.mxu0 0
    %1405 = vmatpush1.bf16.msra.mxu0 %v476
    %1406 = vmatprep.subr.bf16.mxu0 0
    %1407 = vmatpush1.bf16.msra.mxu0 0
    %1408 = vmatprep.subr.bf16.mxu0 0
    %1409 = vmatpush1.bf16.msra.mxu0 0
    %1410 = vmatprep.subr.bf16.mxu0 0
    %1411 = vmatpush1.bf16.msra.mxu0 0
    %1412 = vmatprep.subr.bf16.mxu0 0
    %1413 = vmatpush1.bf16.msra.mxu0 0
    %1414 = vmatprep.subr.bf16.mxu0 0
    %1415 = vmatpush1.bf16.msra.mxu0 0
    %1416 = vmatprep.subr.bf16.mxu0 0
    %1417 = vmatpush1.bf16.msra.mxu0 0
    %1418 = vmatprep.subr.bf16.mxu0 0
    %1419 = vmatpush1.bf16.msra.mxu0 0
    %1420 = vmatprep.subr.bf16.mxu0 0
    %1421 = vmatpush1.bf16.msra.mxu0 0
    %1422 = vmatprep.subr.bf16.mxu0 0
    %1423 = vmatpush1.bf16.msra.mxu0 0
    %1424 = vmatprep.subr.bf16.mxu0 0
    %1425 = vmatpush1.bf16.msra.mxu0 0
    %1426 = vmatprep.subr.bf16.mxu0 0
    %1427 = vmatpush1.bf16.msra.mxu0 0
    %1428 = vmatprep.subr.bf16.mxu0 0
    %1429 = vmatpush1.bf16.msra.mxu0 0
    %1430 = vmatprep.subr.bf16.mxu0 0
    %1431 = vmatpush1.bf16.msra.mxu0 0
    %1432 = vmatprep.subr.bf16.mxu0 0
    %1433 = vmatpush1.bf16.msra.mxu0 0
    %1434 = vmatprep.mubr.bf16.mxu0 0
    %1435 = vmatmul.mubr.bf16.gmra.mrb[0].mxu0 %v1267
    %v1436 = vpop.f32.mrb[0].mxu0
    %v1437 = vadd.f32 0.0, %v1436
    %v1438 = vpop.f32.mrb[0].mxu0
    %v1439 = vpop.f32.mrb[0].mxu0
    %v1440 = vpop.f32.mrb[0].mxu0
    %1441 = vdwg.mxu0
    %1443 = vrot.lane.b32.xlu0 %v1401, 32
    %v1444 = vpop.permute.xlu0 %1443
    %v1446 = vsel %vm397, %v1444, 0
    %1448 = vmatprep.subr.bf16.mxu0 0
    %1449 = vmatpush1.bf16.msra.mxu0 %v530
    %1450 = vmatprep.subr.bf16.mxu0 0
    %1451 = vmatpush1.bf16.msra.mxu0 %v531
    %1452 = vmatprep.subr.bf16.mxu0 0
    %1453 = vmatpush1.bf16.msra.mxu0 0
    %1454 = vmatprep.subr.bf16.mxu0 0
    %1455 = vmatpush1.bf16.msra.mxu0 0
    %1456 = vmatprep.subr.bf16.mxu0 0
    %1457 = vmatpush1.bf16.msra.mxu0 0
    %1458 = vmatprep.subr.bf16.mxu0 0
    %1459 = vmatpush1.bf16.msra.mxu0 0
    %1460 = vmatprep.subr.bf16.mxu0 0
    %1461 = vmatpush1.bf16.msra.mxu0 0
    %1462 = vmatprep.subr.bf16.mxu0 0
    %1463 = vmatpush1.bf16.msra.mxu0 0
    %1464 = vmatprep.subr.bf16.mxu0 0
    %1465 = vmatpush1.bf16.msra.mxu0 0
    %1466 = vmatprep.subr.bf16.mxu0 0
    %1467 = vmatpush1.bf16.msra.mxu0 0
    %1468 = vmatprep.subr.bf16.mxu0 0
    %1469 = vmatpush1.bf16.msra.mxu0 0
    %1470 = vmatprep.subr.bf16.mxu0 0
    %1471 = vmatpush1.bf16.msra.mxu0 0
    %1472 = vmatprep.subr.bf16.mxu0 0
    %1473 = vmatpush1.bf16.msra.mxu0 0
    %1474 = vmatprep.subr.bf16.mxu0 0
    %1475 = vmatpush1.bf16.msra.mxu0 0
    %1476 = vmatprep.subr.bf16.mxu0 0
    %1477 = vmatpush1.bf16.msra.mxu0 0
    %1478 = vmatprep.subr.bf16.mxu0 0
    %1479 = vmatpush1.bf16.msra.mxu0 0
    %1480 = vmatprep.mubr.bf16.mxu0 0
    %1481 = vmatmul.mubr.bf16.gmra.mrb[0].mxu0 %v1446
    %v1482 = vpop.f32.mrb[0].mxu0
    %v1483 = vadd.f32 %v1437, %v1482
    %v1484 = vpop.f32.mrb[0].mxu0
    %v1485 = vpop.f32.mrb[0].mxu0
    %v1486 = vpop.f32.mrb[0].mxu0
    %1487 = vdwg.mxu0
    %v1488 = vadd.f32 %v1483, %v375
    %v1489 = vxor.u32 %v1488, 2147483648
    %v1490 = vmul.f32 %v1489, 1.442695
    %v1491 = vpow.pop %v1490
    %v1492 = vadd.f32 %v1491, 1.0
    %v1493 = vrcp.pop %v1492
    %v1494 = vmul.f32 1.0, %v1493
    %v1495 = vtanh.pop %v1488
    %v1496 = vmul.f32 %v1494, %v1208
    %1498 = vrot.lane.b32.xlu0 %v1495, 64
    %v1499 = vpop.permute.xlu0 %1498
    %v1501 = vmul.f32 %v1494, %v1499
    %1503 = vrot.lane.b32.xlu0 %v1501, 32
    %v1504 = vpop.permute.xlu0 %1503
    %v1506 = vadd.f32 %v1496, %v1504
    %v1507 = vtanh.pop %v1506
    %1509 = vrot.lane.b32.xlu0 %v1507, 64
    %v1510 = vpop.permute.xlu0 %1509
    %v1512 = vmul.f32 %v1494, %v1510
    %v1513 = vpack.c.bf16 %v1512, %v1512
    %v1514 = vpack.c.bf16 %v1333, %v1333
    %1516 = vrot.lane.b32.xlu0 %v1514, 32
    %v1517 = vpop.permute.xlu0 %1516
    %v1519 = vsel %vm397, %v1517, 0
    %1521 = vmatprep.subr.bf16.mxu0 0
    %1522 = vmatpush1.bf16.msra.mxu0 %v611
    %1523 = vmatprep.subr.bf16.mxu0 0
    %1524 = vmatpush1.bf16.msra.mxu0 %v612
    %1525 = vmatprep.subr.bf16.mxu0 0
    %1526 = vmatpush1.bf16.msra.mxu0 0
    %1527 = vmatprep.subr.bf16.mxu0 0
    %1528 = vmatpush1.bf16.msra.mxu0 0
    %1529 = vmatprep.subr.bf16.mxu0 0
    %1530 = vmatpush1.bf16.msra.mxu0 0
    %1531 = vmatprep.subr.bf16.mxu0 0
    %1532 = vmatpush1.bf16.msra.mxu0 0
    %1533 = vmatprep.subr.bf16.mxu0 0
    %1534 = vmatpush1.bf16.msra.mxu0 0
    %1535 = vmatprep.subr.bf16.mxu0 0
    %1536 = vmatpush1.bf16.msra.mxu0 0
    %1537 = vmatprep.subr.bf16.mxu0 0
    %1538 = vmatpush1.bf16.msra.mxu0 0
    %1539 = vmatprep.subr.bf16.mxu0 0
    %1540 = vmatpush1.bf16.msra.mxu0 0
    %1541 = vmatprep.subr.bf16.mxu0 0
    %1542 = vmatpush1.bf16.msra.mxu0 0
    %1543 = vmatprep.subr.bf16.mxu0 0
    %1544 = vmatpush1.bf16.msra.mxu0 0
    %1545 = vmatprep.subr.bf16.mxu0 0
    %1546 = vmatpush1.bf16.msra.mxu0 0
    %1547 = vmatprep.subr.bf16.mxu0 0
    %1548 = vmatpush1.bf16.msra.mxu0 0
    %1549 = vmatprep.subr.bf16.mxu0 0
    %1550 = vmatpush1.bf16.msra.mxu0 0
    %1551 = vmatprep.subr.bf16.mxu0 0
    %1552 = vmatpush1.bf16.msra.mxu0 0
    %1553 = vmatprep.mubr.bf16.mxu0 0
    %1554 = vmatmul.mubr.bf16.gmra.mrb[0].mxu0 %v1519
    %v1555 = vpop.f32.mrb[0].mxu0
    %v1556 = vadd.f32 0.0, %v1555
    %v1557 = vpop.f32.mrb[0].mxu0
    %v1558 = vpop.f32.mrb[0].mxu0
    %v1559 = vpop.f32.mrb[0].mxu0
    %1560 = vdwg.mxu0
    %1562 = vrot.lane.b32.xlu0 %v1513, 32
    %v1563 = vpop.permute.xlu0 %1562
    %v1565 = vsel %vm397, %v1563, 0
    %1567 = vmatprep.subr.bf16.mxu0 0
    %1568 = vmatpush1.bf16.msra.mxu0 %v666
    %1569 = vmatprep.subr.bf16.mxu0 0
    %1570 = vmatpush1.bf16.msra.mxu0 %v667
    %1571 = vmatprep.subr.bf16.mxu0 0
    %1572 = vmatpush1.bf16.msra.mxu0 0
    %1573 = vmatprep.subr.bf16.mxu0 0
    %1574 = vmatpush1.bf16.msra.mxu0 0
    %1575 = vmatprep.subr.bf16.mxu0 0
    %1576 = vmatpush1.bf16.msra.mxu0 0
    %1577 = vmatprep.subr.bf16.mxu0 0
    %1578 = vmatpush1.bf16.msra.mxu0 0
    %1579 = vmatprep.subr.bf16.mxu0 0
    %1580 = vmatpush1.bf16.msra.mxu0 0
    %1581 = vmatprep.subr.bf16.mxu0 0
    %1582 = vmatpush1.bf16.msra.mxu0 0
    %1583 = vmatprep.subr.bf16.mxu0 0
    %1584 = vmatpush1.bf16.msra.mxu0 0
    %1585 = vmatprep.subr.bf16.mxu0 0
    %1586 = vmatpush1.bf16.msra.mxu0 0
    %1587 = vmatprep.subr.bf16.mxu0 0
    %1588 = vmatpush1.bf16.msra.mxu0 0
    %1589 = vmatprep.subr.bf16.mxu0 0
    %1590 = vmatpush1.bf16.msra.mxu0 0
    %1591 = vmatprep.subr.bf16.mxu0 0
    %1592 = vmatpush1.bf16.msra.mxu0 0
    %1593 = vmatprep.subr.bf16.mxu0 0
    %1594 = vmatpush1.bf16.msra.mxu0 0
    %1595 = vmatprep.subr.bf16.mxu0 0
    %1596 = vmatpush1.bf16.msra.mxu0 0
    %1597 = vmatprep.subr.bf16.mxu0 0
    %1598 = vmatpush1.bf16.msra.mxu0 0
    %1599 = vmatprep.mubr.bf16.mxu0 0
    %1600 = vmatmul.mubr.bf16.gmra.mrb[0].mxu0 %v1565
    %v1601 = vpop.f32.mrb[0].mxu0
    %v1602 = vadd.f32 %v1556, %v1601
    %v1603 = vpop.f32.mrb[0].mxu0
    %v1604 = vpop.f32.mrb[0].mxu0
    %v1605 = vpop.f32.mrb[0].mxu0
    %1606 = vdwg.mxu0
    %v1607 = vadd.f32 %v1602, %v382
    %v1608 = vxor.u32 %v1607, 2147483648
    %v1609 = vmul.f32 %v1608, 1.442695
    %v1610 = vpow.pop %v1609
    %v1611 = vadd.f32 %v1610, 1.0
    %v1612 = vrcp.pop %v1611
    %v1613 = vmul.f32 1.0, %v1612
    %v1614 = vtanh.pop %v1607
    %v1615 = vmul.f32 %v1613, %v1327
    %1617 = vrot.lane.b32.xlu0 %v1614, 64
    %v1618 = vpop.permute.xlu0 %1617
    %v1620 = vmul.f32 %v1613, %v1618
    %1622 = vrot.lane.b32.xlu0 %v1620, 32
    %v1623 = vpop.permute.xlu0 %1622
    %v1625 = vadd.f32 %v1615, %v1623
    %v1626 = vtanh.pop %v1625
    %1628 = vrot.lane.b32.xlu0 %v1626, 64
    %v1629 = vpop.permute.xlu0 %1628
    %v1631 = vmul.f32 %v1613, %v1629
    %s1632 = scalar_lea.vmem [#allocation2], 32
    %v1633 = vld [vmem:[%s1632] sm:$0xff]
    %1634 = vmatprep.subr.bf16.mxu0 0
    %1635 = vmatpush1.bf16.msra.mxu0 %v393
    %1636 = vmatprep.subr.bf16.mxu0 0
    %1637 = vmatpush1.bf16.msra.mxu0 %v394
    %1638 = vmatprep.subr.bf16.mxu0 0
    %1639 = vmatpush1.bf16.msra.mxu0 0
    %1640 = vmatprep.subr.bf16.mxu0 0
    %1641 = vmatpush1.bf16.msra.mxu0 0
    %1642 = vmatprep.subr.bf16.mxu0 0
    %1643 = vmatpush1.bf16.msra.mxu0 0
    %1644 = vmatprep.subr.bf16.mxu0 0
    %1645 = vmatpush1.bf16.msra.mxu0 0
    %1646 = vmatprep.subr.bf16.mxu0 0
    %1647 = vmatpush1.bf16.msra.mxu0 0
    %1648 = vmatprep.subr.bf16.mxu0 0
    %1649 = vmatpush1.bf16.msra.mxu0 0
    %1650 = vmatprep.subr.bf16.mxu0 0
    %1651 = vmatpush1.bf16.msra.mxu0 0
    %1652 = vmatprep.subr.bf16.mxu0 0
    %1653 = vmatpush1.bf16.msra.mxu0 0
    %1654 = vmatprep.subr.bf16.mxu0 0
    %1655 = vmatpush1.bf16.msra.mxu0 0
    %1656 = vmatprep.subr.bf16.mxu0 0
    %1657 = vmatpush1.bf16.msra.mxu0 0
    %1658 = vmatprep.subr.bf16.mxu0 0
    %1659 = vmatpush1.bf16.msra.mxu0 0
    %1660 = vmatprep.subr.bf16.mxu0 0
    %1661 = vmatpush1.bf16.msra.mxu0 0
    %1662 = vmatprep.subr.bf16.mxu0 0
    %1663 = vmatpush1.bf16.msra.mxu0 0
    %1664 = vmatprep.subr.bf16.mxu0 0
    %1665 = vmatpush1.bf16.msra.mxu0 0
    %1666 = vmatprep.mubr.bf16.mxu0 0
    %1667 = vmatmul.mubr.bf16.gmra.mrb[0].mxu0 %v1446
    %v1668 = vpop.f32.mrb[0].mxu0
    %v1669 = vadd.f32 0.0, %v1668
    %v1670 = vpop.f32.mrb[0].mxu0
    %v1671 = vpop.f32.mrb[0].mxu0
    %v1672 = vpop.f32.mrb[0].mxu0
    %1673 = vdwg.mxu0
    %v1674 = vadd.f32 %v1633, %v1669
    %v1675 = vxor.u32 %v1674, 2147483648
    %v1676 = vmul.f32 %v1675, 1.442695
    %v1677 = vpow.pop %v1676
    %v1678 = vadd.f32 %v1677, 1.0
    %v1679 = vrcp.pop %v1678
    %v1680 = vmul.f32 1.0, %v1679
    %v1681 = vtanh.pop %v1674
    %v1682 = vmul.f32 %v1680, %v1394
    %1684 = vrot.lane.b32.xlu0 %v1681, 64
    %v1685 = vpop.permute.xlu0 %1684
    %v1687 = vmul.f32 %v1680, %v1685
    %1689 = vrot.lane.b32.xlu0 %v1687, 32
    %v1690 = vpop.permute.xlu0 %1689
    %v1692 = vadd.f32 %v1682, %v1690
    %v1693 = vtanh.pop %v1692
    %1695 = vrot.lane.b32.xlu0 %v1693, 64
    %v1696 = vpop.permute.xlu0 %1695
    %v1698 = vmul.f32 %v1680, %v1696
    %v1699 = vpack.c.bf16 %v1698, %v1698
    %1700 = vmatprep.subr.bf16.mxu0 0
    %1701 = vmatpush1.bf16.msra.mxu0 %v475
    %1702 = vmatprep.subr.bf16.mxu0 0
    %1703 = vmatpush1.bf16.msra.mxu0 %v476
    %1704 = vmatprep.subr.bf16.mxu0 0
    %1705 = vmatpush1.bf16.msra.mxu0 0
    %1706 = vmatprep.subr.bf16.mxu0 0
    %1707 = vmatpush1.bf16.msra.mxu0 0
    %1708 = vmatprep.subr.bf16.mxu0 0
    %1709 = vmatpush1.bf16.msra.mxu0 0
    %1710 = vmatprep.subr.bf16.mxu0 0
    %1711 = vmatpush1.bf16.msra.mxu0 0
    %1712 = vmatprep.subr.bf16.mxu0 0
    %1713 = vmatpush1.bf16.msra.mxu0 0
    %1714 = vmatprep.subr.bf16.mxu0 0
    %1715 = vmatpush1.bf16.msra.mxu0 0
    %1716 = vmatprep.subr.bf16.mxu0 0
    %1717 = vmatpush1.bf16.msra.mxu0 0
    %1718 = vmatprep.subr.bf16.mxu0 0
    %1719 = vmatpush1.bf16.msra.mxu0 0
    %1720 = vmatprep.subr.bf16.mxu0 0
    %1721 = vmatpush1.bf16.msra.mxu0 0
    %1722 = vmatprep.subr.bf16.mxu0 0
    %1723 = vmatpush1.bf16.msra.mxu0 0
    %1724 = vmatprep.subr.bf16.mxu0 0
    %1725 = vmatpush1.bf16.msra.mxu0 0
    %1726 = vmatprep.subr.bf16.mxu0 0
    %1727 = vmatpush1.bf16.msra.mxu0 0
    %1728 = vmatprep.subr.bf16.mxu0 0
    %1729 = vmatpush1.bf16.msra.mxu0 0
    %1730 = vmatprep.subr.bf16.mxu0 0
    %1731 = vmatpush1.bf16.msra.mxu0 0
    %1732 = vmatprep.mubr.bf16.mxu0 0
    %1733 = vmatmul.mubr.bf16.gmra.mrb[0].mxu0 %v1565
    %v1734 = vpop.f32.mrb[0].mxu0
    %v1735 = vadd.f32 0.0, %v1734
    %v1736 = vpop.f32.mrb[0].mxu0
    %v1737 = vpop.f32.mrb[0].mxu0
    %v1738 = vpop.f32.mrb[0].mxu0
    %1739 = vdwg.mxu0
    %1741 = vrot.lane.b32.xlu0 %v1699, 32
    %v1742 = vpop.permute.xlu0 %1741
    %v1744 = vsel %vm397, %v1742, 0
    %1746 = vmatprep.subr.bf16.mxu0 0
    %1747 = vmatpush1.bf16.msra.mxu0 %v530
    %1748 = vmatprep.subr.bf16.mxu0 0
    %1749 = vmatpush1.bf16.msra.mxu0 %v531
    %1750 = vmatprep.subr.bf16.mxu0 0
    %1751 = vmatpush1.bf16.msra.mxu0 0
    %1752 = vmatprep.subr.bf16.mxu0 0
    %1753 = vmatpush1.bf16.msra.mxu0 0
    %1754 = vmatprep.subr.bf16.mxu0 0
    %1755 = vmatpush1.bf16.msra.mxu0 0
    %1756 = vmatprep.subr.bf16.mxu0 0
    %1757 = vmatpush1.bf16.msra.mxu0 0
    %1758 = vmatprep.subr.bf16.mxu0 0
    %1759 = vmatpush1.bf16.msra.mxu0 0
    %1760 = vmatprep.subr.bf16.mxu0 0
    %1761 = vmatpush1.bf16.msra.mxu0 0
    %1762 = vmatprep.subr.bf16.mxu0 0
    %1763 = vmatpush1.bf16.msra.mxu0 0
    %1764 = vmatprep.subr.bf16.mxu0 0
    %1765 = vmatpush1.bf16.msra.mxu0 0
    %1766 = vmatprep.subr.bf16.mxu0 0
    %1767 = vmatpush1.bf16.msra.mxu0 0
    %1768 = vmatprep.subr.bf16.mxu0 0
    %1769 = vmatpush1.bf16.msra.mxu0 0
    %1770 = vmatprep.subr.bf16.mxu0 0
    %1771 = vmatpush1.bf16.msra.mxu0 0
    %1772 = vmatprep.subr.bf16.mxu0 0
    %1773 = vmatpush1.bf16.msra.mxu0 0
    %1774 = vmatprep.subr.bf16.mxu0 0
    %1775 = vmatpush1.bf16.msra.mxu0 0
    %1776 = vmatprep.subr.bf16.mxu0 0
    %1777 = vmatpush1.bf16.msra.mxu0 0
    %1778 = vmatprep.mubr.bf16.mxu0 0
    %1779 = vmatmul.mubr.bf16.gmra.mrb[0].mxu0 %v1744
    %v1780 = vpop.f32.mrb[0].mxu0
    %v1781 = vadd.f32 %v1735, %v1780
    %v1782 = vpop.f32.mrb[0].mxu0
    %v1783 = vpop.f32.mrb[0].mxu0
    %v1784 = vpop.f32.mrb[0].mxu0
    %1785 = vdwg.mxu0
    %v1786 = vadd.f32 %v1781, %v375
    %v1787 = vxor.u32 %v1786, 2147483648
    %v1788 = vmul.f32 %v1787, 1.442695
    %v1789 = vpow.pop %v1788
    %v1790 = vadd.f32 %v1789, 1.0
    %v1791 = vrcp.pop %v1790
    %v1792 = vmul.f32 1.0, %v1791
    %v1793 = vtanh.pop %v1786
    %v1794 = vmul.f32 %v1792, %v1506
    %1796 = vrot.lane.b32.xlu0 %v1793, 64
    %v1797 = vpop.permute.xlu0 %1796
    %v1799 = vmul.f32 %v1792, %v1797
    %1801 = vrot.lane.b32.xlu0 %v1799, 32
    %v1802 = vpop.permute.xlu0 %1801
    %v1804 = vadd.f32 %v1794, %v1802
    %v1805 = vtanh.pop %v1804
    %1807 = vrot.lane.b32.xlu0 %v1805, 64
    %v1808 = vpop.permute.xlu0 %1807
    %v1810 = vmul.f32 %v1792, %v1808
    %v1811 = vpack.c.bf16 %v1810, %v1810
    %v1812 = vpack.c.bf16 %v1631, %v1631
    %1814 = vrot.lane.b32.xlu0 %v1812, 32
    %v1815 = vpop.permute.xlu0 %1814
    %v1817 = vsel %vm397, %v1815, 0
    %1819 = vmatprep.subr.bf16.mxu0 0
    %1820 = vmatpush1.bf16.msra.mxu0 %v611
    %1821 = vmatprep.subr.bf16.mxu0 0
    %1822 = vmatpush1.bf16.msra.mxu0 %v612
    %1823 = vmatprep.subr.bf16.mxu0 0
    %1824 = vmatpush1.bf16.msra.mxu0 0
    %1825 = vmatprep.subr.bf16.mxu0 0
    %1826 = vmatpush1.bf16.msra.mxu0 0
    %1827 = vmatprep.subr.bf16.mxu0 0
    %1828 = vmatpush1.bf16.msra.mxu0 0
    %1829 = vmatprep.subr.bf16.mxu0 0
    %1830 = vmatpush1.bf16.msra.mxu0 0
    %1831 = vmatprep.subr.bf16.mxu0 0
    %1832 = vmatpush1.bf16.msra.mxu0 0
    %1833 = vmatprep.subr.bf16.mxu0 0
    %1834 = vmatpush1.bf16.msra.mxu0 0
    %1835 = vmatprep.subr.bf16.mxu0 0
    %1836 = vmatpush1.bf16.msra.mxu0 0
    %1837 = vmatprep.subr.bf16.mxu0 0
    %1838 = vmatpush1.bf16.msra.mxu0 0
    %1839 = vmatprep.subr.bf16.mxu0 0
    %1840 = vmatpush1.bf16.msra.mxu0 0
    %1841 = vmatprep.subr.bf16.mxu0 0
    %1842 = vmatpush1.bf16.msra.mxu0 0
    %1843 = vmatprep.subr.bf16.mxu0 0
    %1844 = vmatpush1.bf16.msra.mxu0 0
    %1845 = vmatprep.subr.bf16.mxu0 0
    %1846 = vmatpush1.bf16.msra.mxu0 0
    %1847 = vmatprep.subr.bf16.mxu0 0
    %1848 = vmatpush1.bf16.msra.mxu0 0
    %1849 = vmatprep.subr.bf16.mxu0 0
    %1850 = vmatpush1.bf16.msra.mxu0 0
    %1851 = vmatprep.mubr.bf16.mxu0 0
    %1852 = vmatmul.mubr.bf16.gmra.mrb[0].mxu0 %v1817
    %v1853 = vpop.f32.mrb[0].mxu0
    %v1854 = vadd.f32 0.0, %v1853
    %v1855 = vpop.f32.mrb[0].mxu0
    %v1856 = vpop.f32.mrb[0].mxu0
    %v1857 = vpop.f32.mrb[0].mxu0
    %1858 = vdwg.mxu0
    %1860 = vrot.lane.b32.xlu0 %v1811, 32
    %v1861 = vpop.permute.xlu0 %1860
    %v1863 = vsel %vm397, %v1861, 0
    %1865 = vmatprep.subr.bf16.mxu0 0
    %1866 = vmatpush1.bf16.msra.mxu0 %v666
    %1867 = vmatprep.subr.bf16.mxu0 0
    %1868 = vmatpush1.bf16.msra.mxu0 %v667
    %1869 = vmatprep.subr.bf16.mxu0 0
    %1870 = vmatpush1.bf16.msra.mxu0 0
    %1871 = vmatprep.subr.bf16.mxu0 0
    %1872 = vmatpush1.bf16.msra.mxu0 0
    %1873 = vmatprep.subr.bf16.mxu0 0
    %1874 = vmatpush1.bf16.msra.mxu0 0
    %1875 = vmatprep.subr.bf16.mxu0 0
    %1876 = vmatpush1.bf16.msra.mxu0 0
    %1877 = vmatprep.subr.bf16.mxu0 0
    %1878 = vmatpush1.bf16.msra.mxu0 0
    %1879 = vmatprep.subr.bf16.mxu0 0
    %1880 = vmatpush1.bf16.msra.mxu0 0
    %1881 = vmatprep.subr.bf16.mxu0 0
    %1882 = vmatpush1.bf16.msra.mxu0 0
    %1883 = vmatprep.subr.bf16.mxu0 0
    %1884 = vmatpush1.bf16.msra.mxu0 0
    %1885 = vmatprep.subr.bf16.mxu0 0
    %1886 = vmatpush1.bf16.msra.mxu0 0
    %1887 = vmatprep.subr.bf16.mxu0 0
    %1888 = vmatpush1.bf16.msra.mxu0 0
    %1889 = vmatprep.subr.bf16.mxu0 0
    %1890 = vmatpush1.bf16.msra.mxu0 0
    %1891 = vmatprep.subr.bf16.mxu0 0
    %1892 = vmatpush1.bf16.msra.mxu0 0
    %1893 = vmatprep.subr.bf16.mxu0 0
    %1894 = vmatpush1.bf16.msra.mxu0 0
    %1895 = vmatprep.subr.bf16.mxu0 0
    %1896 = vmatpush1.bf16.msra.mxu0 0
    %1897 = vmatprep.mubr.bf16.mxu0 0
    %1898 = vmatmul.mubr.bf16.gmra.mrb[0].mxu0 %v1863
    %v1899 = vpop.f32.mrb[0].mxu0
    %v1900 = vadd.f32 %v1854, %v1899
    %v1901 = vpop.f32.mrb[0].mxu0
    %v1902 = vpop.f32.mrb[0].mxu0
    %v1903 = vpop.f32.mrb[0].mxu0
    %1904 = vdwg.mxu0
    %v1905 = vadd.f32 %v1900, %v382
    %v1906 = vxor.u32 %v1905, 2147483648
    %v1907 = vmul.f32 %v1906, 1.442695
    %v1908 = vpow.pop %v1907
    %v1909 = vadd.f32 %v1908, 1.0
    %v1910 = vrcp.pop %v1909
    %v1911 = vmul.f32 1.0, %v1910
    %v1912 = vtanh.pop %v1905
    %v1913 = vmul.f32 %v1911, %v1625
    %1915 = vrot.lane.b32.xlu0 %v1912, 64
    %v1916 = vpop.permute.xlu0 %1915
    %v1918 = vmul.f32 %v1911, %v1916
    %1920 = vrot.lane.b32.xlu0 %v1918, 32
    %v1921 = vpop.permute.xlu0 %1920
    %v1923 = vadd.f32 %v1913, %v1921
    %v1924 = vtanh.pop %v1923
    %1926 = vrot.lane.b32.xlu0 %v1924, 64
    %v1927 = vpop.permute.xlu0 %1926
    %v1929 = vmul.f32 %v1911, %v1927
    %s1930 = scalar_lea.vmem [#allocation2], 40
    %v1931 = vld [vmem:[%s1930] sm:$0xff]
    %1932 = vmatprep.subr.bf16.mxu0 0
    %1933 = vmatpush1.bf16.msra.mxu0 %v393
    %1934 = vmatprep.subr.bf16.mxu0 0
    %1935 = vmatpush1.bf16.msra.mxu0 %v394
    %1936 = vmatprep.subr.bf16.mxu0 0
    %1937 = vmatpush1.bf16.msra.mxu0 0
    %1938 = vmatprep.subr.bf16.mxu0 0
    %1939 = vmatpush1.bf16.msra.mxu0 0
    %1940 = vmatprep.subr.bf16.mxu0 0
    %1941 = vmatpush1.bf16.msra.mxu0 0
    %1942 = vmatprep.subr.bf16.mxu0 0
    %1943 = vmatpush1.bf16.msra.mxu0 0
    %1944 = vmatprep.subr.bf16.mxu0 0
    %1945 = vmatpush1.bf16.msra.mxu0 0
    %1946 = vmatprep.subr.bf16.mxu0 0
    %1947 = vmatpush1.bf16.msra.mxu0 0
    %1948 = vmatprep.subr.bf16.mxu0 0
    %1949 = vmatpush1.bf16.msra.mxu0 0
    %1950 = vmatprep.subr.bf16.mxu0 0
    %1951 = vmatpush1.bf16.msra.mxu0 0
    %1952 = vmatprep.subr.bf16.mxu0 0
    %1953 = vmatpush1.bf16.msra.mxu0 0
    %1954 = vmatprep.subr.bf16.mxu0 0
    %1955 = vmatpush1.bf16.msra.mxu0 0
    %1956 = vmatprep.subr.bf16.mxu0 0
    %1957 = vmatpush1.bf16.msra.mxu0 0
    %1958 = vmatprep.subr.bf16.mxu0 0
    %1959 = vmatpush1.bf16.msra.mxu0 0
    %1960 = vmatprep.subr.bf16.mxu0 0
    %1961 = vmatpush1.bf16.msra.mxu0 0
    %1962 = vmatprep.subr.bf16.mxu0 0
    %1963 = vmatpush1.bf16.msra.mxu0 0
    %1964 = vmatprep.mubr.bf16.mxu0 0
    %1965 = vmatmul.mubr.bf16.gmra.mrb[0].mxu0 %v1744
    %v1966 = vpop.f32.mrb[0].mxu0
    %v1967 = vadd.f32 0.0, %v1966
    %v1968 = vpop.f32.mrb[0].mxu0
    %v1969 = vpop.f32.mrb[0].mxu0
    %v1970 = vpop.f32.mrb[0].mxu0
    %1971 = vdwg.mxu0
    %v1972 = vadd.f32 %v1931, %v1967
    %v1973 = vxor.u32 %v1972, 2147483648
    %v1974 = vmul.f32 %v1973, 1.442695
    %v1975 = vpow.pop %v1974
    %v1976 = vadd.f32 %v1975, 1.0
    %v1977 = vrcp.pop %v1976
    %v1978 = vmul.f32 1.0, %v1977
    %v1979 = vtanh.pop %v1972
    %v1980 = vmul.f32 %v1978, %v1692
    %1982 = vrot.lane.b32.xlu0 %v1979, 64
    %v1983 = vpop.permute.xlu0 %1982
    %v1985 = vmul.f32 %v1978, %v1983
    %1987 = vrot.lane.b32.xlu0 %v1985, 32
    %v1988 = vpop.permute.xlu0 %1987
    %v1990 = vadd.f32 %v1980, %v1988
    %v1991 = vtanh.pop %v1990
    %1993 = vrot.lane.b32.xlu0 %v1991, 64
    %v1994 = vpop.permute.xlu0 %1993
    %v1996 = vmul.f32 %v1978, %v1994
    %v1997 = vpack.c.bf16 %v1996, %v1996
    %1998 = vmatprep.subr.bf16.mxu0 0
    %1999 = vmatpush1.bf16.msra.mxu0 %v475
    %2000 = vmatprep.subr.bf16.mxu0 0
    %2001 = vmatpush1.bf16.msra.mxu0 %v476
    %2002 = vmatprep.subr.bf16.mxu0 0
    %2003 = vmatpush1.bf16.msra.mxu0 0
    %2004 = vmatprep.subr.bf16.mxu0 0
    %2005 = vmatpush1.bf16.msra.mxu0 0
    %2006 = vmatprep.subr.bf16.mxu0 0
    %2007 = vmatpush1.bf16.msra.mxu0 0
    %2008 = vmatprep.subr.bf16.mxu0 0
    %2009 = vmatpush1.bf16.msra.mxu0 0
    %2010 = vmatprep.subr.bf16.mxu0 0
    %2011 = vmatpush1.bf16.msra.mxu0 0
    %2012 = vmatprep.subr.bf16.mxu0 0
    %2013 = vmatpush1.bf16.msra.mxu0 0
    %2014 = vmatprep.subr.bf16.mxu0 0
    %2015 = vmatpush1.bf16.msra.mxu0 0
    %2016 = vmatprep.subr.bf16.mxu0 0
    %2017 = vmatpush1.bf16.msra.mxu0 0
    %2018 = vmatprep.subr.bf16.mxu0 0
    %2019 = vmatpush1.bf16.msra.mxu0 0
    %2020 = vmatprep.subr.bf16.mxu0 0
    %2021 = vmatpush1.bf16.msra.mxu0 0
    %2022 = vmatprep.subr.bf16.mxu0 0
    %2023 = vmatpush1.bf16.msra.mxu0 0
    %2024 = vmatprep.subr.bf16.mxu0 0
    %2025 = vmatpush1.bf16.msra.mxu0 0
    %2026 = vmatprep.subr.bf16.mxu0 0
    %2027 = vmatpush1.bf16.msra.mxu0 0
    %2028 = vmatprep.subr.bf16.mxu0 0
    %2029 = vmatpush1.bf16.msra.mxu0 0
    %2030 = vmatprep.mubr.bf16.mxu0 0
    %2031 = vmatmul.mubr.bf16.gmra.mrb[0].mxu0 %v1863
    %v2032 = vpop.f32.mrb[0].mxu0
    %v2033 = vadd.f32 0.0, %v2032
    %v2034 = vpop.f32.mrb[0].mxu0
    %v2035 = vpop.f32.mrb[0].mxu0
    %v2036 = vpop.f32.mrb[0].mxu0
    %2037 = vdwg.mxu0
    %2039 = vrot.lane.b32.xlu0 %v1997, 32
    %v2040 = vpop.permute.xlu0 %2039
    %v2042 = vsel %vm397, %v2040, 0
    %2044 = vmatprep.subr.bf16.mxu0 0
    %2045 = vmatpush1.bf16.msra.mxu0 %v530
    %2046 = vmatprep.subr.bf16.mxu0 0
    %2047 = vmatpush1.bf16.msra.mxu0 %v531
    %2048 = vmatprep.subr.bf16.mxu0 0
    %2049 = vmatpush1.bf16.msra.mxu0 0
    %2050 = vmatprep.subr.bf16.mxu0 0
    %2051 = vmatpush1.bf16.msra.mxu0 0
    %2052 = vmatprep.subr.bf16.mxu0 0
    %2053 = vmatpush1.bf16.msra.mxu0 0
    %2054 = vmatprep.subr.bf16.mxu0 0
    %2055 = vmatpush1.bf16.msra.mxu0 0
    %2056 = vmatprep.subr.bf16.mxu0 0
    %2057 = vmatpush1.bf16.msra.mxu0 0
    %2058 = vmatprep.subr.bf16.mxu0 0
    %2059 = vmatpush1.bf16.msra.mxu0 0
    %2060 = vmatprep.subr.bf16.mxu0 0
    %2061 = vmatpush1.bf16.msra.mxu0 0
    %2062 = vmatprep.subr.bf16.mxu0 0
    %2063 = vmatpush1.bf16.msra.mxu0 0
    %2064 = vmatprep.subr.bf16.mxu0 0
    %2065 = vmatpush1.bf16.msra.mxu0 0
    %2066 = vmatprep.subr.bf16.mxu0 0
    %2067 = vmatpush1.bf16.msra.mxu0 0
    %2068 = vmatprep.subr.bf16.mxu0 0
    %2069 = vmatpush1.bf16.msra.mxu0 0
    %2070 = vmatprep.subr.bf16.mxu0 0
    %2071 = vmatpush1.bf16.msra.mxu0 0
    %2072 = vmatprep.subr.bf16.mxu0 0
    %2073 = vmatpush1.bf16.msra.mxu0 0
    %2074 = vmatprep.subr.bf16.mxu0 0
    %2075 = vmatpush1.bf16.msra.mxu0 0
    %2076 = vmatprep.mubr.bf16.mxu0 0
    %2077 = vmatmul.mubr.bf16.gmra.mrb[0].mxu0 %v2042
    %v2078 = vpop.f32.mrb[0].mxu0
    %v2079 = vadd.f32 %v2033, %v2078
    %v2080 = vpop.f32.mrb[0].mxu0
    %v2081 = vpop.f32.mrb[0].mxu0
    %v2082 = vpop.f32.mrb[0].mxu0
    %2083 = vdwg.mxu0
    %v2084 = vadd.f32 %v2079, %v375
    %v2085 = vxor.u32 %v2084, 2147483648
    %v2086 = vmul.f32 %v2085, 1.442695
    %v2087 = vpow.pop %v2086
    %v2088 = vadd.f32 %v2087, 1.0
    %v2089 = vrcp.pop %v2088
    %v2090 = vmul.f32 1.0, %v2089
    %v2091 = vtanh.pop %v2084
    %v2092 = vmul.f32 %v2090, %v1804
    %2094 = vrot.lane.b32.xlu0 %v2091, 64
    %v2095 = vpop.permute.xlu0 %2094
    %v2097 = vmul.f32 %v2090, %v2095
    %2099 = vrot.lane.b32.xlu0 %v2097, 32
    %v2100 = vpop.permute.xlu0 %2099
    %v2102 = vadd.f32 %v2092, %v2100
    %v2103 = vtanh.pop %v2102
    %2105 = vrot.lane.b32.xlu0 %v2103, 64
    %v2106 = vpop.permute.xlu0 %2105
    %v2108 = vmul.f32 %v2090, %v2106
    %v2109 = vpack.c.bf16 %v2108, %v2108
    %v2110 = vpack.c.bf16 %v1929, %v1929
    %2112 = vrot.lane.b32.xlu0 %v2110, 32
    %v2113 = vpop.permute.xlu0 %2112
    %v2115 = vsel %vm397, %v2113, 0
    %2117 = vmatprep.subr.bf16.mxu0 0
    %2118 = vmatpush1.bf16.msra.mxu0 %v611
    %2119 = vmatprep.subr.bf16.mxu0 0
    %2120 = vmatpush1.bf16.msra.mxu0 %v612
    %2121 = vmatprep.subr.bf16.mxu0 0
    %2122 = vmatpush1.bf16.msra.mxu0 0
    %2123 = vmatprep.subr.bf16.mxu0 0
    %2124 = vmatpush1.bf16.msra.mxu0 0
    %2125 = vmatprep.subr.bf16.mxu0 0
    %2126 = vmatpush1.bf16.msra.mxu0 0
    %2127 = vmatprep.subr.bf16.mxu0 0
    %2128 = vmatpush1.bf16.msra.mxu0 0
    %2129 = vmatprep.subr.bf16.mxu0 0
    %2130 = vmatpush1.bf16.msra.mxu0 0
    %2131 = vmatprep.subr.bf16.mxu0 0
    %2132 = vmatpush1.bf16.msra.mxu0 0
    %2133 = vmatprep.subr.bf16.mxu0 0
    %2134 = vmatpush1.bf16.msra.mxu0 0
    %2135 = vmatprep.subr.bf16.mxu0 0
    %2136 = vmatpush1.bf16.msra.mxu0 0
    %2137 = vmatprep.subr.bf16.mxu0 0
    %2138 = vmatpush1.bf16.msra.mxu0 0
    %2139 = vmatprep.subr.bf16.mxu0 0
    %2140 = vmatpush1.bf16.msra.mxu0 0
    %2141 = vmatprep.subr.bf16.mxu0 0
    %2142 = vmatpush1.bf16.msra.mxu0 0
    %2143 = vmatprep.subr.bf16.mxu0 0
    %2144 = vmatpush1.bf16.msra.mxu0 0
    %2145 = vmatprep.subr.bf16.mxu0 0
    %2146 = vmatpush1.bf16.msra.mxu0 0
    %2147 = vmatprep.subr.bf16.mxu0 0
    %2148 = vmatpush1.bf16.msra.mxu0 0
    %2149 = vmatprep.mubr.bf16.mxu0 0
    %2150 = vmatmul.mubr.bf16.gmra.mrb[0].mxu0 %v2115
    %v2151 = vpop.f32.mrb[0].mxu0
    %v2152 = vadd.f32 0.0, %v2151
    %v2153 = vpop.f32.mrb[0].mxu0
    %v2154 = vpop.f32.mrb[0].mxu0
    %v2155 = vpop.f32.mrb[0].mxu0
    %2156 = vdwg.mxu0
    %2158 = vrot.lane.b32.xlu0 %v2109, 32
    %v2159 = vpop.permute.xlu0 %2158
    %v2161 = vsel %vm397, %v2159, 0
    %2163 = vmatprep.subr.bf16.mxu0 0
    %2164 = vmatpush1.bf16.msra.mxu0 %v666
    %2165 = vmatprep.subr.bf16.mxu0 0
    %2166 = vmatpush1.bf16.msra.mxu0 %v667
    %2167 = vmatprep.subr.bf16.mxu0 0
    %2168 = vmatpush1.bf16.msra.mxu0 0
    %2169 = vmatprep.subr.bf16.mxu0 0
    %2170 = vmatpush1.bf16.msra.mxu0 0
    %2171 = vmatprep.subr.bf16.mxu0 0
    %2172 = vmatpush1.bf16.msra.mxu0 0
    %2173 = vmatprep.subr.bf16.mxu0 0
    %2174 = vmatpush1.bf16.msra.mxu0 0
    %2175 = vmatprep.subr.bf16.mxu0 0
    %2176 = vmatpush1.bf16.msra.mxu0 0
    %2177 = vmatprep.subr.bf16.mxu0 0
    %2178 = vmatpush1.bf16.msra.mxu0 0
    %2179 = vmatprep.subr.bf16.mxu0 0
    %2180 = vmatpush1.bf16.msra.mxu0 0
    %2181 = vmatprep.subr.bf16.mxu0 0
    %2182 = vmatpush1.bf16.msra.mxu0 0
    %2183 = vmatprep.subr.bf16.mxu0 0
    %2184 = vmatpush1.bf16.msra.mxu0 0
    %2185 = vmatprep.subr.bf16.mxu0 0
    %2186 = vmatpush1.bf16.msra.mxu0 0
    %2187 = vmatprep.subr.bf16.mxu0 0
    %2188 = vmatpush1.bf16.msra.mxu0 0
    %2189 = vmatprep.subr.bf16.mxu0 0
    %2190 = vmatpush1.bf16.msra.mxu0 0
    %2191 = vmatprep.subr.bf16.mxu0 0
    %2192 = vmatpush1.bf16.msra.mxu0 0
    %2193 = vmatprep.subr.bf16.mxu0 0
    %2194 = vmatpush1.bf16.msra.mxu0 0
    %2195 = vmatprep.mubr.bf16.mxu0 0
    %2196 = vmatmul.mubr.bf16.gmra.mrb[0].mxu0 %v2161
    %v2197 = vpop.f32.mrb[0].mxu0
    %v2198 = vadd.f32 %v2152, %v2197
    %v2199 = vpop.f32.mrb[0].mxu0
    %v2200 = vpop.f32.mrb[0].mxu0
    %v2201 = vpop.f32.mrb[0].mxu0
    %2202 = vdwg.mxu0
    %v2203 = vadd.f32 %v2198, %v382
    %v2204 = vxor.u32 %v2203, 2147483648
    %v2205 = vmul.f32 %v2204, 1.442695
    %v2206 = vpow.pop %v2205
    %v2207 = vadd.f32 %v2206, 1.0
    %v2208 = vrcp.pop %v2207
    %v2209 = vmul.f32 1.0, %v2208
    %v2210 = vtanh.pop %v2203
    %v2211 = vmul.f32 %v2209, %v1923
    %2213 = vrot.lane.b32.xlu0 %v2210, 64
    %v2214 = vpop.permute.xlu0 %2213
    %v2216 = vmul.f32 %v2209, %v2214
    %2218 = vrot.lane.b32.xlu0 %v2216, 32
    %v2219 = vpop.permute.xlu0 %2218
    %v2221 = vadd.f32 %v2211, %v2219
    %v2222 = vtanh.pop %v2221
    %2224 = vrot.lane.b32.xlu0 %v2222, 64
    %v2225 = vpop.permute.xlu0 %2224
    %v2227 = vmul.f32 %v2209, %v2225
    %s2228 = scalar_lea.vmem [#allocation2], 48
    %v2229 = vld [vmem:[%s2228] sm:$0xff]
    %2230 = vmatprep.subr.bf16.mxu0 0
    %2231 = vmatpush1.bf16.msra.mxu0 %v393
    %2232 = vmatprep.subr.bf16.mxu0 0
    %2233 = vmatpush1.bf16.msra.mxu0 %v394
    %2234 = vmatprep.subr.bf16.mxu0 0
    %2235 = vmatpush1.bf16.msra.mxu0 0
    %2236 = vmatprep.subr.bf16.mxu0 0
    %2237 = vmatpush1.bf16.msra.mxu0 0
    %2238 = vmatprep.subr.bf16.mxu0 0
    %2239 = vmatpush1.bf16.msra.mxu0 0
    %2240 = vmatprep.subr.bf16.mxu0 0
    %2241 = vmatpush1.bf16.msra.mxu0 0
    %2242 = vmatprep.subr.bf16.mxu0 0
    %2243 = vmatpush1.bf16.msra.mxu0 0
    %2244 = vmatprep.subr.bf16.mxu0 0
    %2245 = vmatpush1.bf16.msra.mxu0 0
    %2246 = vmatprep.subr.bf16.mxu0 0
    %2247 = vmatpush1.bf16.msra.mxu0 0
    %2248 = vmatprep.subr.bf16.mxu0 0
    %2249 = vmatpush1.bf16.msra.mxu0 0
    %2250 = vmatprep.subr.bf16.mxu0 0
    %2251 = vmatpush1.bf16.msra.mxu0 0
    %2252 = vmatprep.subr.bf16.mxu0 0
    %2253 = vmatpush1.bf16.msra.mxu0 0
    %2254 = vmatprep.subr.bf16.mxu0 0
    %2255 = vmatpush1.bf16.msra.mxu0 0
    %2256 = vmatprep.subr.bf16.mxu0 0
    %2257 = vmatpush1.bf16.msra.mxu0 0
    %2258 = vmatprep.subr.bf16.mxu0 0
    %2259 = vmatpush1.bf16.msra.mxu0 0
    %2260 = vmatprep.subr.bf16.mxu0 0
    %2261 = vmatpush1.bf16.msra.mxu0 0
    %2262 = vmatprep.mubr.bf16.mxu0 0
    %2263 = vmatmul.mubr.bf16.gmra.mrb[0].mxu0 %v2042
    %v2264 = vpop.f32.mrb[0].mxu0
    %v2265 = vadd.f32 0.0, %v2264
    %v2266 = vpop.f32.mrb[0].mxu0
    %v2267 = vpop.f32.mrb[0].mxu0
    %v2268 = vpop.f32.mrb[0].mxu0
    %2269 = vdwg.mxu0
    %v2270 = vadd.f32 %v2229, %v2265
    %v2271 = vxor.u32 %v2270, 2147483648
    %v2272 = vmul.f32 %v2271, 1.442695
    %v2273 = vpow.pop %v2272
    %v2274 = vadd.f32 %v2273, 1.0
    %v2275 = vrcp.pop %v2274
    %v2276 = vmul.f32 1.0, %v2275
    %v2277 = vtanh.pop %v2270
    %v2278 = vmul.f32 %v2276, %v1990
    %2280 = vrot.lane.b32.xlu0 %v2277, 64
    %v2281 = vpop.permute.xlu0 %2280
    %v2283 = vmul.f32 %v2276, %v2281
    %2285 = vrot.lane.b32.xlu0 %v2283, 32
    %v2286 = vpop.permute.xlu0 %2285
    %v2288 = vadd.f32 %v2278, %v2286
    %v2289 = vtanh.pop %v2288
    %2291 = vrot.lane.b32.xlu0 %v2289, 64
    %v2292 = vpop.permute.xlu0 %2291
    %v2294 = vmul.f32 %v2276, %v2292
    %v2295 = vpack.c.bf16 %v2294, %v2294
    %2296 = vmatprep.subr.bf16.mxu0 0
    %2297 = vmatpush1.bf16.msra.mxu0 %v475
    %2298 = vmatprep.subr.bf16.mxu0 0
    %2299 = vmatpush1.bf16.msra.mxu0 %v476
    %2300 = vmatprep.subr.bf16.mxu0 0
    %2301 = vmatpush1.bf16.msra.mxu0 0
    %2302 = vmatprep.subr.bf16.mxu0 0
    %2303 = vmatpush1.bf16.msra.mxu0 0
    %2304 = vmatprep.subr.bf16.mxu0 0
    %2305 = vmatpush1.bf16.msra.mxu0 0
    %2306 = vmatprep.subr.bf16.mxu0 0
    %2307 = vmatpush1.bf16.msra.mxu0 0
    %2308 = vmatprep.subr.bf16.mxu0 0
    %2309 = vmatpush1.bf16.msra.mxu0 0
    %2310 = vmatprep.subr.bf16.mxu0 0
    %2311 = vmatpush1.bf16.msra.mxu0 0
    %2312 = vmatprep.subr.bf16.mxu0 0
    %2313 = vmatpush1.bf16.msra.mxu0 0
    %2314 = vmatprep.subr.bf16.mxu0 0
    %2315 = vmatpush1.bf16.msra.mxu0 0
    %2316 = vmatprep.subr.bf16.mxu0 0
    %2317 = vmatpush1.bf16.msra.mxu0 0
    %2318 = vmatprep.subr.bf16.mxu0 0
    %2319 = vmatpush1.bf16.msra.mxu0 0
    %2320 = vmatprep.subr.bf16.mxu0 0
    %2321 = vmatpush1.bf16.msra.mxu0 0
    %2322 = vmatprep.subr.bf16.mxu0 0
    %2323 = vmatpush1.bf16.msra.mxu0 0
    %2324 = vmatprep.subr.bf16.mxu0 0
    %2325 = vmatpush1.bf16.msra.mxu0 0
    %2326 = vmatprep.subr.bf16.mxu0 0
    %2327 = vmatpush1.bf16.msra.mxu0 0
    %2328 = vmatprep.mubr.bf16.mxu0 0
    %2329 = vmatmul.mubr.bf16.gmra.mrb[0].mxu0 %v2161
    %v2330 = vpop.f32.mrb[0].mxu0
    %v2331 = vadd.f32 0.0, %v2330
    %v2332 = vpop.f32.mrb[0].mxu0
    %v2333 = vpop.f32.mrb[0].mxu0
    %v2334 = vpop.f32.mrb[0].mxu0
    %2335 = vdwg.mxu0
    %2337 = vrot.lane.b32.xlu0 %v2295, 32
    %v2338 = vpop.permute.xlu0 %2337
    %v2340 = vsel %vm397, %v2338, 0
    %2342 = vmatprep.subr.bf16.mxu0 0
    %2343 = vmatpush1.bf16.msra.mxu0 %v530
    %2344 = vmatprep.subr.bf16.mxu0 0
    %2345 = vmatpush1.bf16.msra.mxu0 %v531
    %2346 = vmatprep.subr.bf16.mxu0 0
    %2347 = vmatpush1.bf16.msra.mxu0 0
    %2348 = vmatprep.subr.bf16.mxu0 0
    %2349 = vmatpush1.bf16.msra.mxu0 0
    %2350 = vmatprep.subr.bf16.mxu0 0
    %2351 = vmatpush1.bf16.msra.mxu0 0
    %2352 = vmatprep.subr.bf16.mxu0 0
    %2353 = vmatpush1.bf16.msra.mxu0 0
    %2354 = vmatprep.subr.bf16.mxu0 0
    %2355 = vmatpush1.bf16.msra.mxu0 0
    %2356 = vmatprep.subr.bf16.mxu0 0
    %2357 = vmatpush1.bf16.msra.mxu0 0
    %2358 = vmatprep.subr.bf16.mxu0 0
    %2359 = vmatpush1.bf16.msra.mxu0 0
    %2360 = vmatprep.subr.bf16.mxu0 0
    %2361 = vmatpush1.bf16.msra.mxu0 0
    %2362 = vmatprep.subr.bf16.mxu0 0
    %2363 = vmatpush1.bf16.msra.mxu0 0
    %2364 = vmatprep.subr.bf16.mxu0 0
    %2365 = vmatpush1.bf16.msra.mxu0 0
    %2366 = vmatprep.subr.bf16.mxu0 0
    %2367 = vmatpush1.bf16.msra.mxu0 0
    %2368 = vmatprep.subr.bf16.mxu0 0
    %2369 = vmatpush1.bf16.msra.mxu0 0
    %2370 = vmatprep.subr.bf16.mxu0 0
    %2371 = vmatpush1.bf16.msra.mxu0 0
    %2372 = vmatprep.subr.bf16.mxu0 0
    %2373 = vmatpush1.bf16.msra.mxu0 0
    %2374 = vmatprep.mubr.bf16.mxu0 0
    %2375 = vmatmul.mubr.bf16.gmra.mrb[0].mxu0 %v2340
    %v2376 = vpop.f32.mrb[0].mxu0
    %v2377 = vadd.f32 %v2331, %v2376
    %v2378 = vpop.f32.mrb[0].mxu0
    %v2379 = vpop.f32.mrb[0].mxu0
    %v2380 = vpop.f32.mrb[0].mxu0
    %2381 = vdwg.mxu0
    %v2382 = vadd.f32 %v2377, %v375
    %v2383 = vxor.u32 %v2382, 2147483648
    %v2384 = vmul.f32 %v2383, 1.442695
    %v2385 = vpow.pop %v2384
    %v2386 = vadd.f32 %v2385, 1.0
    %v2387 = vrcp.pop %v2386
    %v2388 = vmul.f32 1.0, %v2387
    %v2389 = vtanh.pop %v2382
    %v2390 = vmul.f32 %v2388, %v2102
    %2392 = vrot.lane.b32.xlu0 %v2389, 64
    %v2393 = vpop.permute.xlu0 %2392
    %v2395 = vmul.f32 %v2388, %v2393
    %2397 = vrot.lane.b32.xlu0 %v2395, 32
    %v2398 = vpop.permute.xlu0 %2397
    %v2400 = vadd.f32 %v2390, %v2398
    %v2401 = vtanh.pop %v2400
    %2403 = vrot.lane.b32.xlu0 %v2401, 64
    %v2404 = vpop.permute.xlu0 %2403
    %v2406 = vmul.f32 %v2388, %v2404
    %v2407 = vpack.c.bf16 %v2406, %v2406
    %v2408 = vpack.c.bf16 %v2227, %v2227
    %2410 = vrot.lane.b32.xlu0 %v2408, 32
    %v2411 = vpop.permute.xlu0 %2410
    %v2413 = vsel %vm397, %v2411, 0
    %2415 = vmatprep.subr.bf16.mxu0 0
    %2416 = vmatpush1.bf16.msra.mxu0 %v611
    %2417 = vmatprep.subr.bf16.mxu0 0
    %2418 = vmatpush1.bf16.msra.mxu0 %v612
    %2419 = vmatprep.subr.bf16.mxu0 0
    %2420 = vmatpush1.bf16.msra.mxu0 0
    %2421 = vmatprep.subr.bf16.mxu0 0
    %2422 = vmatpush1.bf16.msra.mxu0 0
    %2423 = vmatprep.subr.bf16.mxu0 0
    %2424 = vmatpush1.bf16.msra.mxu0 0
    %2425 = vmatprep.subr.bf16.mxu0 0
    %2426 = vmatpush1.bf16.msra.mxu0 0
    %2427 = vmatprep.subr.bf16.mxu0 0
    %2428 = vmatpush1.bf16.msra.mxu0 0
    %2429 = vmatprep.subr.bf16.mxu0 0
    %2430 = vmatpush1.bf16.msra.mxu0 0
    %2431 = vmatprep.subr.bf16.mxu0 0
    %2432 = vmatpush1.bf16.msra.mxu0 0
    %2433 = vmatprep.subr.bf16.mxu0 0
    %2434 = vmatpush1.bf16.msra.mxu0 0
    %2435 = vmatprep.subr.bf16.mxu0 0
    %2436 = vmatpush1.bf16.msra.mxu0 0
    %2437 = vmatprep.subr.bf16.mxu0 0
    %2438 = vmatpush1.bf16.msra.mxu0 0
    %2439 = vmatprep.subr.bf16.mxu0 0
    %2440 = vmatpush1.bf16.msra.mxu0 0
    %2441 = vmatprep.subr.bf16.mxu0 0
    %2442 = vmatpush1.bf16.msra.mxu0 0
    %2443 = vmatprep.subr.bf16.mxu0 0
    %2444 = vmatpush1.bf16.msra.mxu0 0
    %2445 = vmatprep.subr.bf16.mxu0 0
    %2446 = vmatpush1.bf16.msra.mxu0 0
    %2447 = vmatprep.mubr.bf16.mxu0 0
    %2448 = vmatmul.mubr.bf16.gmra.mrb[0].mxu0 %v2413
    %v2449 = vpop.f32.mrb[0].mxu0
    %v2450 = vadd.f32 0.0, %v2449
    %v2451 = vpop.f32.mrb[0].mxu0
    %v2452 = vpop.f32.mrb[0].mxu0
    %v2453 = vpop.f32.mrb[0].mxu0
    %2454 = vdwg.mxu0
    %2456 = vrot.lane.b32.xlu0 %v2407, 32
    %v2457 = vpop.permute.xlu0 %2456
    %v2459 = vsel %vm397, %v2457, 0
    %2461 = vmatprep.subr.bf16.mxu0 0
    %2462 = vmatpush1.bf16.msra.mxu0 %v666
    %2463 = vmatprep.subr.bf16.mxu0 0
    %2464 = vmatpush1.bf16.msra.mxu0 %v667
    %2465 = vmatprep.subr.bf16.mxu0 0
    %2466 = vmatpush1.bf16.msra.mxu0 0
    %2467 = vmatprep.subr.bf16.mxu0 0
    %2468 = vmatpush1.bf16.msra.mxu0 0
    %2469 = vmatprep.subr.bf16.mxu0 0
    %2470 = vmatpush1.bf16.msra.mxu0 0
    %2471 = vmatprep.subr.bf16.mxu0 0
    %2472 = vmatpush1.bf16.msra.mxu0 0
    %2473 = vmatprep.subr.bf16.mxu0 0
    %2474 = vmatpush1.bf16.msra.mxu0 0
    %2475 = vmatprep.subr.bf16.mxu0 0
    %2476 = vmatpush1.bf16.msra.mxu0 0
    %2477 = vmatprep.subr.bf16.mxu0 0
    %2478 = vmatpush1.bf16.msra.mxu0 0
    %2479 = vmatprep.subr.bf16.mxu0 0
    %2480 = vmatpush1.bf16.msra.mxu0 0
    %2481 = vmatprep.subr.bf16.mxu0 0
    %2482 = vmatpush1.bf16.msra.mxu0 0
    %2483 = vmatprep.subr.bf16.mxu0 0
    %2484 = vmatpush1.bf16.msra.mxu0 0
    %2485 = vmatprep.subr.bf16.mxu0 0
    %2486 = vmatpush1.bf16.msra.mxu0 0
    %2487 = vmatprep.subr.bf16.mxu0 0
    %2488 = vmatpush1.bf16.msra.mxu0 0
    %2489 = vmatprep.subr.bf16.mxu0 0
    %2490 = vmatpush1.bf16.msra.mxu0 0
    %2491 = vmatprep.subr.bf16.mxu0 0
    %2492 = vmatpush1.bf16.msra.mxu0 0
    %2493 = vmatprep.mubr.bf16.mxu0 0
    %2494 = vmatmul.mubr.bf16.gmra.mrb[0].mxu0 %v2459
    %v2495 = vpop.f32.mrb[0].mxu0
    %v2496 = vadd.f32 %v2450, %v2495
    %v2497 = vpop.f32.mrb[0].mxu0
    %v2498 = vpop.f32.mrb[0].mxu0
    %v2499 = vpop.f32.mrb[0].mxu0
    %2500 = vdwg.mxu0
    %v2501 = vadd.f32 %v2496, %v382
    %v2502 = vxor.u32 %v2501, 2147483648
    %v2503 = vmul.f32 %v2502, 1.442695
    %v2504 = vpow.pop %v2503
    %v2505 = vadd.f32 %v2504, 1.0
    %v2506 = vrcp.pop %v2505
    %v2507 = vmul.f32 1.0, %v2506
    %v2508 = vtanh.pop %v2501
    %v2509 = vmul.f32 %v2507, %v2221
    %2511 = vrot.lane.b32.xlu0 %v2508, 64
    %v2512 = vpop.permute.xlu0 %2511
    %v2514 = vmul.f32 %v2507, %v2512
    %2516 = vrot.lane.b32.xlu0 %v2514, 32
    %v2517 = vpop.permute.xlu0 %2516
    %v2519 = vadd.f32 %v2509, %v2517
    %v2520 = vtanh.pop %v2519
    %2522 = vrot.lane.b32.xlu0 %v2520, 64
    %v2523 = vpop.permute.xlu0 %2522
    %v2525 = vmul.f32 %v2507, %v2523
    %s2526 = scalar_lea.vmem [#allocation2], 56
    %v2527 = vld [vmem:[%s2526] sm:$0xff]
    %2528 = vmatprep.subr.bf16.mxu0 0
    %2529 = vmatpush1.bf16.msra.mxu0 %v393
    %2530 = vmatprep.subr.bf16.mxu0 0
    %2531 = vmatpush1.bf16.msra.mxu0 %v394
    %2532 = vmatprep.subr.bf16.mxu0 0
    %2533 = vmatpush1.bf16.msra.mxu0 0
    %2534 = vmatprep.subr.bf16.mxu0 0
    %2535 = vmatpush1.bf16.msra.mxu0 0
    %2536 = vmatprep.subr.bf16.mxu0 0
    %2537 = vmatpush1.bf16.msra.mxu0 0
    %2538 = vmatprep.subr.bf16.mxu0 0
    %2539 = vmatpush1.bf16.msra.mxu0 0
    %2540 = vmatprep.subr.bf16.mxu0 0
    %2541 = vmatpush1.bf16.msra.mxu0 0
    %2542 = vmatprep.subr.bf16.mxu0 0
    %2543 = vmatpush1.bf16.msra.mxu0 0
    %2544 = vmatprep.subr.bf16.mxu0 0
    %2545 = vmatpush1.bf16.msra.mxu0 0
    %2546 = vmatprep.subr.bf16.mxu0 0
    %2547 = vmatpush1.bf16.msra.mxu0 0
    %2548 = vmatprep.subr.bf16.mxu0 0
    %2549 = vmatpush1.bf16.msra.mxu0 0
    %2550 = vmatprep.subr.bf16.mxu0 0
    %2551 = vmatpush1.bf16.msra.mxu0 0
    %2552 = vmatprep.subr.bf16.mxu0 0
    %2553 = vmatpush1.bf16.msra.mxu0 0
    %2554 = vmatprep.subr.bf16.mxu0 0
    %2555 = vmatpush1.bf16.msra.mxu0 0
    %2556 = vmatprep.subr.bf16.mxu0 0
    %2557 = vmatpush1.bf16.msra.mxu0 0
    %2558 = vmatprep.subr.bf16.mxu0 0
    %2559 = vmatpush1.bf16.msra.mxu0 0
    %2560 = vmatprep.mubr.bf16.mxu0 0
    %2561 = vmatmul.mubr.bf16.gmra.mrb[0].mxu0 %v2340
    %v2562 = vpop.f32.mrb[0].mxu0
    %v2563 = vadd.f32 0.0, %v2562
    %v2564 = vpop.f32.mrb[0].mxu0
    %v2565 = vpop.f32.mrb[0].mxu0
    %v2566 = vpop.f32.mrb[0].mxu0
    %2567 = vdwg.mxu0
    %v2568 = vadd.f32 %v2527, %v2563
    %v2569 = vxor.u32 %v2568, 2147483648
    %v2570 = vmul.f32 %v2569, 1.442695
    %v2571 = vpow.pop %v2570
    %v2572 = vadd.f32 %v2571, 1.0
    %v2573 = vrcp.pop %v2572
    %v2574 = vmul.f32 1.0, %v2573
    %v2575 = vtanh.pop %v2568
    %v2576 = vmul.f32 %v2574, %v2288
    %2578 = vrot.lane.b32.xlu0 %v2575, 64
    %v2579 = vpop.permute.xlu0 %2578
    %v2581 = vmul.f32 %v2574, %v2579
    %2583 = vrot.lane.b32.xlu0 %v2581, 32
    %v2584 = vpop.permute.xlu0 %2583
    %v2586 = vadd.f32 %v2576, %v2584
    %v2587 = vtanh.pop %v2586
    %2589 = vrot.lane.b32.xlu0 %v2587, 64
    %v2590 = vpop.permute.xlu0 %2589
    %v2592 = vmul.f32 %v2574, %v2590
    %v2593 = vpack.c.bf16 %v2592, %v2592
    %2594 = vmatprep.subr.bf16.mxu0 0
    %2595 = vmatpush1.bf16.msra.mxu0 %v475
    %2596 = vmatprep.subr.bf16.mxu0 0
    %2597 = vmatpush1.bf16.msra.mxu0 %v476
    %2598 = vmatprep.subr.bf16.mxu0 0
    %2599 = vmatpush1.bf16.msra.mxu0 0
    %2600 = vmatprep.subr.bf16.mxu0 0
    %2601 = vmatpush1.bf16.msra.mxu0 0
    %2602 = vmatprep.subr.bf16.mxu0 0
    %2603 = vmatpush1.bf16.msra.mxu0 0
    %2604 = vmatprep.subr.bf16.mxu0 0
    %2605 = vmatpush1.bf16.msra.mxu0 0
    %2606 = vmatprep.subr.bf16.mxu0 0
    %2607 = vmatpush1.bf16.msra.mxu0 0
    %2608 = vmatprep.subr.bf16.mxu0 0
    %2609 = vmatpush1.bf16.msra.mxu0 0
    %2610 = vmatprep.subr.bf16.mxu0 0
    %2611 = vmatpush1.bf16.msra.mxu0 0
    %2612 = vmatprep.subr.bf16.mxu0 0
    %2613 = vmatpush1.bf16.msra.mxu0 0
    %2614 = vmatprep.subr.bf16.mxu0 0
    %2615 = vmatpush1.bf16.msra.mxu0 0
    %2616 = vmatprep.subr.bf16.mxu0 0
    %2617 = vmatpush1.bf16.msra.mxu0 0
    %2618 = vmatprep.subr.bf16.mxu0 0
    %2619 = vmatpush1.bf16.msra.mxu0 0
    %2620 = vmatprep.subr.bf16.mxu0 0
    %2621 = vmatpush1.bf16.msra.mxu0 0
    %2622 = vmatprep.subr.bf16.mxu0 0
    %2623 = vmatpush1.bf16.msra.mxu0 0
    %2624 = vmatprep.subr.bf16.mxu0 0
    %2625 = vmatpush1.bf16.msra.mxu0 0
    %2626 = vmatprep.mubr.bf16.mxu0 0
    %2627 = vmatmul.mubr.bf16.gmra.mrb[0].mxu0 %v2459
    %v2628 = vpop.f32.mrb[0].mxu0
    %v2629 = vadd.f32 0.0, %v2628
    %v2630 = vpop.f32.mrb[0].mxu0
    %v2631 = vpop.f32.mrb[0].mxu0
    %v2632 = vpop.f32.mrb[0].mxu0
    %2633 = vdwg.mxu0
    %2635 = vrot.lane.b32.xlu0 %v2593, 32
    %v2636 = vpop.permute.xlu0 %2635
    %v2638 = vsel %vm397, %v2636, 0
    %2640 = vmatprep.subr.bf16.mxu0 0
    %2641 = vmatpush1.bf16.msra.mxu0 %v530
    %2642 = vmatprep.subr.bf16.mxu0 0
    %2643 = vmatpush1.bf16.msra.mxu0 %v531
    %2644 = vmatprep.subr.bf16.mxu0 0
    %2645 = vmatpush1.bf16.msra.mxu0 0
    %2646 = vmatprep.subr.bf16.mxu0 0
    %2647 = vmatpush1.bf16.msra.mxu0 0
    %2648 = vmatprep.subr.bf16.mxu0 0
    %2649 = vmatpush1.bf16.msra.mxu0 0
    %2650 = vmatprep.subr.bf16.mxu0 0
    %2651 = vmatpush1.bf16.msra.mxu0 0
    %2652 = vmatprep.subr.bf16.mxu0 0
    %2653 = vmatpush1.bf16.msra.mxu0 0
    %2654 = vmatprep.subr.bf16.mxu0 0
    %2655 = vmatpush1.bf16.msra.mxu0 0
    %2656 = vmatprep.subr.bf16.mxu0 0
    %2657 = vmatpush1.bf16.msra.mxu0 0
    %2658 = vmatprep.subr.bf16.mxu0 0
    %2659 = vmatpush1.bf16.msra.mxu0 0
    %2660 = vmatprep.subr.bf16.mxu0 0
    %2661 = vmatpush1.bf16.msra.mxu0 0
    %2662 = vmatprep.subr.bf16.mxu0 0
    %2663 = vmatpush1.bf16.msra.mxu0 0
    %2664 = vmatprep.subr.bf16.mxu0 0
    %2665 = vmatpush1.bf16.msra.mxu0 0
    %2666 = vmatprep.subr.bf16.mxu0 0
    %2667 = vmatpush1.bf16.msra.mxu0 0
    %2668 = vmatprep.subr.bf16.mxu0 0
    %2669 = vmatpush1.bf16.msra.mxu0 0
    %2670 = vmatprep.subr.bf16.mxu0 0
    %2671 = vmatpush1.bf16.msra.mxu0 0
    %2672 = vmatprep.mubr.bf16.mxu0 0
    %2673 = vmatmul.mubr.bf16.gmra.mrb[0].mxu0 %v2638
    %v2674 = vpop.f32.mrb[0].mxu0
    %v2675 = vadd.f32 %v2629, %v2674
    %v2676 = vpop.f32.mrb[0].mxu0
    %v2677 = vpop.f32.mrb[0].mxu0
    %v2678 = vpop.f32.mrb[0].mxu0
    %2679 = vdwg.mxu0
    %v2680 = vadd.f32 %v2675, %v375
    %v2681 = vxor.u32 %v2680, 2147483648
    %v2682 = vmul.f32 %v2681, 1.442695
    %v2683 = vpow.pop %v2682
    %v2684 = vadd.f32 %v2683, 1.0
    %v2685 = vrcp.pop %v2684
    %v2686 = vmul.f32 1.0, %v2685
    %v2687 = vtanh.pop %v2680
    %v2688 = vmul.f32 %v2686, %v2400
    %2690 = vrot.lane.b32.xlu0 %v2687, 64
    %v2691 = vpop.permute.xlu0 %2690
    %v2693 = vmul.f32 %v2686, %v2691
    %2695 = vrot.lane.b32.xlu0 %v2693, 32
    %v2696 = vpop.permute.xlu0 %2695
    %v2698 = vadd.f32 %v2688, %v2696
    %v2699 = vtanh.pop %v2698
    %2701 = vrot.lane.b32.xlu0 %v2699, 64
    %v2702 = vpop.permute.xlu0 %2701
    %v2704 = vmul.f32 %v2686, %v2702
    %v2705 = vpack.c.bf16 %v2704, %v2704
    %v2706 = vpack.c.bf16 %v2525, %v2525
    %2708 = vrot.lane.b32.xlu0 %v2706, 32
    %v2709 = vpop.permute.xlu0 %2708
    %v2711 = vsel %vm397, %v2709, 0
    %2713 = vmatprep.subr.bf16.mxu0 0
    %2714 = vmatpush1.bf16.msra.mxu0 %v611
    %2715 = vmatprep.subr.bf16.mxu0 0
    %2716 = vmatpush1.bf16.msra.mxu0 %v612
    %2717 = vmatprep.subr.bf16.mxu0 0
    %2718 = vmatpush1.bf16.msra.mxu0 0
    %2719 = vmatprep.subr.bf16.mxu0 0
    %2720 = vmatpush1.bf16.msra.mxu0 0
    %2721 = vmatprep.subr.bf16.mxu0 0
    %2722 = vmatpush1.bf16.msra.mxu0 0
    %2723 = vmatprep.subr.bf16.mxu0 0
    %2724 = vmatpush1.bf16.msra.mxu0 0
    %2725 = vmatprep.subr.bf16.mxu0 0
    %2726 = vmatpush1.bf16.msra.mxu0 0
    %2727 = vmatprep.subr.bf16.mxu0 0
    %2728 = vmatpush1.bf16.msra.mxu0 0
    %2729 = vmatprep.subr.bf16.mxu0 0
    %2730 = vmatpush1.bf16.msra.mxu0 0
    %2731 = vmatprep.subr.bf16.mxu0 0
    %2732 = vmatpush1.bf16.msra.mxu0 0
    %2733 = vmatprep.subr.bf16.mxu0 0
    %2734 = vmatpush1.bf16.msra.mxu0 0
    %2735 = vmatprep.subr.bf16.mxu0 0
    %2736 = vmatpush1.bf16.msra.mxu0 0
    %2737 = vmatprep.subr.bf16.mxu0 0
    %2738 = vmatpush1.bf16.msra.mxu0 0
    %2739 = vmatprep.subr.bf16.mxu0 0
    %2740 = vmatpush1.bf16.msra.mxu0 0
    %2741 = vmatprep.subr.bf16.mxu0 0
    %2742 = vmatpush1.bf16.msra.mxu0 0
    %2743 = vmatprep.subr.bf16.mxu0 0
    %2744 = vmatpush1.bf16.msra.mxu0 0
    %2745 = vmatprep.mubr.bf16.mxu0 0
    %2746 = vmatmul.mubr.bf16.gmra.mrb[0].mxu0 %v2711
    %v2747 = vpop.f32.mrb[0].mxu0
    %v2748 = vadd.f32 0.0, %v2747
    %v2749 = vpop.f32.mrb[0].mxu0
    %v2750 = vpop.f32.mrb[0].mxu0
    %v2751 = vpop.f32.mrb[0].mxu0
    %2752 = vdwg.mxu0
    %2754 = vrot.lane.b32.xlu0 %v2705, 32
    %v2755 = vpop.permute.xlu0 %2754
    %v2757 = vsel %vm397, %v2755, 0
    %2759 = vmatprep.subr.bf16.mxu0 0
    %2760 = vmatpush1.bf16.msra.mxu0 %v666
    %2761 = vmatprep.subr.bf16.mxu0 0
    %2762 = vmatpush1.bf16.msra.mxu0 %v667
    %2763 = vmatprep.subr.bf16.mxu0 0
    %2764 = vmatpush1.bf16.msra.mxu0 0
    %2765 = vmatprep.subr.bf16.mxu0 0
    %2766 = vmatpush1.bf16.msra.mxu0 0
    %2767 = vmatprep.subr.bf16.mxu0 0
    %2768 = vmatpush1.bf16.msra.mxu0 0
    %2769 = vmatprep.subr.bf16.mxu0 0
    %2770 = vmatpush1.bf16.msra.mxu0 0
    %2771 = vmatprep.subr.bf16.mxu0 0
    %2772 = vmatpush1.bf16.msra.mxu0 0
    %2773 = vmatprep.subr.bf16.mxu0 0
    %2774 = vmatpush1.bf16.msra.mxu0 0
    %2775 = vmatprep.subr.bf16.mxu0 0
    %2776 = vmatpush1.bf16.msra.mxu0 0
    %2777 = vmatprep.subr.bf16.mxu0 0
    %2778 = vmatpush1.bf16.msra.mxu0 0
    %2779 = vmatprep.subr.bf16.mxu0 0
    %2780 = vmatpush1.bf16.msra.mxu0 0
    %2781 = vmatprep.subr.bf16.mxu0 0
    %2782 = vmatpush1.bf16.msra.mxu0 0
    %2783 = vmatprep.subr.bf16.mxu0 0
    %2784 = vmatpush1.bf16.msra.mxu0 0
    %2785 = vmatprep.subr.bf16.mxu0 0
    %2786 = vmatpush1.bf16.msra.mxu0 0
    %2787 = vmatprep.subr.bf16.mxu0 0
    %2788 = vmatpush1.bf16.msra.mxu0 0
    %2789 = vmatprep.subr.bf16.mxu0 0
    %2790 = vmatpush1.bf16.msra.mxu0 0
    %2791 = vmatprep.mubr.bf16.mxu0 0
    %2792 = vmatmul.mubr.bf16.gmra.mrb[0].mxu0 %v2757
    %v2793 = vpop.f32.mrb[0].mxu0
    %v2794 = vadd.f32 %v2748, %v2793
    %v2795 = vpop.f32.mrb[0].mxu0
    %v2796 = vpop.f32.mrb[0].mxu0
    %v2797 = vpop.f32.mrb[0].mxu0
    %2798 = vdwg.mxu0
    %v2799 = vadd.f32 %v2794, %v382
    %v2800 = vxor.u32 %v2799, 2147483648
    %v2801 = vmul.f32 %v2800, 1.442695
    %v2802 = vpow.pop %v2801
    %v2803 = vadd.f32 %v2802, 1.0
    %v2804 = vrcp.pop %v2803
    %v2805 = vmul.f32 1.0, %v2804
    %v2806 = vtanh.pop %v2799
    %v2807 = vmul.f32 %v2805, %v2519
    %2809 = vrot.lane.b32.xlu0 %v2806, 64
    %v2810 = vpop.permute.xlu0 %2809
    %v2812 = vmul.f32 %v2805, %v2810
    %2814 = vrot.lane.b32.xlu0 %v2812, 32
    %v2815 = vpop.permute.xlu0 %2814
    %v2817 = vadd.f32 %v2807, %v2815
    %v2818 = vtanh.pop %v2817
    %2820 = vrot.lane.b32.xlu0 %v2818, 64
    %v2821 = vpop.permute.xlu0 %2820
    %v2823 = vmul.f32 %v2805, %v2821
    %v2824 = vpack.c.bf16 %v2823, %v2823
    %v2825 = vld [vmem:[%s10] sm:$0xf]
    %v2826 = vld [vmem:[%s10 + $0x4] sm:$0xf]
    %v2827 = vld [vmem:[%s10 + $0x8] sm:$0xf]
    %v2828 = vld [vmem:[%s10 + $0xc] sm:$0xf]
    %v2829 = vld [vmem:[#allocation16] sm:$0x1]
    %v2831 = vlaneseq
    %v2832 = vshrl.u32 %v2831, 7
    %v2833 = vsub.s32 0, %v2832
    %v2834 = vrot.slane %v2829, %v2833
    %2837 = vrot.lane.b32.xlu0 %v2824, 32
    %v2838 = vpop.permute.xlu0 %2837
    %v2843 = vunpack.c.l.b16 %v2825
    %v2844 = vunpack.c.l.b16 %v2826
    %v2845 = vunpack.c.l.b16 %v2827
    %v2846 = vunpack.c.l.b16 %v2828
    %v2847 = vpack.c.b16 %v2844, %v2843
    %v2848 = vpack.c.b16 %v2846, %v2845
    %v2852 = vsel %vm397, %v2838, 0
    %2854 = vmatprep.subr.bf16.mxu0 0
    %2855 = vmatpush1.bf16.msra.mxu0 %v2847
    %2856 = vmatprep.subr.bf16.mxu0 0
    %2857 = vmatpush1.bf16.msra.mxu0 %v2848
    %2858 = vmatprep.subr.bf16.mxu0 0
    %2859 = vmatpush1.bf16.msra.mxu0 0
    %2860 = vmatprep.subr.bf16.mxu0 0
    %2861 = vmatpush1.bf16.msra.mxu0 0
    %2862 = vmatprep.subr.bf16.mxu0 0
    %2863 = vmatpush1.bf16.msra.mxu0 0
    %2864 = vmatprep.subr.bf16.mxu0 0
    %2865 = vmatpush1.bf16.msra.mxu0 0
    %2866 = vmatprep.subr.bf16.mxu0 0
    %2867 = vmatpush1.bf16.msra.mxu0 0
    %2868 = vmatprep.subr.bf16.mxu0 0
    %2869 = vmatpush1.bf16.msra.mxu0 0
    %2870 = vmatprep.subr.bf16.mxu0 0
    %2871 = vmatpush1.bf16.msra.mxu0 0
    %2872 = vmatprep.subr.bf16.mxu0 0
    %2873 = vmatpush1.bf16.msra.mxu0 0
    %2874 = vmatprep.subr.bf16.mxu0 0
    %2875 = vmatpush1.bf16.msra.mxu0 0
    %2876 = vmatprep.subr.bf16.mxu0 0
    %2877 = vmatpush1.bf16.msra.mxu0 0
    %2878 = vmatprep.subr.bf16.mxu0 0
    %2879 = vmatpush1.bf16.msra.mxu0 0
    %2880 = vmatprep.subr.bf16.mxu0 0
    %2881 = vmatpush1.bf16.msra.mxu0 0
    %2882 = vmatprep.subr.bf16.mxu0 0
    %2883 = vmatpush1.bf16.msra.mxu0 0
    %2884 = vmatprep.subr.bf16.mxu0 0
    %2885 = vmatpush1.bf16.msra.mxu0 0
    %2886 = vmatprep.mubr.bf16.mxu0 0
    %2887 = vmatmul.mubr.bf16.gmra.mrb[0].mxu0 %v2852
    %v2888 = vpop.f32.mrb[0].mxu0
    %v2889 = vadd.f32 %v2834, %v2888
    %v2890 = vpop.f32.mrb[0].mxu0
    %v2891 = vpop.f32.mrb[0].mxu0
    %v2892 = vpop.f32.mrb[0].mxu0
    %2893 = vdwg.mxu0
    %v2894 = vmax.f32 %v2889, 0.0
    %v2895 = vpack.c.bf16 %v2894, %v2894
    %v2896 = vld [vmem:[%s12] sm:$0xf]
    %v2897 = vld [vmem:[%s12 + $0x4] sm:$0xf]
    %v2898 = vld [vmem:[%s12 + $0x8] sm:$0xf]
    %v2899 = vld [vmem:[%s12 + $0xc] sm:$0xf]
    %v2900 = vld [vmem:[%s12 + $0x10] sm:$0xf]
    %v2901 = vld [vmem:[%s12 + $0x14] sm:$0xf]
    %v2902 = vld [vmem:[%s12 + $0x18] sm:$0xf]
    %v2903 = vld [vmem:[%s12 + $0x1c] sm:$0xf]
    %v2904 = vld [vmem:[%s12 + $0x20] sm:$0xf]
    %v2905 = vld [vmem:[%s12 + $0x24] sm:$0xf]
    %v2906 = vld [vmem:[%s12 + $0x28] sm:$0xf]
    %v2907 = vld [vmem:[%s12 + $0x2c] sm:$0xf]
    %v2908 = vld [vmem:[%s12 + $0x30] sm:$0xf]
    %v2909 = vld [vmem:[%s12 + $0x34] sm:$0xf]
    %v2910 = vld [vmem:[%s12 + $0x38] sm:$0xf]
    %v2911 = vld [vmem:[%s12 + $0x3c] sm:$0xf]
    %v2912 = vld [vmem:[#allocation17] sm:$0x1]
    %v2914 = vlaneseq
    %v2915 = vshrl.u32 %v2914, 7
    %v2916 = vsub.s32 0, %v2915
    %v2917 = vrot.slane %v2912, %v2916
    %v2935 = vunpack.c.l.b16 %v2896
    %v2936 = vunpack.c.l.b16 %v2897
    %v2937 = vunpack.c.l.b16 %v2898
    %v2938 = vunpack.c.l.b16 %v2899
    %v2939 = vunpack.c.l.b16 %v2900
    %v2940 = vunpack.c.l.b16 %v2901
    %v2941 = vunpack.c.l.b16 %v2902
    %v2942 = vunpack.c.l.b16 %v2903
    %v2943 = vunpack.c.l.b16 %v2904
    %v2944 = vunpack.c.l.b16 %v2905
    %v2945 = vunpack.c.l.b16 %v2906
    %v2946 = vunpack.c.l.b16 %v2907
    %v2947 = vunpack.c.l.b16 %v2908
    %v2948 = vunpack.c.l.b16 %v2909
    %v2949 = vunpack.c.l.b16 %v2910
    %v2950 = vunpack.c.l.b16 %v2911
    %v2951 = vpack.c.b16 %v2936, %v2935
    %v2952 = vpack.c.b16 %v2938, %v2937
    %v2953 = vpack.c.b16 %v2940, %v2939
    %v2954 = vpack.c.b16 %v2942, %v2941
    %v2955 = vpack.c.b16 %v2944, %v2943
    %v2956 = vpack.c.b16 %v2946, %v2945
    %v2957 = vpack.c.b16 %v2948, %v2947
    %v2958 = vpack.c.b16 %v2950, %v2949
    %2967 = vmatprep.subr.bf16.mxu0 0
    %2968 = vmatpush1.bf16.msra.mxu0 %v2951
    %2969 = vmatprep.subr.bf16.mxu0 0
    %2970 = vmatpush1.bf16.msra.mxu0 %v2952
    %2971 = vmatprep.subr.bf16.mxu0 0
    %2972 = vmatpush1.bf16.msra.mxu0 %v2953
    %2973 = vmatprep.subr.bf16.mxu0 0
    %2974 = vmatpush1.bf16.msra.mxu0 %v2954
    %2975 = vmatprep.subr.bf16.mxu0 0
    %2976 = vmatpush1.bf16.msra.mxu0 %v2955
    %2977 = vmatprep.subr.bf16.mxu0 0
    %2978 = vmatpush1.bf16.msra.mxu0 %v2956
    %2979 = vmatprep.subr.bf16.mxu0 0
    %2980 = vmatpush1.bf16.msra.mxu0 %v2957
    %2981 = vmatprep.subr.bf16.mxu0 0
    %2982 = vmatpush1.bf16.msra.mxu0 %v2958
    %2983 = vmatprep.subr.bf16.mxu0 0
    %2984 = vmatpush1.bf16.msra.mxu0 0
    %2985 = vmatprep.subr.bf16.mxu0 0
    %2986 = vmatpush1.bf16.msra.mxu0 0
    %2987 = vmatprep.subr.bf16.mxu0 0
    %2988 = vmatpush1.bf16.msra.mxu0 0
    %2989 = vmatprep.subr.bf16.mxu0 0
    %2990 = vmatpush1.bf16.msra.mxu0 0
    %2991 = vmatprep.subr.bf16.mxu0 0
    %2992 = vmatpush1.bf16.msra.mxu0 0
    %2993 = vmatprep.subr.bf16.mxu0 0
    %2994 = vmatpush1.bf16.msra.mxu0 0
    %2995 = vmatprep.subr.bf16.mxu0 0
    %2996 = vmatpush1.bf16.msra.mxu0 0
    %2997 = vmatprep.subr.bf16.mxu0 0
    %2998 = vmatpush1.bf16.msra.mxu0 0
    %2999 = vmatprep.mubr.bf16.mxu0 0
    %3000 = vmatmul.mubr.bf16.gmra.mrb[0].mxu0 %v2895
    %v3001 = vpop.f32.mrb[0].mxu0
    %v3002 = vadd.f32 %v2917, %v3001
    %v3003 = vpop.f32.mrb[0].mxu0
    %v3004 = vpop.f32.mrb[0].mxu0
    %v3005 = vpop.f32.mrb[0].mxu0
    %3006 = vdwg.mxu0
    %3007 = vst [vmem:[%s14] sm:$0xff] %v3002
    // Predicated region
    $region98: #{dueling_dqn_forward.1} parent=1 // pred_check
      _
    $region99: #{dueling_dqn_forward.1} parent=1 // pred_check_branch
      %3009 = sbr.rel (0) target = $region101
    $region100: #{dueling_dqn_forward.1} parent=1 // pred_region
      _
    $region101: #{dueling_dqn_forward.1} parent=1 // pred_fallthru
      _
    // Predicated region
    $region102: #{dueling_dqn_forward.1} parent=1 // pred_check
      _
    $region103: #{dueling_dqn_forward.1} parent=1 // pred_check_branch
      %3011 = sbr.rel (0) target = $region105
    $region104: #{dueling_dqn_forward.1} parent=1 // pred_region
      _
    $region105: #{dueling_dqn_forward.1} parent=1 // pred_fallthru
      _
    %3012 = vsyncpa [#allocation4], 1
    %3013 = vsyncpa [#allocation6], 1
    %3014 = vsyncpa [#allocation9], 1
    %3015 = vsyncpa [#allocation12], 1
    %3016 = vsyncpa [#allocation15], 1
    %3017 = vsyncpa [#allocation18], 1

</llo_original>
